<compile_context>
chip_gen: v7x
topology: tpu7x:2x2x1
jax: 0.10.0
libtpu: 0.0.40
codegen_flags: <defaults>
</compile_context>

<pallas_src>
import math
import functools

import jax
import jax.numpy as jnp
from jax import lax
from jax.experimental import pallas as pl
from jax.experimental.pallas import tpu as pltpu


# ----------------------------- in-kernel helpers -----------------------------

def _layernorm(x, w, b, eps=1e-5):
    mu = jnp.mean(x, axis=-1, keepdims=True)
    xc = x - mu
    var = jnp.mean(xc * xc, axis=-1, keepdims=True)
    return xc * lax.rsqrt(var + eps) * w + b


def _erf_approx(x):
    # Abramowitz & Stegun 7.1.26 rational approximation: |error| < 1.5e-7, i.e. matches the
    # exact erf (and hence PyTorch's default nn.GELU()) to float32 working precision.
    p = 0.3275911
    a1, a2, a3, a4, a5 = 0.254829592, -0.284496736, 1.421413741, -1.453152027, 1.061405429
    s = jnp.where(x >= 0.0, 1.0, -1.0)
    ax = jnp.abs(x)
    t = 1.0 / (1.0 + p * ax)
    poly = ((((a5 * t + a4) * t + a3) * t + a2) * t + a1) * t
    return s * (1.0 - poly * jnp.exp(-ax * ax))


def _gelu_erf(x):
    return 0.5 * x * (1.0 + _erf_approx(x * 0.7071067811865476))


# ------------------------------- fused kernel --------------------------------

def _fused_gpt_head_kernel(n_head, t_mod,
                           x_ref, bias_ref,
                           ln1w_ref, ln1b_ref,
                           wq_ref, bq_ref, wk_ref, bk_ref, wv_ref, bv_ref,
                           wp_ref, bp_ref,
                           ln2w_ref, ln2b_ref,
                           w1_ref, b1_ref, w2_ref, b2_ref,
                           lnfw_ref, lnfb_ref, wbody_ref, whands_ref,
                           logits_b_ref, logits_h_ref,
                           acc_ref):
    """grid = (n_layer,).  acc_ref (VMEM scratch, (B, T, C) f32) carries the residual stream
    of the whole batch across the layer axis; the two vocab heads run at the last step."""
    l = pl.program_id(0)
    n_layer = pl.num_programs(0)

    @pl.when(l == 0)
    def _():
        acc_ref[...] = x_ref[...].astype(jnp.float32)

    xr = acc_ref[...]                                  # (B, T, C) f32 residual stream
    B, T, C = xr.shape
    H = n_head
    D = C // H
    N = B * T
    x2 = xr.reshape(N, C)

    # (T, T) additive mask bias (0 where attention allowed, -1e9 where masked), precomputed
    # in the wrapper and broadcast once (hoisted out of the head loop).
    bias_b = jnp.broadcast_to(bias_ref[...], (B, T, T))

    # --- attention (1/sqrt(D) already folded into wq/bq in the wrapper) ---
    h1 = _layernorm(x2, ln1w_ref[0], ln1b_ref[0])
    h1b = h1.astype(jnp.bfloat16)
    q = jnp.dot(h1b, wq_ref[0], preferred_element_type=jnp.float32) + bq_ref[0]
    k = jnp.dot(h1b, wk_ref[0], preferred_element_type=jnp.float32) + bk_ref[0]
    v = jnp.dot(h1b, wv_ref[0], preferred_element_type=jnp.float32) + bv_ref[0]
    wp = wp_ref[0]                                     # (C, C) bf16

    y = jnp.zeros((N, C), jnp.float32)
    for h in range(H):                                 # static unroll over heads
        sl = slice(h * D, (h + 1) * D)
        qh = q[:, sl].reshape(B, T, D).astype(jnp.bfloat16)
        kh = k[:, sl].reshape(B, T, D).astype(jnp.bfloat16)
        vh = v[:, sl].reshape(B, T, D).astype(jnp.bfloat16)
        att = jnp.einsum('bqd,bkd->bqk', qh, kh,
                         preferred_element_type=jnp.float32) + bias_b
        att = att - jnp.max(att, axis=-1, keepdims=True)
        e = jnp.exp(att)
        pr = e * (1.0 / jnp.sum(e, axis=-1, keepdims=True))     # exact reciprocal
        oh = jnp.einsum('bqk,bkd->bqd', pr.astype(jnp.bfloat16), vh,
                        preferred_element_type=jnp.float32)      # (B, T, D)
        # fold this head straight into the output projection: no concat, scores die here
        y = y + jnp.dot(oh.reshape(N, D).astype(jnp.bfloat16), wp[sl, :],
                        preferred_element_type=jnp.float32)
    x2 = x2 + y + bp_ref[0]

    # --- MLP ---
    h2 = _layernorm(x2, ln2w_ref[0], ln2b_ref[0])
    m = jnp.dot(h2.astype(jnp.bfloat16), w1_ref[0],
                preferred_element_type=jnp.float32) + b1_ref[0]
    m = _gelu_erf(m)
    m = jnp.dot(m.astype(jnp.bfloat16), w2_ref[0],
                preferred_element_type=jnp.float32) + b2_ref[0]
    acc_ref[...] = (x2 + m).reshape(B, T, C)

    # --- final layernorm + per-modality vocab heads, only at the last layer ---
    @pl.when(l == n_layer - 1)
    def _():
        def run_head(row_start, w_ref, out_ref):
            xs = acc_ref[:, row_start:row_start + t_mod, :].reshape(B * t_mod, C)
            xs = _layernorm(xs, lnfw_ref[...], lnfb_ref[...])
            lg = jnp.dot(xs.astype(jnp.bfloat16), w_ref[...],
                         preferred_element_type=jnp.float32)
            out_ref[...] = lg.reshape(B, t_mod, lg.shape[-1]).astype(out_ref.dtype)

        run_head(t_mod, wbody_ref, logits_b_ref)        # body  rows  t : 2t
        run_head(2 * t_mod, whands_ref, logits_h_ref)   # hands rows 2t : 3t


# ------------------------------- full forward ---------------------------------

def cross_cond_gpt_head_forward(x, params, n_head, n_modality):
    B, T, C = x.shape
    t = T // n_modality
    L = params["wq"].shape[0]
    Vb = params["w_body"].shape[1]
    Vh = params["w_hands"].shape[1]
    pad128 = lambda v: ((v + 127) // 128) * 128
    Vb_pad, Vh_pad = pad128(Vb), pad128(Vh)
    D = C // n_head
    scale = 1.0 / math.sqrt(D)
    bf16 = jnp.bfloat16

    # ---- one-time weight prep (pure JAX, outside the kernel) ----
    wq = (params["wq"] * scale).astype(bf16)    # fold attention scale into the query proj
    bq = params["bq"] * scale
    wk = params["wk"].astype(bf16)
    wv = params["wv"].astype(bf16)
    wp = params["wp"].astype(bf16)
    w1 = params["w1"].astype(bf16)
    w2 = params["w2"].astype(bf16)
    # two SEPARATELY lane-dense (128-padded) vocab heads
    w_body = jnp.pad(params["w_body"], ((0, 0), (0, Vb_pad - Vb))).astype(bf16)
    w_hands = jnp.pad(params["w_hands"], ((0, 0), (0, Vh_pad - Vh))).astype(bf16)

    # cross-conditional causal mask -> additive bias, built ONCE (hoisted out of the kernel):
    # keep iff (col % t) <= (row % t)  ==  tril(ones(t, t)).repeat(n_modality, n_modality).
    row = jnp.arange(T, dtype=jnp.int32)[:, None]
    col = jnp.arange(T, dtype=jnp.int32)[None, :]
    bias = jnp.where((col % t) <= (row % t), 0.0, -1e9).astype(jnp.float32)

    stacked_ops = [params["ln1_w"], params["ln1_b"],
                   wq, bq, wk, params["bk"], wv, params["bv"], wp, params["bp"],
                   params["ln2_w"], params["ln2_b"],
                   w1, params["b1"], w2, params["b2"]]
    const_ops = [params["lnf_w"], params["lnf_b"], w_body, w_hands]

    def stacked(arr):                       # per-layer block, double-buffered along the grid
        nd = arr.ndim
        def idx(l):
            return (l,) + (0,) * (nd - 1)
        return pl.BlockSpec((1,) + tuple(arr.shape[1:]), idx)

    def const(arr):                         # whole array resident, DMA'd once
        nd = arr.ndim
        def idx(l):
            return (0,) * nd
        return pl.BlockSpec(tuple(arr.shape), idx)

    in_specs = ([const(x), const(bias)]
                + [stacked(a) for a in stacked_ops]
                + [const(a) for a in const_ops])

    # NOTE: switch out_dtype to jnp.bfloat16 to halve logits DMA bytes if bit-parity with
    # the f32 PyTorch head is not required.
    out_dtype = x.dtype
    out_shape = (jax.ShapeDtypeStruct((B, t, Vb_pad), out_dtype),
                 jax.ShapeDtypeStruct((B, t, Vh_pad), out_dtype))
    out_specs = (pl.BlockSpec((B, t, Vb_pad), lambda l: (0, 0, 0)),
                 pl.BlockSpec((B, t, Vh_pad), lambda l: (0, 0, 0)))

    # explicit scoped-VMEM budget: 2x (double-buffered) per-layer weight blocks + resident
    # consts + residual scratch + logits blocks, with 2x headroom, clamped to [32, 96] MiB.
    per_layer = sum(a.size // L * a.dtype.itemsize for a in stacked_ops)
    resident = (sum(a.size * a.dtype.itemsize for a in const_ops)
                + x.size * x.dtype.itemsize
                + bias.size * bias.dtype.itemsize
                + B * T * C * 4                                             # acc scratch
                + 2 * B * t * (Vb_pad + Vh_pad) * jnp.dtype(out_dtype).itemsize)
    vmem_limit = int(min(max(2 * (2 * per_layer + resident), 32 * 2 ** 20), 96 * 2 ** 20))

    logits_b, logits_h = pl.pallas_call(
        functools.partial(_fused_gpt_head_kernel, n_head, t),
        out_shape=out_shape,
        grid=(L,),
        in_specs=in_specs,
        out_specs=out_specs,
        scratch_shapes=[pltpu.VMEM((B, T, C), jnp.float32)],
        compiler_params=pltpu.CompilerParams(
            dimension_semantics=("arbitrary",),
            vmem_limit_bytes=vmem_limit),
    )(x, bias, *stacked_ops, *const_ops)

    logits_body = logits_b[:, :, :Vb]
    logits_hands = logits_h[:, :, :Vh]
    # targets=None path of the PyTorch module.
    # TODO(synk): loss / accuracy-metrics branch (targets is not None) not implemented.
    return logits_body, logits_hands, None, None, None


# ------------------------------ parameter init --------------------------------

def init_params(key, n_layer, n_embd, vocab_body, vocab_hands):
    C, L = n_embd, n_layer
    ks = jax.random.split(key, 8)

    def normal(k, shape):
        return 0.02 * jax.random.normal(k, shape, jnp.float32)

    return {
        "ln1_w": jnp.ones((L, 1, C), jnp.float32),
        "ln1_b": jnp.zeros((L, 1, C), jnp.float32),
        "wq": normal(ks[0], (L, C, C)), "bq": jnp.zeros((L, 1, C), jnp.float32),
        "wk": normal(ks[1], (L, C, C)), "bk": jnp.zeros((L, 1, C), jnp.float32),
        "wv": normal(ks[2], (L, C, C)), "bv": jnp.zeros((L, 1, C), jnp.float32),
        "wp": normal(ks[3], (L, C, C)), "bp": jnp.zeros((L, 1, C), jnp.float32),
        "ln2_w": jnp.ones((L, 1, C), jnp.float32),
        "ln2_b": jnp.zeros((L, 1, C), jnp.float32),
        "w1": normal(ks[4], (L, C, 4 * C)), "b1": jnp.zeros((L, 1, 4 * C), jnp.float32),
        "w2": normal(ks[5], (L, 4 * C, C)), "b2": jnp.zeros((L, 1, C), jnp.float32),
        "lnf_w": jnp.ones((1, C), jnp.float32),
        "lnf_b": jnp.zeros((1, C), jnp.float32),
        "w_body": normal(ks[6], (C, vocab_body)),     # head_body  (no bias)
        "w_hands": normal(ks[7], (C, vocab_hands)),   # head_hands (no bias)
    }


# ----------------------------------- main --------------------------------------

if __name__ == "__main__":
    B = 2
    n_embd = 32
    n_head = 4
    n_layer = 2
    n_modality = 3          # music / body / hands
    t = 8                   # per-modality sequence length (block_size >= t)
    T = n_modality * t
    vocab_body, vocab_hands = 48, 40

    key = jax.random.PRNGKey(0)
    kx, kp = jax.random.split(key)
    x = jax.random.normal(kx, (B, T, n_embd), jnp.float32)
    params = init_params(kp, n_layer, n_embd, vocab_body, vocab_hands)

    logits_body, logits_hands, loss_b, loss_h, metrics = cross_cond_gpt_head_forward(
        x, params, n_head, n_modality)
    jax.block_until_ready((logits_body, logits_hands))

    assert logits_body.shape == (B, t, vocab_body), logits_body.shape
    assert logits_hands.shape == (B, t, vocab_hands), logits_hands.shape
    assert bool(jnp.all(jnp.isfinite(logits_body))) and bool(jnp.all(jnp.isfinite(logits_hands)))
    print("KERNEL_OK")
</pallas_src>

<mosaic_0001>
module attributes {stable_mosaic.version = 11 : i64} {
  func.func @_fused_gpt_head_kernel(%arg0: i32, %arg1: memref<2x24x32xf32, #tpu.memory_space<vmem>>, %arg2: memref<24x24xf32, #tpu.memory_space<vmem>>, %arg3: memref<1x1x32xf32, #tpu.memory_space<vmem>>, %arg4: memref<1x1x32xf32, #tpu.memory_space<vmem>>, %arg5: memref<1x32x32xbf16, #tpu.memory_space<vmem>>, %arg6: memref<1x1x32xf32, #tpu.memory_space<vmem>>, %arg7: memref<1x32x32xbf16, #tpu.memory_space<vmem>>, %arg8: memref<1x1x32xf32, #tpu.memory_space<vmem>>, %arg9: memref<1x32x32xbf16, #tpu.memory_space<vmem>>, %arg10: memref<1x1x32xf32, #tpu.memory_space<vmem>>, %arg11: memref<1x32x32xbf16, #tpu.memory_space<vmem>>, %arg12: memref<1x1x32xf32, #tpu.memory_space<vmem>>, %arg13: memref<1x1x32xf32, #tpu.memory_space<vmem>>, %arg14: memref<1x1x32xf32, #tpu.memory_space<vmem>>, %arg15: memref<1x32x128xbf16, #tpu.memory_space<vmem>>, %arg16: memref<1x1x128xf32, #tpu.memory_space<vmem>>, %arg17: memref<1x128x32xbf16, #tpu.memory_space<vmem>>, %arg18: memref<1x1x32xf32, #tpu.memory_space<vmem>>, %arg19: memref<1x32xf32, #tpu.memory_space<vmem>>, %arg20: memref<1x32xf32, #tpu.memory_space<vmem>>, %arg21: memref<32x128xbf16, #tpu.memory_space<vmem>>, %arg22: memref<32x128xbf16, #tpu.memory_space<vmem>>, %arg23: memref<2x8x128xf32, #tpu.memory_space<vmem>>, %arg24: memref<2x8x128xf32, #tpu.memory_space<vmem>>, %arg25: memref<2x24x32xf32, #tpu.memory_space<vmem>>) attributes {dimension_semantics = [#tpu.dimension_semantics<arbitrary>], iteration_bounds = array<i64: 2>, scalar_prefetch = 0 : i64, scratch_operands = 1 : i64, tpu.core_type = #tpu.core_type<tc>, window_params = [{pipeline_mode = #tpu.pipeline_mode<synchronous>, transform_indices = @transform_0, window_bounds = array<i64: 2, 24, 32>}, {pipeline_mode = #tpu.pipeline_mode<synchronous>, transform_indices = @transform_1, window_bounds = array<i64: 24, 24>}, {transform_indices = @transform_2, window_bounds = array<i64: 1, 1, 32>}, {transform_indices = @transform_3, window_bounds = array<i64: 1, 1, 32>}, {transform_indices = @transform_4, window_bounds = array<i64: 1, 32, 32>}, {transform_indices = @transform_5, window_bounds = array<i64: 1, 1, 32>}, {transform_indices = @transform_6, window_bounds = array<i64: 1, 32, 32>}, {transform_indices = @transform_7, window_bounds = array<i64: 1, 1, 32>}, {transform_indices = @transform_8, window_bounds = array<i64: 1, 32, 32>}, {transform_indices = @transform_9, window_bounds = array<i64: 1, 1, 32>}, {transform_indices = @transform_10, window_bounds = array<i64: 1, 32, 32>}, {transform_indices = @transform_11, window_bounds = array<i64: 1, 1, 32>}, {transform_indices = @transform_12, window_bounds = array<i64: 1, 1, 32>}, {transform_indices = @transform_13, window_bounds = array<i64: 1, 1, 32>}, {transform_indices = @transform_14, window_bounds = array<i64: 1, 32, 128>}, {transform_indices = @transform_15, window_bounds = array<i64: 1, 1, 128>}, {transform_indices = @transform_16, window_bounds = array<i64: 1, 128, 32>}, {transform_indices = @transform_17, window_bounds = array<i64: 1, 1, 32>}, {pipeline_mode = #tpu.pipeline_mode<synchronous>, transform_indices = @transform_18, window_bounds = array<i64: 1, 32>}, {pipeline_mode = #tpu.pipeline_mode<synchronous>, transform_indices = @transform_19, window_bounds = array<i64: 1, 32>}, {pipeline_mode = #tpu.pipeline_mode<synchronous>, transform_indices = @transform_20, window_bounds = array<i64: 32, 128>}, {pipeline_mode = #tpu.pipeline_mode<synchronous>, transform_indices = @transform_21, window_bounds = array<i64: 32, 128>}, {pipeline_mode = #tpu.pipeline_mode<synchronous>, transform_indices = @transform_22, window_bounds = array<i64: 2, 8, 128>}, {pipeline_mode = #tpu.pipeline_mode<synchronous>, transform_indices = @transform_23, window_bounds = array<i64: 2, 8, 128>}]} {
    %c0_i32 = arith.constant 0 : i32
    %0 = arith.cmpi eq, %arg0, %c0_i32 : i32
    %1 = arith.extui %0 : i1 to i32
    %c0_i32_0 = arith.constant 0 : i32
    %2 = arith.cmpi ne, %1, %c0_i32_0 : i32
    scf.if %2 {
      %c0_112 = arith.constant 0 : index
      %c0_113 = arith.constant 0 : index
      %c0_114 = arith.constant 0 : index
      %265 = vector.load %arg1[%c0_112, %c0_113, %c0_114] : memref<2x24x32xf32, #tpu.memory_space<vmem>>, vector<2x24x32xf32>
      %c0_115 = arith.constant 0 : index
      %c0_116 = arith.constant 0 : index
      %c0_117 = arith.constant 0 : index
      %266 = vector.load %arg25[%c0_115, %c0_116, %c0_117] : memref<2x24x32xf32, #tpu.memory_space<vmem>>, vector<2x24x32xf32>
      tpu.vector_store %arg25[%c0_115, %c0_116, %c0_117], %265 {strides = array<i32>} : memref<2x24x32xf32, #tpu.memory_space<vmem>>, vector<2x24x32xf32>,
    } else {
    }
    %c0 = arith.constant 0 : index
    %c0_1 = arith.constant 0 : index
    %c0_2 = arith.constant 0 : index
    %3 = vector.load %arg25[%c0, %c0_1, %c0_2] : memref<2x24x32xf32, #tpu.memory_space<vmem>>, vector<2x24x32xf32>
    %4 = vector.shape_cast %3 : vector<2x24x32xf32> to vector<48x32xf32>
    %c0_3 = arith.constant 0 : index
    %c0_4 = arith.constant 0 : index
    %5 = vector.load %arg2[%c0_3, %c0_4] : memref<24x24xf32, #tpu.memory_space<vmem>>, vector<24x24xf32>
    %6 = vector.shape_cast %5 : vector<24x24xf32> to vector<1x24x24xf32>
    %7 = vector.broadcast %6 : vector<1x24x24xf32> to vector<2x24x24xf32>
    %c0_5 = arith.constant 0 : index
    %c0_6 = arith.constant 0 : index
    %c0_7 = arith.constant 0 : index
    %8 = vector.load %arg3[%c0_5, %c0_6, %c0_7] : memref<1x1x32xf32, #tpu.memory_space<vmem>>, vector<1x1x32xf32>
    %9 = vector.shape_cast %8 : vector<1x1x32xf32> to vector<1x32xf32>
    %c0_8 = arith.constant 0 : index
    %c0_9 = arith.constant 0 : index
    %c0_10 = arith.constant 0 : index
    %10 = vector.load %arg4[%c0_8, %c0_9, %c0_10] : memref<1x1x32xf32, #tpu.memory_space<vmem>>, vector<1x1x32xf32>
    %11 = vector.shape_cast %10 : vector<1x1x32xf32> to vector<1x32xf32>
    %cst = arith.constant dense<0.000000e+00> : vector<48xf32>
    %12 = vector.multi_reduction <add>, %4, %cst [1] : vector<48x32xf32> to vector<48xf32>
    %13 = vector.shape_cast %12 : vector<48xf32> to vector<48x1xf32>
    %cst_11 = arith.constant 3.200000e+01 : f32
    %14 = vector.broadcast %cst_11 : f32 to vector<48x1xf32>
    %15 = arith.divf %13, %14 : vector<48x1xf32>
    %16 = vector.broadcast %15 : vector<48x1xf32> to vector<48x32xf32>
    %17 = arith.subf %4, %16 : vector<48x32xf32>
    %18 = arith.mulf %17, %17 : vector<48x32xf32>
    %cst_12 = arith.constant dense<0.000000e+00> : vector<48xf32>
    %19 = vector.multi_reduction <add>, %18, %cst_12 [1] : vector<48x32xf32> to vector<48xf32>
    %20 = vector.shape_cast %19 : vector<48xf32> to vector<48x1xf32>
    %cst_13 = arith.constant 3.200000e+01 : f32
    %21 = vector.broadcast %cst_13 : f32 to vector<48x1xf32>
    %22 = arith.divf %20, %21 : vector<48x1xf32>
    %cst_14 = arith.constant 9.99999974E-6 : f32
    %23 = vector.broadcast %cst_14 : f32 to vector<48x1xf32>
    %24 = arith.addf %22, %23 : vector<48x1xf32>
    %25 = math.rsqrt %24 : vector<48x1xf32>
    %26 = vector.broadcast %25 : vector<48x1xf32> to vector<48x32xf32>
    %27 = arith.mulf %17, %26 : vector<48x32xf32>
    %28 = vector.broadcast %9 : vector<1x32xf32> to vector<48x32xf32>
    %29 = arith.mulf %27, %28 : vector<48x32xf32>
    %30 = vector.broadcast %11 : vector<1x32xf32> to vector<48x32xf32>
    %31 = arith.addf %29, %30 : vector<48x32xf32>
    %32 = arith.truncf %31 : vector<48x32xf32> to vector<48x32xbf16>
    %c0_15 = arith.constant 0 : index
    %c0_16 = arith.constant 0 : index
    %c0_17 = arith.constant 0 : index
    %33 = vector.load %arg5[%c0_15, %c0_16, %c0_17] : memref<1x32x32xbf16, #tpu.memory_space<vmem>>, vector<1x32x32xbf16>
    %34 = vector.shape_cast %33 : vector<1x32x32xbf16> to vector<32x32xbf16>
    %cst_18 = arith.constant dense<0.000000e+00> : vector<48x32xf32>
    %35 = tpu.matmul %32, %34, %cst_18 {dimension_numbers = #tpu.dot_dimension_numbers<[1], [0], [0], [1], [0, 0, 1, 1], [], []>} : vector<48x32xbf16>, vector<32x32xbf16>, vector<48x32xf32> -> vector<48x32xf32>
    %c0_19 = arith.constant 0 : index
    %c0_20 = arith.constant 0 : index
    %c0_21 = arith.constant 0 : index
    %36 = vector.load %arg6[%c0_19, %c0_20, %c0_21] : memref<1x1x32xf32, #tpu.memory_space<vmem>>, vector<1x1x32xf32>
    %37 = vector.shape_cast %36 : vector<1x1x32xf32> to vector<1x32xf32>
    %38 = vector.broadcast %37 : vector<1x32xf32> to vector<48x32xf32>
    %39 = arith.addf %35, %38 : vector<48x32xf32>
    %c0_22 = arith.constant 0 : index
    %c0_23 = arith.constant 0 : index
    %c0_24 = arith.constant 0 : index
    %40 = vector.load %arg7[%c0_22, %c0_23, %c0_24] : memref<1x32x32xbf16, #tpu.memory_space<vmem>>, vector<1x32x32xbf16>
    %41 = vector.shape_cast %40 : vector<1x32x32xbf16> to vector<32x32xbf16>
    %cst_25 = arith.constant dense<0.000000e+00> : vector<48x32xf32>
    %42 = tpu.matmul %32, %41, %cst_25 {dimension_numbers = #tpu.dot_dimension_numbers<[1], [0], [0], [1], [0, 0, 1, 1], [], []>} : vector<48x32xbf16>, vector<32x32xbf16>, vector<48x32xf32> -> vector<48x32xf32>
    %c0_26 = arith.constant 0 : index
    %c0_27 = arith.constant 0 : index
    %c0_28 = arith.constant 0 : index
    %43 = vector.load %arg8[%c0_26, %c0_27, %c0_28] : memref<1x1x32xf32, #tpu.memory_space<vmem>>, vector<1x1x32xf32>
    %44 = vector.shape_cast %43 : vector<1x1x32xf32> to vector<1x32xf32>
    %45 = vector.broadcast %44 : vector<1x32xf32> to vector<48x32xf32>
    %46 = arith.addf %42, %45 : vector<48x32xf32>
    %c0_29 = arith.constant 0 : index
    %c0_30 = arith.constant 0 : index
    %c0_31 = arith.constant 0 : index
    %47 = vector.load %arg9[%c0_29, %c0_30, %c0_31] : memref<1x32x32xbf16, #tpu.memory_space<vmem>>, vector<1x32x32xbf16>
    %48 = vector.shape_cast %47 : vector<1x32x32xbf16> to vector<32x32xbf16>
    %cst_32 = arith.constant dense<0.000000e+00> : vector<48x32xf32>
    %49 = tpu.matmul %32, %48, %cst_32 {dimension_numbers = #tpu.dot_dimension_numbers<[1], [0], [0], [1], [0, 0, 1, 1], [], []>} : vector<48x32xbf16>, vector<32x32xbf16>, vector<48x32xf32> -> vector<48x32xf32>
    %c0_33 = arith.constant 0 : index
    %c0_34 = arith.constant 0 : index
    %c0_35 = arith.constant 0 : index
    %50 = vector.load %arg10[%c0_33, %c0_34, %c0_35] : memref<1x1x32xf32, #tpu.memory_space<vmem>>, vector<1x1x32xf32>
    %51 = vector.shape_cast %50 : vector<1x1x32xf32> to vector<1x32xf32>
    %52 = vector.broadcast %51 : vector<1x32xf32> to vector<48x32xf32>
    %53 = arith.addf %49, %52 : vector<48x32xf32>
    %c0_36 = arith.constant 0 : index
    %c0_37 = arith.constant 0 : index
    %c0_38 = arith.constant 0 : index
    %54 = vector.load %arg11[%c0_36, %c0_37, %c0_38] : memref<1x32x32xbf16, #tpu.memory_space<vmem>>, vector<1x32x32xbf16>
    %55 = vector.shape_cast %54 : vector<1x32x32xbf16> to vector<32x32xbf16>
    %cst_39 = arith.constant 0.000000e+00 : f32
    %56 = vector.broadcast %cst_39 : f32 to vector<48x32xf32>
    %57 = vector.extract_strided_slice %39 {offsets = [0, 0], sizes = [48, 8], strides = [1, 1]} : vector<48x32xf32> to vector<48x8xf32>
    %58 = vector.shape_cast %57 : vector<48x8xf32> to vector<2x24x8xf32>
    %59 = arith.truncf %58 : vector<2x24x8xf32> to vector<2x24x8xbf16>
    %60 = vector.extract_strided_slice %46 {offsets = [0, 0], sizes = [48, 8], strides = [1, 1]} : vector<48x32xf32> to vector<48x8xf32>
    %61 = vector.shape_cast %60 : vector<48x8xf32> to vector<2x24x8xf32>
    %62 = arith.truncf %61 : vector<2x24x8xf32> to vector<2x24x8xbf16>
    %63 = vector.extract_strided_slice %53 {offsets = [0, 0], sizes = [48, 8], strides = [1, 1]} : vector<48x32xf32> to vector<48x8xf32>
    %64 = vector.shape_cast %63 : vector<48x8xf32> to vector<2x24x8xf32>
    %65 = arith.truncf %64 : vector<2x24x8xf32> to vector<2x24x8xbf16>
    "tpu.trace_start"() <{level = 10 : i32, message = "bqd,bkd->bqk"}> : () -> ()
    %cst_40 = arith.constant dense<0.000000e+00> : vector<2x24x24xf32>
    %66 = tpu.matmul %59, %62, %cst_40 {dimension_numbers = #tpu.dot_dimension_numbers<[2], [2], [1], [1], [0, 0, 0, 1, 1, 1], [0], [0]>} : vector<2x24x8xbf16>, vector<2x24x8xbf16>, vector<2x24x24xf32> -> vector<2x24x24xf32>
    "tpu.trace_stop"() : () -> ()
    %67 = arith.addf %66, %7 : vector<2x24x24xf32>
    %cst_41 = arith.constant dense<0xFF800000> : vector<2x24xf32>
    %68 = vector.multi_reduction <maximumf>, %67, %cst_41 [2] : vector<2x24x24xf32> to vector<2x24xf32>
    %69 = vector.shape_cast %68 : vector<2x24xf32> to vector<2x24x1xf32>
    %70 = vector.broadcast %69 : vector<2x24x1xf32> to vector<2x24x24xf32>
    %71 = arith.subf %67, %70 : vector<2x24x24xf32>
    %72 = math.exp %71 : vector<2x24x24xf32>
    %cst_42 = arith.constant dense<0.000000e+00> : vector<2x24xf32>
    %73 = vector.multi_reduction <add>, %72, %cst_42 [2] : vector<2x24x24xf32> to vector<2x24xf32>
    %74 = vector.shape_cast %73 : vector<2x24xf32> to vector<2x24x1xf32>
    %cst_43 = arith.constant 1.000000e+00 : f32
    %75 = vector.broadcast %cst_43 : f32 to vector<2x24x1xf32>
    %76 = arith.divf %75, %74 : vector<2x24x1xf32>
    %77 = vector.broadcast %76 : vector<2x24x1xf32> to vector<2x24x24xf32>
    %78 = arith.mulf %72, %77 : vector<2x24x24xf32>
    %79 = arith.truncf %78 : vector<2x24x24xf32> to vector<2x24x24xbf16>
    "tpu.trace_start"() <{level = 10 : i32, message = "bqk,bkd->bqd"}> : () -> ()
    %cst_44 = arith.constant dense<0.000000e+00> : vector<2x24x8xf32>
    %80 = tpu.matmul %79, %65, %cst_44 {dimension_numbers = #tpu.dot_dimension_numbers<[2], [1], [1], [2], [0, 0, 0, 1, 1, 2], [0], [0]>} : vector<2x24x24xbf16>, vector<2x24x8xbf16>, vector<2x24x8xf32> -> vector<2x24x8xf32>
    "tpu.trace_stop"() : () -> ()
    %81 = vector.shape_cast %80 : vector<2x24x8xf32> to vector<48x8xf32>
    %82 = arith.truncf %81 : vector<48x8xf32> to vector<48x8xbf16>
    %83 = vector.extract_strided_slice %55 {offsets = [0, 0], sizes = [8, 32], strides = [1, 1]} : vector<32x32xbf16> to vector<8x32xbf16>
    %cst_45 = arith.constant dense<0.000000e+00> : vector<48x32xf32>
    %84 = tpu.matmul %82, %83, %cst_45 {dimension_numbers = #tpu.dot_dimension_numbers<[1], [0], [0], [1], [0, 0, 1, 1], [], []>} : vector<48x8xbf16>, vector<8x32xbf16>, vector<48x32xf32> -> vector<48x32xf32>
    %85 = arith.addf %56, %84 : vector<48x32xf32>
    %86 = vector.extract_strided_slice %39 {offsets = [0, 8], sizes = [48, 8], strides = [1, 1]} : vector<48x32xf32> to vector<48x8xf32>
    %87 = vector.shape_cast %86 : vector<48x8xf32> to vector<2x24x8xf32>
    %88 = arith.truncf %87 : vector<2x24x8xf32> to vector<2x24x8xbf16>
    %89 = vector.extract_strided_slice %46 {offsets = [0, 8], sizes = [48, 8], strides = [1, 1]} : vector<48x32xf32> to vector<48x8xf32>
    %90 = vector.shape_cast %89 : vector<48x8xf32> to vector<2x24x8xf32>
    %91 = arith.truncf %90 : vector<2x24x8xf32> to vector<2x24x8xbf16>
    %92 = vector.extract_strided_slice %53 {offsets = [0, 8], sizes = [48, 8], strides = [1, 1]} : vector<48x32xf32> to vector<48x8xf32>
    %93 = vector.shape_cast %92 : vector<48x8xf32> to vector<2x24x8xf32>
    %94 = arith.truncf %93 : vector<2x24x8xf32> to vector<2x24x8xbf16>
    "tpu.trace_start"() <{level = 10 : i32, message = "bqd,bkd->bqk"}> : () -> ()
    %cst_46 = arith.constant dense<0.000000e+00> : vector<2x24x24xf32>
    %95 = tpu.matmul %88, %91, %cst_46 {dimension_numbers = #tpu.dot_dimension_numbers<[2], [2], [1], [1], [0, 0, 0, 1, 1, 1], [0], [0]>} : vector<2x24x8xbf16>, vector<2x24x8xbf16>, vector<2x24x24xf32> -> vector<2x24x24xf32>
    "tpu.trace_stop"() : () -> ()
    %96 = arith.addf %95, %7 : vector<2x24x24xf32>
    %cst_47 = arith.constant dense<0xFF800000> : vector<2x24xf32>
    %97 = vector.multi_reduction <maximumf>, %96, %cst_47 [2] : vector<2x24x24xf32> to vector<2x24xf32>
    %98 = vector.shape_cast %97 : vector<2x24xf32> to vector<2x24x1xf32>
    %99 = vector.broadcast %98 : vector<2x24x1xf32> to vector<2x24x24xf32>
    %100 = arith.subf %96, %99 : vector<2x24x24xf32>
    %101 = math.exp %100 : vector<2x24x24xf32>
    %cst_48 = arith.constant dense<0.000000e+00> : vector<2x24xf32>
    %102 = vector.multi_reduction <add>, %101, %cst_48 [2] : vector<2x24x24xf32> to vector<2x24xf32>
    %103 = vector.shape_cast %102 : vector<2x24xf32> to vector<2x24x1xf32>
    %cst_49 = arith.constant 1.000000e+00 : f32
    %104 = vector.broadcast %cst_49 : f32 to vector<2x24x1xf32>
    %105 = arith.divf %104, %103 : vector<2x24x1xf32>
    %106 = vector.broadcast %105 : vector<2x24x1xf32> to vector<2x24x24xf32>
    %107 = arith.mulf %101, %106 : vector<2x24x24xf32>
    %108 = arith.truncf %107 : vector<2x24x24xf32> to vector<2x24x24xbf16>
    "tpu.trace_start"() <{level = 10 : i32, message = "bqk,bkd->bqd"}> : () -> ()
    %cst_50 = arith.constant dense<0.000000e+00> : vector<2x24x8xf32>
    %109 = tpu.matmul %108, %94, %cst_50 {dimension_numbers = #tpu.dot_dimension_numbers<[2], [1], [1], [2], [0, 0, 0, 1, 1, 2], [0], [0]>} : vector<2x24x24xbf16>, vector<2x24x8xbf16>, vector<2x24x8xf32> -> vector<2x24x8xf32>
    "tpu.trace_stop"() : () -> ()
    %110 = vector.shape_cast %109 : vector<2x24x8xf32> to vector<48x8xf32>
    %111 = arith.truncf %110 : vector<48x8xf32> to vector<48x8xbf16>
    %112 = vector.extract_strided_slice %55 {offsets = [8, 0], sizes = [8, 32], strides = [1, 1]} : vector<32x32xbf16> to vector<8x32xbf16>
    %cst_51 = arith.constant dense<0.000000e+00> : vector<48x32xf32>
    %113 = tpu.matmul %111, %112, %cst_51 {dimension_numbers = #tpu.dot_dimension_numbers<[1], [0], [0], [1], [0, 0, 1, 1], [], []>} : vector<48x8xbf16>, vector<8x32xbf16>, vector<48x32xf32> -> vector<48x32xf32>
    %114 = arith.addf %85, %113 : vector<48x32xf32>
    %115 = vector.extract_strided_slice %39 {offsets = [0, 16], sizes = [48, 8], strides = [1, 1]} : vector<48x32xf32> to vector<48x8xf32>
    %116 = vector.shape_cast %115 : vector<48x8xf32> to vector<2x24x8xf32>
    %117 = arith.truncf %116 : vector<2x24x8xf32> to vector<2x24x8xbf16>
    %118 = vector.extract_strided_slice %46 {offsets = [0, 16], sizes = [48, 8], strides = [1, 1]} : vector<48x32xf32> to vector<48x8xf32>
    %119 = vector.shape_cast %118 : vector<48x8xf32> to vector<2x24x8xf32>
    %120 = arith.truncf %119 : vector<2x24x8xf32> to vector<2x24x8xbf16>
    %121 = vector.extract_strided_slice %53 {offsets = [0, 16], sizes = [48, 8], strides = [1, 1]} : vector<48x32xf32> to vector<48x8xf32>
    %122 = vector.shape_cast %121 : vector<48x8xf32> to vector<2x24x8xf32>
    %123 = arith.truncf %122 : vector<2x24x8xf32> to vector<2x24x8xbf16>
    "tpu.trace_start"() <{level = 10 : i32, message = "bqd,bkd->bqk"}> : () -> ()
    %cst_52 = arith.constant dense<0.000000e+00> : vector<2x24x24xf32>
    %124 = tpu.matmul %117, %120, %cst_52 {dimension_numbers = #tpu.dot_dimension_numbers<[2], [2], [1], [1], [0, 0, 0, 1, 1, 1], [0], [0]>} : vector<2x24x8xbf16>, vector<2x24x8xbf16>, vector<2x24x24xf32> -> vector<2x24x24xf32>
    "tpu.trace_stop"() : () -> ()
    %125 = arith.addf %124, %7 : vector<2x24x24xf32>
    %cst_53 = arith.constant dense<0xFF800000> : vector<2x24xf32>
    %126 = vector.multi_reduction <maximumf>, %125, %cst_53 [2] : vector<2x24x24xf32> to vector<2x24xf32>
    %127 = vector.shape_cast %126 : vector<2x24xf32> to vector<2x24x1xf32>
    %128 = vector.broadcast %127 : vector<2x24x1xf32> to vector<2x24x24xf32>
    %129 = arith.subf %125, %128 : vector<2x24x24xf32>
    %130 = math.exp %129 : vector<2x24x24xf32>
    %cst_54 = arith.constant dense<0.000000e+00> : vector<2x24xf32>
    %131 = vector.multi_reduction <add>, %130, %cst_54 [2] : vector<2x24x24xf32> to vector<2x24xf32>
    %132 = vector.shape_cast %131 : vector<2x24xf32> to vector<2x24x1xf32>
    %cst_55 = arith.constant 1.000000e+00 : f32
    %133 = vector.broadcast %cst_55 : f32 to vector<2x24x1xf32>
    %134 = arith.divf %133, %132 : vector<2x24x1xf32>
    %135 = vector.broadcast %134 : vector<2x24x1xf32> to vector<2x24x24xf32>
    %136 = arith.mulf %130, %135 : vector<2x24x24xf32>
    %137 = arith.truncf %136 : vector<2x24x24xf32> to vector<2x24x24xbf16>
    "tpu.trace_start"() <{level = 10 : i32, message = "bqk,bkd->bqd"}> : () -> ()
    %cst_56 = arith.constant dense<0.000000e+00> : vector<2x24x8xf32>
    %138 = tpu.matmul %137, %123, %cst_56 {dimension_numbers = #tpu.dot_dimension_numbers<[2], [1], [1], [2], [0, 0, 0, 1, 1, 2], [0], [0]>} : vector<2x24x24xbf16>, vector<2x24x8xbf16>, vector<2x24x8xf32> -> vector<2x24x8xf32>
    "tpu.trace_stop"() : () -> ()
    %139 = vector.shape_cast %138 : vector<2x24x8xf32> to vector<48x8xf32>
    %140 = arith.truncf %139 : vector<48x8xf32> to vector<48x8xbf16>
    %141 = vector.extract_strided_slice %55 {offsets = [16, 0], sizes = [8, 32], strides = [1, 1]} : vector<32x32xbf16> to vector<8x32xbf16>
    %cst_57 = arith.constant dense<0.000000e+00> : vector<48x32xf32>
    %142 = tpu.matmul %140, %141, %cst_57 {dimension_numbers = #tpu.dot_dimension_numbers<[1], [0], [0], [1], [0, 0, 1, 1], [], []>} : vector<48x8xbf16>, vector<8x32xbf16>, vector<48x32xf32> -> vector<48x32xf32>
    %143 = arith.addf %114, %142 : vector<48x32xf32>
    %144 = vector.extract_strided_slice %39 {offsets = [0, 24], sizes = [48, 8], strides = [1, 1]} : vector<48x32xf32> to vector<48x8xf32>
    %145 = vector.shape_cast %144 : vector<48x8xf32> to vector<2x24x8xf32>
    %146 = arith.truncf %145 : vector<2x24x8xf32> to vector<2x24x8xbf16>
    %147 = vector.extract_strided_slice %46 {offsets = [0, 24], sizes = [48, 8], strides = [1, 1]} : vector<48x32xf32> to vector<48x8xf32>
    %148 = vector.shape_cast %147 : vector<48x8xf32> to vector<2x24x8xf32>
    %149 = arith.truncf %148 : vector<2x24x8xf32> to vector<2x24x8xbf16>
    %150 = vector.extract_strided_slice %53 {offsets = [0, 24], sizes = [48, 8], strides = [1, 1]} : vector<48x32xf32> to vector<48x8xf32>
    %151 = vector.shape_cast %150 : vector<48x8xf32> to vector<2x24x8xf32>
    %152 = arith.truncf %151 : vector<2x24x8xf32> to vector<2x24x8xbf16>
    "tpu.trace_start"() <{level = 10 : i32, message = "bqd,bkd->bqk"}> : () -> ()
    %cst_58 = arith.constant dense<0.000000e+00> : vector<2x24x24xf32>
    %153 = tpu.matmul %146, %149, %cst_58 {dimension_numbers = #tpu.dot_dimension_numbers<[2], [2], [1], [1], [0, 0, 0, 1, 1, 1], [0], [0]>} : vector<2x24x8xbf16>, vector<2x24x8xbf16>, vector<2x24x24xf32> -> vector<2x24x24xf32>
    "tpu.trace_stop"() : () -> ()
    %154 = arith.addf %153, %7 : vector<2x24x24xf32>
    %cst_59 = arith.constant dense<0xFF800000> : vector<2x24xf32>
    %155 = vector.multi_reduction <maximumf>, %154, %cst_59 [2] : vector<2x24x24xf32> to vector<2x24xf32>
    %156 = vector.shape_cast %155 : vector<2x24xf32> to vector<2x24x1xf32>
    %157 = vector.broadcast %156 : vector<2x24x1xf32> to vector<2x24x24xf32>
    %158 = arith.subf %154, %157 : vector<2x24x24xf32>
    %159 = math.exp %158 : vector<2x24x24xf32>
    %cst_60 = arith.constant dense<0.000000e+00> : vector<2x24xf32>
    %160 = vector.multi_reduction <add>, %159, %cst_60 [2] : vector<2x24x24xf32> to vector<2x24xf32>
    %161 = vector.shape_cast %160 : vector<2x24xf32> to vector<2x24x1xf32>
    %cst_61 = arith.constant 1.000000e+00 : f32
    %162 = vector.broadcast %cst_61 : f32 to vector<2x24x1xf32>
    %163 = arith.divf %162, %161 : vector<2x24x1xf32>
    %164 = vector.broadcast %163 : vector<2x24x1xf32> to vector<2x24x24xf32>
    %165 = arith.mulf %159, %164 : vector<2x24x24xf32>
    %166 = arith.truncf %165 : vector<2x24x24xf32> to vector<2x24x24xbf16>
    "tpu.trace_start"() <{level = 10 : i32, message = "bqk,bkd->bqd"}> : () -> ()
    %cst_62 = arith.constant dense<0.000000e+00> : vector<2x24x8xf32>
    %167 = tpu.matmul %166, %152, %cst_62 {dimension_numbers = #tpu.dot_dimension_numbers<[2], [1], [1], [2], [0, 0, 0, 1, 1, 2], [0], [0]>} : vector<2x24x24xbf16>, vector<2x24x8xbf16>, vector<2x24x8xf32> -> vector<2x24x8xf32>
    "tpu.trace_stop"() : () -> ()
    %168 = vector.shape_cast %167 : vector<2x24x8xf32> to vector<48x8xf32>
    %169 = arith.truncf %168 : vector<48x8xf32> to vector<48x8xbf16>
    %170 = vector.extract_strided_slice %55 {offsets = [24, 0], sizes = [8, 32], strides = [1, 1]} : vector<32x32xbf16> to vector<8x32xbf16>
    %cst_63 = arith.constant dense<0.000000e+00> : vector<48x32xf32>
    %171 = tpu.matmul %169, %170, %cst_63 {dimension_numbers = #tpu.dot_dimension_numbers<[1], [0], [0], [1], [0, 0, 1, 1], [], []>} : vector<48x8xbf16>, vector<8x32xbf16>, vector<48x32xf32> -> vector<48x32xf32>
    %172 = arith.addf %143, %171 : vector<48x32xf32>
    %173 = arith.addf %4, %172 : vector<48x32xf32>
    %c0_64 = arith.constant 0 : index
    %c0_65 = arith.constant 0 : index
    %c0_66 = arith.constant 0 : index
    %174 = vector.load %arg12[%c0_64, %c0_65, %c0_66] : memref<1x1x32xf32, #tpu.memory_space<vmem>>, vector<1x1x32xf32>
    %175 = vector.shape_cast %174 : vector<1x1x32xf32> to vector<1x32xf32>
    %176 = vector.broadcast %175 : vector<1x32xf32> to vector<48x32xf32>
    %177 = arith.addf %173, %176 : vector<48x32xf32>
    %c0_67 = arith.constant 0 : index
    %c0_68 = arith.constant 0 : index
    %c0_69 = arith.constant 0 : index
    %178 = vector.load %arg13[%c0_67, %c0_68, %c0_69] : memref<1x1x32xf32, #tpu.memory_space<vmem>>, vector<1x1x32xf32>
    %179 = vector.shape_cast %178 : vector<1x1x32xf32> to vector<1x32xf32>
    %c0_70 = arith.constant 0 : index
    %c0_71 = arith.constant 0 : index
    %c0_72 = arith.constant 0 : index
    %180 = vector.load %arg14[%c0_70, %c0_71, %c0_72] : memref<1x1x32xf32, #tpu.memory_space<vmem>>, vector<1x1x32xf32>
    %181 = vector.shape_cast %180 : vector<1x1x32xf32> to vector<1x32xf32>
    %cst_73 = arith.constant dense<0.000000e+00> : vector<48xf32>
    %182 = vector.multi_reduction <add>, %177, %cst_73 [1] : vector<48x32xf32> to vector<48xf32>
    %183 = vector.shape_cast %182 : vector<48xf32> to vector<48x1xf32>
    %cst_74 = arith.constant 3.200000e+01 : f32
    %184 = vector.broadcast %cst_74 : f32 to vector<48x1xf32>
    %185 = arith.divf %183, %184 : vector<48x1xf32>
    %186 = vector.broadcast %185 : vector<48x1xf32> to vector<48x32xf32>
    %187 = arith.subf %177, %186 : vector<48x32xf32>
    %188 = arith.mulf %187, %187 : vector<48x32xf32>
    %cst_75 = arith.constant dense<0.000000e+00> : vector<48xf32>
    %189 = vector.multi_reduction <add>, %188, %cst_75 [1] : vector<48x32xf32> to vector<48xf32>
    %190 = vector.shape_cast %189 : vector<48xf32> to vector<48x1xf32>
    %cst_76 = arith.constant 3.200000e+01 : f32
    %191 = vector.broadcast %cst_76 : f32 to vector<48x1xf32>
    %192 = arith.divf %190, %191 : vector<48x1xf32>
    %cst_77 = arith.constant 9.99999974E-6 : f32
    %193 = vector.broadcast %cst_77 : f32 to vector<48x1xf32>
    %194 = arith.addf %192, %193 : vector<48x1xf32>
    %195 = math.rsqrt %194 : vector<48x1xf32>
    %196 = vector.broadcast %195 : vector<48x1xf32> to vector<48x32xf32>
    %197 = arith.mulf %187, %196 : vector<48x32xf32>
    %198 = vector.broadcast %179 : vector<1x32xf32> to vector<48x32xf32>
    %199 = arith.mulf %197, %198 : vector<48x32xf32>
    %200 = vector.broadcast %181 : vector<1x32xf32> to vector<48x32xf32>
    %201 = arith.addf %199, %200 : vector<48x32xf32>
    %202 = arith.truncf %201 : vector<48x32xf32> to vector<48x32xbf16>
    %c0_78 = arith.constant 0 : index
    %c0_79 = arith.constant 0 : index
    %c0_80 = arith.constant 0 : index
    %203 = vector.load %arg15[%c0_78, %c0_79, %c0_80] : memref<1x32x128xbf16, #tpu.memory_space<vmem>>, vector<1x32x128xbf16>
    %204 = vector.shape_cast %203 : vector<1x32x128xbf16> to vector<32x128xbf16>
    %cst_81 = arith.constant dense<0.000000e+00> : vector<48x128xf32>
    %205 = tpu.matmul %202, %204, %cst_81 {dimension_numbers = #tpu.dot_dimension_numbers<[1], [0], [0], [1], [0, 0, 1, 1], [], []>} : vector<48x32xbf16>, vector<32x128xbf16>, vector<48x128xf32> -> vector<48x128xf32>
    %c0_82 = arith.constant 0 : index
    %c0_83 = arith.constant 0 : index
    %c0_84 = arith.constant 0 : index
    %206 = vector.load %arg16[%c0_82, %c0_83, %c0_84] : memref<1x1x128xf32, #tpu.memory_space<vmem>>, vector<1x1x128xf32>
    %207 = vector.shape_cast %206 : vector<1x1x128xf32> to vector<1x128xf32>
    %208 = vector.broadcast %207 : vector<1x128xf32> to vector<48x128xf32>
    %209 = arith.addf %205, %208 : vector<48x128xf32>
    %cst_85 = arith.constant 5.000000e-01 : f32
    %210 = vector.broadcast %cst_85 : f32 to vector<48x128xf32>
    %211 = arith.mulf %210, %209 : vector<48x128xf32>
    %cst_86 = arith.constant 0.707106769 : f32
    %212 = vector.broadcast %cst_86 : f32 to vector<48x128xf32>
    %213 = arith.mulf %209, %212 : vector<48x128xf32>
    %cst_87 = arith.constant 0.000000e+00 : f32
    %214 = vector.broadcast %cst_87 : f32 to vector<48x128xf32>
    %215 = arith.cmpf oge, %213, %214 : vector<48x128xf32>
    %cst_88 = arith.constant 1.000000e+00 : f32
    %cst_89 = arith.constant -1.000000e+00 : f32
    %216 = vector.broadcast %cst_88 : f32 to vector<48x128xf32>
    %217 = vector.broadcast %cst_89 : f32 to vector<48x128xf32>
    %218 = arith.select %215, %216, %217 : vector<48x128xi1>, vector<48x128xf32>
    %219 = math.absf %213 : vector<48x128xf32>
    %cst_90 = arith.constant 0.327591091 : f32
    %220 = vector.broadcast %cst_90 : f32 to vector<48x128xf32>
    %221 = arith.mulf %220, %219 : vector<48x128xf32>
    %cst_91 = arith.constant 1.000000e+00 : f32
    %222 = vector.broadcast %cst_91 : f32 to vector<48x128xf32>
    %223 = arith.addf %222, %221 : vector<48x128xf32>
    %cst_92 = arith.constant 1.000000e+00 : f32
    %224 = vector.broadcast %cst_92 : f32 to vector<48x128xf32>
    %225 = arith.divf %224, %223 : vector<48x128xf32>
    %cst_93 = arith.constant 1.06140542 : f32
    %226 = vector.broadcast %cst_93 : f32 to vector<48x128xf32>
    %227 = arith.mulf %226, %225 : vector<48x128xf32>
    %cst_94 = arith.constant -1.45315206 : f32
    %228 = vector.broadcast %cst_94 : f32 to vector<48x128xf32>
    %229 = arith.addf %227, %228 : vector<48x128xf32>
    %230 = arith.mulf %229, %225 : vector<48x128xf32>
    %cst_95 = arith.constant 1.42141378 : f32
    %231 = vector.broadcast %cst_95 : f32 to vector<48x128xf32>
    %232 = arith.addf %230, %231 : vector<48x128xf32>
    %233 = arith.mulf %232, %225 : vector<48x128xf32>
    %cst_96 = arith.constant -0.284496725 : f32
    %234 = vector.broadcast %cst_96 : f32 to vector<48x128xf32>
    %235 = arith.addf %233, %234 : vector<48x128xf32>
    %236 = arith.mulf %235, %225 : vector<48x128xf32>
    %cst_97 = arith.constant 0.254829586 : f32
    %237 = vector.broadcast %cst_97 : f32 to vector<48x128xf32>
    %238 = arith.addf %236, %237 : vector<48x128xf32>
    %239 = arith.mulf %238, %225 : vector<48x128xf32>
    %cst_98 = arith.constant 0.000000e+00 : f32
    %240 = vector.broadcast %cst_98 : f32 to vector<48x128xf32>
    %241 = arith.subf %240, %219 : vector<48x128xf32>
    %242 = arith.mulf %241, %219 : vector<48x128xf32>
    %243 = math.exp %242 : vector<48x128xf32>
    %244 = arith.mulf %239, %243 : vector<48x128xf32>
    %cst_99 = arith.constant 1.000000e+00 : f32
    %245 = vector.broadcast %cst_99 : f32 to vector<48x128xf32>
    %246 = arith.subf %245, %244 : vector<48x128xf32>
    %247 = arith.mulf %218, %246 : vector<48x128xf32>
    %cst_100 = arith.constant 1.000000e+00 : f32
    %248 = vector.broadcast %cst_100 : f32 to vector<48x128xf32>
    %249 = arith.addf %248, %247 : vector<48x128xf32>
    %250 = arith.mulf %211, %249 : vector<48x128xf32>
    %251 = arith.truncf %250 : vector<48x128xf32> to vector<48x128xbf16>
    %c0_101 = arith.constant 0 : index
    %c0_102 = arith.constant 0 : index
    %c0_103 = arith.constant 0 : index
    %252 = vector.load %arg17[%c0_101, %c0_102, %c0_103] : memref<1x128x32xbf16, #tpu.memory_space<vmem>>, vector<1x128x32xbf16>
    %253 = vector.shape_cast %252 : vector<1x128x32xbf16> to vector<128x32xbf16>
    %cst_104 = arith.constant dense<0.000000e+00> : vector<48x32xf32>
    %254 = tpu.matmul %251, %253, %cst_104 {dimension_numbers = #tpu.dot_dimension_numbers<[1], [0], [0], [1], [0, 0, 1, 1], [], []>} : vector<48x128xbf16>, vector<128x32xbf16>, vector<48x32xf32> -> vector<48x32xf32>
    %c0_105 = arith.constant 0 : index
    %c0_106 = arith.constant 0 : index
    %c0_107 = arith.constant 0 : index
    %255 = vector.load %arg18[%c0_105, %c0_106, %c0_107] : memref<1x1x32xf32, #tpu.memory_space<vmem>>, vector<1x1x32xf32>
    %256 = vector.shape_cast %255 : vector<1x1x32xf32> to vector<1x32xf32>
    %257 = vector.broadcast %256 : vector<1x32xf32> to vector<48x32xf32>
    %258 = arith.addf %254, %257 : vector<48x32xf32>
    %259 = arith.addf %177, %258 : vector<48x32xf32>
    %260 = vector.shape_cast %259 : vector<48x32xf32> to vector<2x24x32xf32>
    %c0_108 = arith.constant 0 : index
    %c0_109 = arith.constant 0 : index
    %c0_110 = arith.constant 0 : index
    %261 = vector.load %arg25[%c0_108, %c0_109, %c0_110] : memref<2x24x32xf32, #tpu.memory_space<vmem>>, vector<2x24x32xf32>
    tpu.vector_store %arg25[%c0_108, %c0_109, %c0_110], %260 {strides = array<i32>} : memref<2x24x32xf32, #tpu.memory_space<vmem>>, vector<2x24x32xf32>,
    %c1_i32 = arith.constant 1 : i32
    %262 = arith.cmpi eq, %arg0, %c1_i32 : i32
    %263 = arith.extui %262 : i1 to i32
    %c0_i32_111 = arith.constant 0 : i32
    %264 = arith.cmpi ne, %263, %c0_i32_111 : i32
    scf.if %264 {
      %c0_112 = arith.constant 0 : index
      %c8 = arith.constant 8 : index
      %c0_113 = arith.constant 0 : index
      %265 = vector.load %arg25[%c0_112, %c8, %c0_113] : memref<2x24x32xf32, #tpu.memory_space<vmem>>, vector<2x8x32xf32>
      %266 = vector.shape_cast %265 : vector<2x8x32xf32> to vector<16x32xf32>
      %c0_114 = arith.constant 0 : index
      %c0_115 = arith.constant 0 : index
      %267 = vector.load %arg19[%c0_114, %c0_115] : memref<1x32xf32, #tpu.memory_space<vmem>>, vector<1x32xf32>
      %c0_116 = arith.constant 0 : index
      %c0_117 = arith.constant 0 : index
      %268 = vector.load %arg20[%c0_116, %c0_117] : memref<1x32xf32, #tpu.memory_space<vmem>>, vector<1x32xf32>
      %cst_118 = arith.constant dense<0.000000e+00> : vector<16xf32>
      %269 = vector.multi_reduction <add>, %266, %cst_118 [1] : vector<16x32xf32> to vector<16xf32>
      %270 = vector.shape_cast %269 : vector<16xf32> to vector<16x1xf32>
      %cst_119 = arith.constant 3.200000e+01 : f32
      %271 = vector.broadcast %cst_119 : f32 to vector<16x1xf32>
      %272 = arith.divf %270, %271 : vector<16x1xf32>
      %273 = vector.broadcast %272 : vector<16x1xf32> to vector<16x32xf32>
      %274 = arith.subf %266, %273 : vector<16x32xf32>
      %275 = arith.mulf %274, %274 : vector<16x32xf32>
      %cst_120 = arith.constant dense<0.000000e+00> : vector<16xf32>
      %276 = vector.multi_reduction <add>, %275, %cst_120 [1] : vector<16x32xf32> to vector<16xf32>
      %277 = vector.shape_cast %276 : vector<16xf32> to vector<16x1xf32>
      %cst_121 = arith.constant 3.200000e+01 : f32
      %278 = vector.broadcast %cst_121 : f32 to vector<16x1xf32>
      %279 = arith.divf %277, %278 : vector<16x1xf32>
      %cst_122 = arith.constant 9.99999974E-6 : f32
      %280 = vector.broadcast %cst_122 : f32 to vector<16x1xf32>
      %281 = arith.addf %279, %280 : vector<16x1xf32>
      %282 = math.rsqrt %281 : vector<16x1xf32>
      %283 = vector.broadcast %282 : vector<16x1xf32> to vector<16x32xf32>
      %284 = arith.mulf %274, %283 : vector<16x32xf32>
      %285 = vector.broadcast %267 : vector<1x32xf32> to vector<16x32xf32>
      %286 = arith.mulf %284, %285 : vector<16x32xf32>
      %287 = vector.broadcast %268 : vector<1x32xf32> to vector<16x32xf32>
      %288 = arith.addf %286, %287 : vector<16x32xf32>
      %289 = arith.truncf %288 : vector<16x32xf32> to vector<16x32xbf16>
      %c0_123 = arith.constant 0 : index
      %c0_124 = arith.constant 0 : index
      %290 = vector.load %arg21[%c0_123, %c0_124] : memref<32x128xbf16, #tpu.memory_space<vmem>>, vector<32x128xbf16>
      %cst_125 = arith.constant dense<0.000000e+00> : vector<16x128xf32>
      %291 = tpu.matmul %289, %290, %cst_125 {dimension_numbers = #tpu.dot_dimension_numbers<[1], [0], [0], [1], [0, 0, 1, 1], [], []>} : vector<16x32xbf16>, vector<32x128xbf16>, vector<16x128xf32> -> vector<16x128xf32>
      %292 = vector.shape_cast %291 : vector<16x128xf32> to vector<2x8x128xf32>
      %c0_126 = arith.constant 0 : index
      %c0_127 = arith.constant 0 : index
      %c0_128 = arith.constant 0 : index
      %293 = vector.load %arg23[%c0_126, %c0_127, %c0_128] : memref<2x8x128xf32, #tpu.memory_space<vmem>>, vector<2x8x128xf32>
      tpu.vector_store %arg23[%c0_126, %c0_127, %c0_128], %292 {strides = array<i32>} : memref<2x8x128xf32, #tpu.memory_space<vmem>>, vector<2x8x128xf32>,
      %c0_129 = arith.constant 0 : index
      %c16 = arith.constant 16 : index
      %c0_130 = arith.constant 0 : index
      %294 = vector.load %arg25[%c0_129, %c16, %c0_130] : memref<2x24x32xf32, #tpu.memory_space<vmem>>, vector<2x8x32xf32>
      %295 = vector.shape_cast %294 : vector<2x8x32xf32> to vector<16x32xf32>
      %c0_131 = arith.constant 0 : index
      %c0_132 = arith.constant 0 : index
      %296 = vector.load %arg19[%c0_131, %c0_132] : memref<1x32xf32, #tpu.memory_space<vmem>>, vector<1x32xf32>
      %c0_133 = arith.constant 0 : index
      %c0_134 = arith.constant 0 : index
      %297 = vector.load %arg20[%c0_133, %c0_134] : memref<1x32xf32, #tpu.memory_space<vmem>>, vector<1x32xf32>
      %cst_135 = arith.constant dense<0.000000e+00> : vector<16xf32>
      %298 = vector.multi_reduction <add>, %295, %cst_135 [1] : vector<16x32xf32> to vector<16xf32>
      %299 = vector.shape_cast %298 : vector<16xf32> to vector<16x1xf32>
      %cst_136 = arith.constant 3.200000e+01 : f32
      %300 = vector.broadcast %cst_136 : f32 to vector<16x1xf32>
      %301 = arith.divf %299, %300 : vector<16x1xf32>
      %302 = vector.broadcast %301 : vector<16x1xf32> to vector<16x32xf32>
      %303 = arith.subf %295, %302 : vector<16x32xf32>
      %304 = arith.mulf %303, %303 : vector<16x32xf32>
      %cst_137 = arith.constant dense<0.000000e+00> : vector<16xf32>
      %305 = vector.multi_reduction <add>, %304, %cst_137 [1] : vector<16x32xf32> to vector<16xf32>
      %306 = vector.shape_cast %305 : vector<16xf32> to vector<16x1xf32>
      %cst_138 = arith.constant 3.200000e+01 : f32
      %307 = vector.broadcast %cst_138 : f32 to vector<16x1xf32>
      %308 = arith.divf %306, %307 : vector<16x1xf32>
      %cst_139 = arith.constant 9.99999974E-6 : f32
      %309 = vector.broadcast %cst_139 : f32 to vector<16x1xf32>
      %310 = arith.addf %308, %309 : vector<16x1xf32>
      %311 = math.rsqrt %310 : vector<16x1xf32>
      %312 = vector.broadcast %311 : vector<16x1xf32> to vector<16x32xf32>
      %313 = arith.mulf %303, %312 : vector<16x32xf32>
      %314 = vector.broadcast %296 : vector<1x32xf32> to vector<16x32xf32>
      %315 = arith.mulf %313, %314 : vector<16x32xf32>
      %316 = vector.broadcast %297 : vector<1x32xf32> to vector<16x32xf32>
      %317 = arith.addf %315, %316 : vector<16x32xf32>
      %318 = arith.truncf %317 : vector<16x32xf32> to vector<16x32xbf16>
      %c0_140 = arith.constant 0 : index
      %c0_141 = arith.constant 0 : index
      %319 = vector.load %arg22[%c0_140, %c0_141] : memref<32x128xbf16, #tpu.memory_space<vmem>>, vector<32x128xbf16>
      %cst_142 = arith.constant dense<0.000000e+00> : vector<16x128xf32>
      %320 = tpu.matmul %318, %319, %cst_142 {dimension_numbers = #tpu.dot_dimension_numbers<[1], [0], [0], [1], [0, 0, 1, 1], [], []>} : vector<16x32xbf16>, vector<32x128xbf16>, vector<16x128xf32> -> vector<16x128xf32>
      %321 = vector.shape_cast %320 : vector<16x128xf32> to vector<2x8x128xf32>
      %c0_143 = arith.constant 0 : index
      %c0_144 = arith.constant 0 : index
      %c0_145 = arith.constant 0 : index
      %322 = vector.load %arg24[%c0_143, %c0_144, %c0_145] : memref<2x8x128xf32, #tpu.memory_space<vmem>>, vector<2x8x128xf32>
      tpu.vector_store %arg24[%c0_143, %c0_144, %c0_145], %321 {strides = array<i32>} : memref<2x8x128xf32, #tpu.memory_space<vmem>>, vector<2x8x128xf32>,
    } else {
    }
    return
  }
  func.func @transform_0(%arg0: i32) -> (i32, i32, i32) {
    %c0_i32 = arith.constant 0 : i32
    %c0_i32_0 = arith.constant 0 : i32
    %c0_i32_1 = arith.constant 0 : i32
    %c0_i32_2 = arith.constant 0 : i32
    return %c0_i32, %c0_i32_0, %c0_i32_1 : i32, i32, i32
  }
  func.func @transform_1(%arg0: i32) -> (i32, i32) {
    %c0_i32 = arith.constant 0 : i32
    %c0_i32_0 = arith.constant 0 : i32
    %c0_i32_1 = arith.constant 0 : i32
    return %c0_i32, %c0_i32_0 : i32, i32
  }
  func.func @transform_2(%arg0: i32) -> (i32, i32, i32) {
    %c0_i32 = arith.constant 0 : i32
    %c0_i32_0 = arith.constant 0 : i32
    %c0_i32_1 = arith.constant 0 : i32
    return %arg0, %c0_i32, %c0_i32_0 : i32, i32, i32
  }
  func.func @transform_3(%arg0: i32) -> (i32, i32, i32) {
    %c0_i32 = arith.constant 0 : i32
    %c0_i32_0 = arith.constant 0 : i32
    %c0_i32_1 = arith.constant 0 : i32
    return %arg0, %c0_i32, %c0_i32_0 : i32, i32, i32
  }
  func.func @transform_4(%arg0: i32) -> (i32, i32, i32) {
    %c0_i32 = arith.constant 0 : i32
    %c0_i32_0 = arith.constant 0 : i32
    %c0_i32_1 = arith.constant 0 : i32
    return %arg0, %c0_i32, %c0_i32_0 : i32, i32, i32
  }
  func.func @transform_5(%arg0: i32) -> (i32, i32, i32) {
    %c0_i32 = arith.constant 0 : i32
    %c0_i32_0 = arith.constant 0 : i32
    %c0_i32_1 = arith.constant 0 : i32
    return %arg0, %c0_i32, %c0_i32_0 : i32, i32, i32
  }
  func.func @transform_6(%arg0: i32) -> (i32, i32, i32) {
    %c0_i32 = arith.constant 0 : i32
    %c0_i32_0 = arith.constant 0 : i32
    %c0_i32_1 = arith.constant 0 : i32
    return %arg0, %c0_i32, %c0_i32_0 : i32, i32, i32
  }
  func.func @transform_7(%arg0: i32) -> (i32, i32, i32) {
    %c0_i32 = arith.constant 0 : i32
    %c0_i32_0 = arith.constant 0 : i32
    %c0_i32_1 = arith.constant 0 : i32
    return %arg0, %c0_i32, %c0_i32_0 : i32, i32, i32
  }
  func.func @transform_8(%arg0: i32) -> (i32, i32, i32) {
    %c0_i32 = arith.constant 0 : i32
    %c0_i32_0 = arith.constant 0 : i32
    %c0_i32_1 = arith.constant 0 : i32
    return %arg0, %c0_i32, %c0_i32_0 : i32, i32, i32
  }
  func.func @transform_9(%arg0: i32) -> (i32, i32, i32) {
    %c0_i32 = arith.constant 0 : i32
    %c0_i32_0 = arith.constant 0 : i32
    %c0_i32_1 = arith.constant 0 : i32
    return %arg0, %c0_i32, %c0_i32_0 : i32, i32, i32
  }
  func.func @transform_10(%arg0: i32) -> (i32, i32, i32) {
    %c0_i32 = arith.constant 0 : i32
    %c0_i32_0 = arith.constant 0 : i32
    %c0_i32_1 = arith.constant 0 : i32
    return %arg0, %c0_i32, %c0_i32_0 : i32, i32, i32
  }
  func.func @transform_11(%arg0: i32) -> (i32, i32, i32) {
    %c0_i32 = arith.constant 0 : i32
    %c0_i32_0 = arith.constant 0 : i32
    %c0_i32_1 = arith.constant 0 : i32
    return %arg0, %c0_i32, %c0_i32_0 : i32, i32, i32
  }
  func.func @transform_12(%arg0: i32) -> (i32, i32, i32) {
    %c0_i32 = arith.constant 0 : i32
    %c0_i32_0 = arith.constant 0 : i32
    %c0_i32_1 = arith.constant 0 : i32
    return %arg0, %c0_i32, %c0_i32_0 : i32, i32, i32
  }
  func.func @transform_13(%arg0: i32) -> (i32, i32, i32) {
    %c0_i32 = arith.constant 0 : i32
    %c0_i32_0 = arith.constant 0 : i32
    %c0_i32_1 = arith.constant 0 : i32
    return %arg0, %c0_i32, %c0_i32_0 : i32, i32, i32
  }
  func.func @transform_14(%arg0: i32) -> (i32, i32, i32) {
    %c0_i32 = arith.constant 0 : i32
    %c0_i32_0 = arith.constant 0 : i32
    %c0_i32_1 = arith.constant 0 : i32
    return %arg0, %c0_i32, %c0_i32_0 : i32, i32, i32
  }
  func.func @transform_15(%arg0: i32) -> (i32, i32, i32) {
    %c0_i32 = arith.constant 0 : i32
    %c0_i32_0 = arith.constant 0 : i32
    %c0_i32_1 = arith.constant 0 : i32
    return %arg0, %c0_i32, %c0_i32_0 : i32, i32, i32
  }
  func.func @transform_16(%arg0: i32) -> (i32, i32, i32) {
    %c0_i32 = arith.constant 0 : i32
    %c0_i32_0 = arith.constant 0 : i32
    %c0_i32_1 = arith.constant 0 : i32
    return %arg0, %c0_i32, %c0_i32_0 : i32, i32, i32
  }
  func.func @transform_17(%arg0: i32) -> (i32, i32, i32) {
    %c0_i32 = arith.constant 0 : i32
    %c0_i32_0 = arith.constant 0 : i32
    %c0_i32_1 = arith.constant 0 : i32
    return %arg0, %c0_i32, %c0_i32_0 : i32, i32, i32
  }
  func.func @transform_18(%arg0: i32) -> (i32, i32) {
    %c0_i32 = arith.constant 0 : i32
    %c0_i32_0 = arith.constant 0 : i32
    %c0_i32_1 = arith.constant 0 : i32
    return %c0_i32, %c0_i32_0 : i32, i32
  }
  func.func @transform_19(%arg0: i32) -> (i32, i32) {
    %c0_i32 = arith.constant 0 : i32
    %c0_i32_0 = arith.constant 0 : i32
    %c0_i32_1 = arith.constant 0 : i32
    return %c0_i32, %c0_i32_0 : i32, i32
  }
  func.func @transform_20(%arg0: i32) -> (i32, i32) {
    %c0_i32 = arith.constant 0 : i32
    %c0_i32_0 = arith.constant 0 : i32
    %c0_i32_1 = arith.constant 0 : i32
    return %c0_i32, %c0_i32_0 : i32, i32
  }
  func.func @transform_21(%arg0: i32) -> (i32, i32) {
    %c0_i32 = arith.constant 0 : i32
    %c0_i32_0 = arith.constant 0 : i32
    %c0_i32_1 = arith.constant 0 : i32
    return %c0_i32, %c0_i32_0 : i32, i32
  }
  func.func @transform_22(%arg0: i32) -> (i32, i32, i32) {
    %c0_i32 = arith.constant 0 : i32
    %c0_i32_0 = arith.constant 0 : i32
    %c0_i32_1 = arith.constant 0 : i32
    %c0_i32_2 = arith.constant 0 : i32
    return %c0_i32, %c0_i32_0, %c0_i32_1 : i32, i32, i32
  }
  func.func @transform_23(%arg0: i32) -> (i32, i32, i32) {
    %c0_i32 = arith.constant 0 : i32
    %c0_i32_0 = arith.constant 0 : i32
    %c0_i32_1 = arith.constant 0 : i32
    %c0_i32_2 = arith.constant 0 : i32
    return %c0_i32, %c0_i32_0, %c0_i32_1 : i32, i32, i32
  }
}

</mosaic_0001>

<llo_original>
// kernel: tpu_custom_call.1
$region0: #{tpu_custom_call.1}
  #allocation0 [shape = 'u32[]', space=smem, size = 0x4, offset = 0x4, fixed_abs, tag = 'smem constant byte address 0x4 - core index']
  #allocation1 [shape = 'u32[144,128]{1,0:T(1,128)}', space=vmem, size = 0x12000, scoped, tag = 'internal scratch']
  #allocation2 [shape = 'f32[2,24,32]{2,1,0:T(8,128)}', space=vmem, size = 0x6000, scoped, tag = 'scratch operand']
  %s0 = inlined_call_operand.vmem [shape: f32[2,24,32], index: 0, kind: input, shape index: {}]
  %s1 = inlined_call_operand.hbm [shape: f32[24,24], index: 1, kind: input, shape index: {}]
  %s2 = inlined_call_operand.hbm [shape: f32[2,1,32], index: 2, kind: input, shape index: {}]
  %s3 = inlined_call_operand.hbm [shape: f32[2,1,32], index: 3, kind: input, shape index: {}]
  %s4 = inlined_call_operand.vmem [shape: bf16[2,32,32], index: 4, kind: input, shape index: {}]
  %s5 = inlined_call_operand.hbm [shape: f32[2,1,32], index: 5, kind: input, shape index: {}]
  %s6 = inlined_call_operand.vmem [shape: bf16[2,32,32], index: 6, kind: input, shape index: {}]
  %s7 = inlined_call_operand.hbm [shape: f32[2,1,32], index: 7, kind: input, shape index: {}]
  %s8 = inlined_call_operand.vmem [shape: bf16[2,32,32], index: 8, kind: input, shape index: {}]
  %s9 = inlined_call_operand.hbm [shape: f32[2,1,32], index: 9, kind: input, shape index: {}]
  %s10 = inlined_call_operand.vmem [shape: bf16[2,32,32], index: 10, kind: input, shape index: {}]
  %s11 = inlined_call_operand.hbm [shape: f32[2,1,32], index: 11, kind: input, shape index: {}]
  %s12 = inlined_call_operand.hbm [shape: f32[2,1,32], index: 12, kind: input, shape index: {}]
  %s13 = inlined_call_operand.hbm [shape: f32[2,1,32], index: 13, kind: input, shape index: {}]
  %s14 = inlined_call_operand.hbm [shape: bf16[2,32,128], index: 14, kind: input, shape index: {}]
  %s15 = inlined_call_operand.hbm [shape: f32[2,1,128], index: 15, kind: input, shape index: {}]
  %s16 = inlined_call_operand.vmem [shape: bf16[2,128,32], index: 16, kind: input, shape index: {}]
  %s17 = inlined_call_operand.hbm [shape: f32[2,1,32], index: 17, kind: input, shape index: {}]
  %s18 = inlined_call_operand.vmem [shape: f32[1,32], index: 18, kind: input, shape index: {}]
  %s19 = inlined_call_operand.vmem [shape: f32[1,32], index: 19, kind: input, shape index: {}]
  %s20 = inlined_call_operand.vmem [shape: bf16[32,128], index: 20, kind: input, shape index: {}]
  %s21 = inlined_call_operand.hbm [shape: bf16[32,128], index: 21, kind: input, shape index: {}]
  %s22 = inlined_call_operand.hbm [shape: f32[2,8,128], index: 22, kind: output, shape index: {0}]
  %s23 = inlined_call_operand.hbm [shape: f32[2,8,128], index: 23, kind: output, shape index: {1}]
  %24 = xla_tuple %s22, %s23
  %s25 = sld [smem:[#allocation0]]
  $region189: #{tpu_custom_call.1} parent=0
    _
  %s27 = ssub.s32 1, %s25
  %s28 = scalar_select 0, %s27, %s25
  $region1: #{tpu_custom_call.1} parent=0
    #allocation3 [shape = 'u8[12288]{0}', space=vmem, size = 0x3000, scoped, tag = 'input window, operand 1, single buffered']
    #allocation4 [shape = 's32[2]{0}', space=sflag, size = 0x8, scoped, tag = 'scoped memory for tpu_custom_call.1']
    #allocation5 [shape = 's32[2]{0}', space=sflag, size = 0x8, scoped, tag = 'scoped memory for tpu_custom_call.1']
    #allocation6 [shape = 'u8[1024]{0}', space=vmem, size = 0x400, scoped, tag = 'input window, operand 2']
    #allocation7 [shape = 's32[2]{0}', space=sflag, size = 0x8, scoped, tag = 'scoped memory for tpu_custom_call.1']
    #allocation8 [shape = 'u8[1024]{0}', space=vmem, size = 0x400, scoped, tag = 'input window, operand 3']
    #allocation9 [shape = 'u8[1024]{0}', space=vmem, size = 0x400, scoped, tag = 'input window, operand 5']
    #allocation10 [shape = 's32[2]{0}', space=sflag, size = 0x8, scoped, tag = 'scoped memory for tpu_custom_call.1']
    #allocation11 [shape = 'u8[1024]{0}', space=vmem, size = 0x400, scoped, tag = 'input window, operand 7']
    #allocation12 [shape = 'u8[1024]{0}', space=vmem, size = 0x400, scoped, tag = 'input window, operand 9']
    #allocation13 [shape = 's32[2]{0}', space=sflag, size = 0x8, scoped, tag = 'scoped memory for tpu_custom_call.1']
    #allocation14 [shape = 'u8[1024]{0}', space=vmem, size = 0x400, scoped, tag = 'input window, operand 11']
    #allocation15 [shape = 'u8[1024]{0}', space=vmem, size = 0x400, scoped, tag = 'input window, operand 12']
    #allocation16 [shape = 's32[2]{0}', space=sflag, size = 0x8, scoped, tag = 'scoped memory for tpu_custom_call.1']
    #allocation17 [shape = 'u8[1024]{0}', space=vmem, size = 0x400, scoped, tag = 'input window, operand 13']
    #allocation18 [shape = 'u8[16384]{0}', space=vmem, size = 0x4000, scoped, tag = 'input window, operand 14']
    #allocation19 [shape = 's32[2]{0}', space=sflag, size = 0x8, scoped, tag = 'scoped memory for tpu_custom_call.1']
    #allocation20 [shape = 'u8[1024]{0}', space=vmem, size = 0x400, scoped, tag = 'input window, operand 15']
    #allocation21 [shape = 'u8[1024]{0}', space=vmem, size = 0x400, scoped, tag = 'input window, operand 17']
    #allocation22 [shape = 's32[2]{0}', space=sflag, size = 0x8, scoped, tag = 'scoped memory for tpu_custom_call.1']
    #allocation23 [shape = 'u8[8192]{0}', space=vmem, size = 0x2000, scoped, tag = 'input window, operand 21, single buffered']
    #allocation24 [shape = 'u8[8192]{0}', space=vmem, size = 0x2000, scoped, tag = 'output window, operand 0, single buffered']
    #allocation25 [shape = 'u8[8192]{0}', space=vmem, size = 0x2000, scoped, tag = 'output window, operand 1, single buffered']
    #allocation26 [shape = 's32[1]{0}', space=sflag, size = 0x4, scoped, tag = 'scoped memory for tpu_custom_call.1']
    %29 = vsyncpa [#allocation4], 0
    %30 = vsyncpa [#allocation7], 0
    %s31 = scalar_lea.sflag [#allocation7], 1
    %32 = vsyncpa %s31, 0
    %33 = vsyncpa [#allocation10], 0
    %s34 = scalar_lea.sflag [#allocation10], 1
    %35 = vsyncpa %s34, 0
    %36 = vsyncpa [#allocation13], 0
    %s37 = scalar_lea.sflag [#allocation13], 1
    %38 = vsyncpa %s37, 0
    %39 = vsyncpa [#allocation16], 0
    %s40 = scalar_lea.sflag [#allocation16], 1
    %41 = vsyncpa %s40, 0
    %42 = vsyncpa [#allocation19], 0
    %s43 = scalar_lea.sflag [#allocation19], 1
    %44 = vsyncpa %s43, 0
    %45 = vsyncpa [#allocation22], 0
    %s46 = scalar_lea.sflag [#allocation22], 1
    %47 = vsyncpa %s46, 0
    %48 = vsyncpa [#allocation5], 0
    %49 = vsyncpa [#allocation26], 0
    loop: start=0, step=1, limit=4
    $region2: #{tpu_custom_call.1} parent=1 // loop_pre_header
      _
    $region3: #{tpu_custom_call.1} parent=1 // loop_header
      %s51 = sphi 0, %s55
      %p52 = scmp.ge.s32.totalorder %s51, 4
      %s59 = sphi 0, %s59
      %s61 = sphi 0, %s59
      %s62 = sphi 0, %s61
      %s76 = sphi 0, %s62
      %s80 = sphi 0, %s80
      %s82 = sphi 0, %s80
      %s83 = sphi 0, %s82
      %s97 = sphi 0, %s83
      %s103 = sphi 0, %s105
      %s106 = sphi 0, %s103
      %s107 = sphi 0, %s106
      %s123 = sphi 0, %s107
      %s129 = sphi 0, %s131
      %s132 = sphi 0, %s129
      %s133 = sphi 0, %s132
      %s149 = sphi 0, %s133
      %s155 = sphi 0, %s157
      %s158 = sphi 0, %s155
      %s159 = sphi 0, %s158
      %s175 = sphi 0, %s159
      %s181 = sphi 0, %s183
      %s184 = sphi 0, %s181
      %s185 = sphi 0, %s184
      %s201 = sphi 0, %s185
      %s207 = sphi 0, %s209
      %s210 = sphi 0, %s207
      %s211 = sphi 0, %s210
      %s227 = sphi 0, %s211
      %s233 = sphi 0, %s235
      %s236 = sphi 0, %s233
      %s237 = sphi 0, %s236
      %s253 = sphi 0, %s237
      %s259 = sphi 0, %s261
      %s262 = sphi 0, %s259
      %s263 = sphi 0, %s262
      %s279 = sphi 0, %s263
      %s285 = sphi 0, %s287
      %s288 = sphi 0, %s285
      %s289 = sphi 0, %s288
      %s305 = sphi 0, %s289
      %s311 = sphi 0, %s313
      %s314 = sphi 0, %s311
      %s315 = sphi 0, %s314
      %s331 = sphi 0, %s315
      %s337 = sphi 0, %s339
      %s340 = sphi 0, %s337
      %s341 = sphi 0, %s340
      %s357 = sphi 0, %s341
      %s363 = sphi 0, %s365
      %s366 = sphi 0, %s363
      %s367 = sphi 0, %s366
      %s383 = sphi 0, %s367
      %s389 = sphi 0, %s391
      %s392 = sphi 0, %s389
      %s393 = sphi 0, %s392
      %s409 = sphi 0, %s393
      %s415 = sphi 0, %s417
      %s418 = sphi 0, %s415
      %s419 = sphi 0, %s418
      %s435 = sphi 0, %s419
      %s441 = sphi 0, %s443
      %s444 = sphi 0, %s441
      %s445 = sphi 0, %s444
      %s461 = sphi 0, %s445
      %s467 = sphi 0, %s469
      %s470 = sphi 0, %s467
      %s471 = sphi 0, %s470
      %s487 = sphi 0, %s471
      %s493 = sphi 0, %s495
      %s496 = sphi 0, %s493
      %s497 = sphi 0, %s496
      %s513 = sphi 0, %s497
      %s517 = sphi 0, %s517
      %s519 = sphi 0, %s517
      %s520 = sphi 0, %s519
      %s534 = sphi 0, %s520
      %s538 = sphi 0, %s538
      %s540 = sphi 0, %s538
      %s541 = sphi 0, %s540
      %s555 = sphi 0, %s541
      %s559 = sphi 0, %s559
      %s561 = sphi 0, %s559
      %s562 = sphi 0, %s561
      %s576 = sphi 0, %s562
      %s580 = sphi 0, %s580
      %s582 = sphi 0, %s580
      %s583 = sphi 0, %s582
      %s597 = sphi 0, %s583
      %s601 = sphi 0, %s601
      %s603 = sphi 0, %s601
      %s604 = sphi 0, %s603
      %s618 = sphi 0, %s604
      %s622 = sphi 0, %s622
      %s624 = sphi 0, %s622
      %s625 = sphi 0, %s624
      %s639 = sphi 0, %s625
    $region4: #{tpu_custom_call.1} parent=1 // loop_header_branch
      %54 = sbr.rel (%p52) target = $region8
    $region5: #{tpu_custom_call.1} parent=1 // loop_body
      %s56 = ssub.s32 %s51, 1
      %s57 = ssub.s32 %s51, 2
      %s58 = sadd.s32 %s51, 1
      %s60 = sadd.s32 %s59, 1
      %p63 = scmp.eq.s32.totalorder %s51, 1
      %p64 = scmp.ne.s32.totalorder %s59, %s61
      %p65 = scmp.eq.s32.totalorder %s51, 0
      %p66 = por %p64, %p65
      %p67 = scmp.ne.s32.totalorder %s59, %s61
      %p68 = scmp.eq.s32.totalorder %s56, 1
      %p69 = por %p67, %p68
      %p70 = scmp.ne.s32.totalorder %s61, %s62
      %p71 = scmp.eq.s32.totalorder %s56, 0
      %p72 = por %p70, %p71
      %p73 = scmp.ne.s32.totalorder %s61, %s62
      %p74 = scmp.eq.s32.totalorder %s57, 1
      %p75 = por %p73, %p74
      %p77 = scmp.ne.s32.totalorder %s62, %s76
      %p78 = scmp.eq.s32.totalorder %s57, 0
      %p79 = por %p77, %p78
      %s81 = sadd.s32 %s80, 1
      %p84 = scmp.eq.s32.totalorder %s51, 1
      %p85 = scmp.ne.s32.totalorder %s80, %s82
      %p86 = scmp.eq.s32.totalorder %s51, 0
      %p87 = por %p85, %p86
      %p88 = scmp.ne.s32.totalorder %s80, %s82
      %p89 = scmp.eq.s32.totalorder %s56, 1
      %p90 = por %p88, %p89
      %p91 = scmp.ne.s32.totalorder %s82, %s83
      %p92 = scmp.eq.s32.totalorder %s56, 0
      %p93 = por %p91, %p92
      %p94 = scmp.ne.s32.totalorder %s82, %s83
      %p95 = scmp.eq.s32.totalorder %s57, 1
      %p96 = por %p94, %p95
      %p98 = scmp.ne.s32.totalorder %s83, %s97
      %p99 = scmp.eq.s32.totalorder %s57, 0
      %p100 = por %p98, %p99
      %s101 = ssub.s32 %s51, %s58
      %p102 = scmp.eq.s32.totalorder %s101, 0
      %s104 = sadd.s32 %s103, 1
      %s105 = scalar_select %p102, %s103, %s104
      %p108 = pneg %p102
      %p109 = scmp.eq.s32.totalorder %s51, 1
      %p110 = por %p108, %p109
      %p111 = scmp.ne.s32.totalorder %s103, %s106
      %p112 = scmp.eq.s32.totalorder %s51, 0
      %p113 = por %p111, %p112
      %p114 = scmp.ne.s32.totalorder %s103, %s106
      %p115 = scmp.eq.s32.totalorder %s56, 1
      %p116 = por %p114, %p115
      %p117 = scmp.ne.s32.totalorder %s106, %s107
      %p118 = scmp.eq.s32.totalorder %s56, 0
      %p119 = por %p117, %p118
      %p120 = scmp.ne.s32.totalorder %s106, %s107
      %p121 = scmp.eq.s32.totalorder %s57, 1
      %p122 = por %p120, %p121
      %p124 = scmp.ne.s32.totalorder %s107, %s123
      %p125 = scmp.eq.s32.totalorder %s57, 0
      %p126 = por %p124, %p125
      %s127 = ssub.s32 %s51, %s58
      %p128 = scmp.eq.s32.totalorder %s127, 0
      %s130 = sadd.s32 %s129, 1
      %s131 = scalar_select %p128, %s129, %s130
      %p134 = pneg %p128
      %p135 = scmp.eq.s32.totalorder %s51, 1
      %p136 = por %p134, %p135
      %p137 = scmp.ne.s32.totalorder %s129, %s132
      %p138 = scmp.eq.s32.totalorder %s51, 0
      %p139 = por %p137, %p138
      %p140 = scmp.ne.s32.totalorder %s129, %s132
      %p141 = scmp.eq.s32.totalorder %s56, 1
      %p142 = por %p140, %p141
      %p143 = scmp.ne.s32.totalorder %s132, %s133
      %p144 = scmp.eq.s32.totalorder %s56, 0
      %p145 = por %p143, %p144
      %p146 = scmp.ne.s32.totalorder %s132, %s133
      %p147 = scmp.eq.s32.totalorder %s57, 1
      %p148 = por %p146, %p147
      %p150 = scmp.ne.s32.totalorder %s133, %s149
      %p151 = scmp.eq.s32.totalorder %s57, 0
      %p152 = por %p150, %p151
      %s153 = ssub.s32 %s51, %s58
      %p154 = scmp.eq.s32.totalorder %s153, 0
      %s156 = sadd.s32 %s155, 1
      %s157 = scalar_select %p154, %s155, %s156
      %p160 = pneg %p154
      %p161 = scmp.eq.s32.totalorder %s51, 1
      %p162 = por %p160, %p161
      %p163 = scmp.ne.s32.totalorder %s155, %s158
      %p164 = scmp.eq.s32.totalorder %s51, 0
      %p165 = por %p163, %p164
      %p166 = scmp.ne.s32.totalorder %s155, %s158
      %p167 = scmp.eq.s32.totalorder %s56, 1
      %p168 = por %p166, %p167
      %p169 = scmp.ne.s32.totalorder %s158, %s159
      %p170 = scmp.eq.s32.totalorder %s56, 0
      %p171 = por %p169, %p170
      %p172 = scmp.ne.s32.totalorder %s158, %s159
      %p173 = scmp.eq.s32.totalorder %s57, 1
      %p174 = por %p172, %p173
      %p176 = scmp.ne.s32.totalorder %s159, %s175
      %p177 = scmp.eq.s32.totalorder %s57, 0
      %p178 = por %p176, %p177
      %s179 = ssub.s32 %s51, %s58
      %p180 = scmp.eq.s32.totalorder %s179, 0
      %s182 = sadd.s32 %s181, 1
      %s183 = scalar_select %p180, %s181, %s182
      %p186 = pneg %p180
      %p187 = scmp.eq.s32.totalorder %s51, 1
      %p188 = por %p186, %p187
      %p189 = scmp.ne.s32.totalorder %s181, %s184
      %p190 = scmp.eq.s32.totalorder %s51, 0
      %p191 = por %p189, %p190
      %p192 = scmp.ne.s32.totalorder %s181, %s184
      %p193 = scmp.eq.s32.totalorder %s56, 1
      %p194 = por %p192, %p193
      %p195 = scmp.ne.s32.totalorder %s184, %s185
      %p196 = scmp.eq.s32.totalorder %s56, 0
      %p197 = por %p195, %p196
      %p198 = scmp.ne.s32.totalorder %s184, %s185
      %p199 = scmp.eq.s32.totalorder %s57, 1
      %p200 = por %p198, %p199
      %p202 = scmp.ne.s32.totalorder %s185, %s201
      %p203 = scmp.eq.s32.totalorder %s57, 0
      %p204 = por %p202, %p203
      %s205 = ssub.s32 %s51, %s58
      %p206 = scmp.eq.s32.totalorder %s205, 0
      %s208 = sadd.s32 %s207, 1
      %s209 = scalar_select %p206, %s207, %s208
      %p212 = pneg %p206
      %p213 = scmp.eq.s32.totalorder %s51, 1
      %p214 = por %p212, %p213
      %p215 = scmp.ne.s32.totalorder %s207, %s210
      %p216 = scmp.eq.s32.totalorder %s51, 0
      %p217 = por %p215, %p216
      %p218 = scmp.ne.s32.totalorder %s207, %s210
      %p219 = scmp.eq.s32.totalorder %s56, 1
      %p220 = por %p218, %p219
      %p221 = scmp.ne.s32.totalorder %s210, %s211
      %p222 = scmp.eq.s32.totalorder %s56, 0
      %p223 = por %p221, %p222
      %p224 = scmp.ne.s32.totalorder %s210, %s211
      %p225 = scmp.eq.s32.totalorder %s57, 1
      %p226 = por %p224, %p225
      %p228 = scmp.ne.s32.totalorder %s211, %s227
      %p229 = scmp.eq.s32.totalorder %s57, 0
      %p230 = por %p228, %p229
      %s231 = ssub.s32 %s51, %s58
      %p232 = scmp.eq.s32.totalorder %s231, 0
      %s234 = sadd.s32 %s233, 1
      %s235 = scalar_select %p232, %s233, %s234
      %p238 = pneg %p232
      %p239 = scmp.eq.s32.totalorder %s51, 1
      %p240 = por %p238, %p239
      %p241 = scmp.ne.s32.totalorder %s233, %s236
      %p242 = scmp.eq.s32.totalorder %s51, 0
      %p243 = por %p241, %p242
      %p244 = scmp.ne.s32.totalorder %s233, %s236
      %p245 = scmp.eq.s32.totalorder %s56, 1
      %p246 = por %p244, %p245
      %p247 = scmp.ne.s32.totalorder %s236, %s237
      %p248 = scmp.eq.s32.totalorder %s56, 0
      %p249 = por %p247, %p248
      %p250 = scmp.ne.s32.totalorder %s236, %s237
      %p251 = scmp.eq.s32.totalorder %s57, 1
      %p252 = por %p250, %p251
      %p254 = scmp.ne.s32.totalorder %s237, %s253
      %p255 = scmp.eq.s32.totalorder %s57, 0
      %p256 = por %p254, %p255
      %s257 = ssub.s32 %s51, %s58
      %p258 = scmp.eq.s32.totalorder %s257, 0
      %s260 = sadd.s32 %s259, 1
      %s261 = scalar_select %p258, %s259, %s260
      %p264 = pneg %p258
      %p265 = scmp.eq.s32.totalorder %s51, 1
      %p266 = por %p264, %p265
      %p267 = scmp.ne.s32.totalorder %s259, %s262
      %p268 = scmp.eq.s32.totalorder %s51, 0
      %p269 = por %p267, %p268
      %p270 = scmp.ne.s32.totalorder %s259, %s262
      %p271 = scmp.eq.s32.totalorder %s56, 1
      %p272 = por %p270, %p271
      %p273 = scmp.ne.s32.totalorder %s262, %s263
      %p274 = scmp.eq.s32.totalorder %s56, 0
      %p275 = por %p273, %p274
      %p276 = scmp.ne.s32.totalorder %s262, %s263
      %p277 = scmp.eq.s32.totalorder %s57, 1
      %p278 = por %p276, %p277
      %p280 = scmp.ne.s32.totalorder %s263, %s279
      %p281 = scmp.eq.s32.totalorder %s57, 0
      %p282 = por %p280, %p281
      %s283 = ssub.s32 %s51, %s58
      %p284 = scmp.eq.s32.totalorder %s283, 0
      %s286 = sadd.s32 %s285, 1
      %s287 = scalar_select %p284, %s285, %s286
      %p290 = pneg %p284
      %p291 = scmp.eq.s32.totalorder %s51, 1
      %p292 = por %p290, %p291
      %p293 = scmp.ne.s32.totalorder %s285, %s288
      %p294 = scmp.eq.s32.totalorder %s51, 0
      %p295 = por %p293, %p294
      %p296 = scmp.ne.s32.totalorder %s285, %s288
      %p297 = scmp.eq.s32.totalorder %s56, 1
      %p298 = por %p296, %p297
      %p299 = scmp.ne.s32.totalorder %s288, %s289
      %p300 = scmp.eq.s32.totalorder %s56, 0
      %p301 = por %p299, %p300
      %p302 = scmp.ne.s32.totalorder %s288, %s289
      %p303 = scmp.eq.s32.totalorder %s57, 1
      %p304 = por %p302, %p303
      %p306 = scmp.ne.s32.totalorder %s289, %s305
      %p307 = scmp.eq.s32.totalorder %s57, 0
      %p308 = por %p306, %p307
      %s309 = ssub.s32 %s51, %s58
      %p310 = scmp.eq.s32.totalorder %s309, 0
      %s312 = sadd.s32 %s311, 1
      %s313 = scalar_select %p310, %s311, %s312
      %p316 = pneg %p310
      %p317 = scmp.eq.s32.totalorder %s51, 1
      %p318 = por %p316, %p317
      %p319 = scmp.ne.s32.totalorder %s311, %s314
      %p320 = scmp.eq.s32.totalorder %s51, 0
      %p321 = por %p319, %p320
      %p322 = scmp.ne.s32.totalorder %s311, %s314
      %p323 = scmp.eq.s32.totalorder %s56, 1
      %p324 = por %p322, %p323
      %p325 = scmp.ne.s32.totalorder %s314, %s315
      %p326 = scmp.eq.s32.totalorder %s56, 0
      %p327 = por %p325, %p326
      %p328 = scmp.ne.s32.totalorder %s314, %s315
      %p329 = scmp.eq.s32.totalorder %s57, 1
      %p330 = por %p328, %p329
      %p332 = scmp.ne.s32.totalorder %s315, %s331
      %p333 = scmp.eq.s32.totalorder %s57, 0
      %p334 = por %p332, %p333
      %s335 = ssub.s32 %s51, %s58
      %p336 = scmp.eq.s32.totalorder %s335, 0
      %s338 = sadd.s32 %s337, 1
      %s339 = scalar_select %p336, %s337, %s338
      %p342 = pneg %p336
      %p343 = scmp.eq.s32.totalorder %s51, 1
      %p344 = por %p342, %p343
      %p345 = scmp.ne.s32.totalorder %s337, %s340
      %p346 = scmp.eq.s32.totalorder %s51, 0
      %p347 = por %p345, %p346
      %p348 = scmp.ne.s32.totalorder %s337, %s340
      %p349 = scmp.eq.s32.totalorder %s56, 1
      %p350 = por %p348, %p349
      %p351 = scmp.ne.s32.totalorder %s340, %s341
      %p352 = scmp.eq.s32.totalorder %s56, 0
      %p353 = por %p351, %p352
      %p354 = scmp.ne.s32.totalorder %s340, %s341
      %p355 = scmp.eq.s32.totalorder %s57, 1
      %p356 = por %p354, %p355
      %p358 = scmp.ne.s32.totalorder %s341, %s357
      %p359 = scmp.eq.s32.totalorder %s57, 0
      %p360 = por %p358, %p359
      %s361 = ssub.s32 %s51, %s58
      %p362 = scmp.eq.s32.totalorder %s361, 0
      %s364 = sadd.s32 %s363, 1
      %s365 = scalar_select %p362, %s363, %s364
      %p368 = pneg %p362
      %p369 = scmp.eq.s32.totalorder %s51, 1
      %p370 = por %p368, %p369
      %p371 = scmp.ne.s32.totalorder %s363, %s366
      %p372 = scmp.eq.s32.totalorder %s51, 0
      %p373 = por %p371, %p372
      %p374 = scmp.ne.s32.totalorder %s363, %s366
      %p375 = scmp.eq.s32.totalorder %s56, 1
      %p376 = por %p374, %p375
      %p377 = scmp.ne.s32.totalorder %s366, %s367
      %p378 = scmp.eq.s32.totalorder %s56, 0
      %p379 = por %p377, %p378
      %p380 = scmp.ne.s32.totalorder %s366, %s367
      %p381 = scmp.eq.s32.totalorder %s57, 1
      %p382 = por %p380, %p381
      %p384 = scmp.ne.s32.totalorder %s367, %s383
      %p385 = scmp.eq.s32.totalorder %s57, 0
      %p386 = por %p384, %p385
      %s387 = ssub.s32 %s51, %s58
      %p388 = scmp.eq.s32.totalorder %s387, 0
      %s390 = sadd.s32 %s389, 1
      %s391 = scalar_select %p388, %s389, %s390
      %p394 = pneg %p388
      %p395 = scmp.eq.s32.totalorder %s51, 1
      %p396 = por %p394, %p395
      %p397 = scmp.ne.s32.totalorder %s389, %s392
      %p398 = scmp.eq.s32.totalorder %s51, 0
      %p399 = por %p397, %p398
      %p400 = scmp.ne.s32.totalorder %s389, %s392
      %p401 = scmp.eq.s32.totalorder %s56, 1
      %p402 = por %p400, %p401
      %p403 = scmp.ne.s32.totalorder %s392, %s393
      %p404 = scmp.eq.s32.totalorder %s56, 0
      %p405 = por %p403, %p404
      %p406 = scmp.ne.s32.totalorder %s392, %s393
      %p407 = scmp.eq.s32.totalorder %s57, 1
      %p408 = por %p406, %p407
      %p410 = scmp.ne.s32.totalorder %s393, %s409
      %p411 = scmp.eq.s32.totalorder %s57, 0
      %p412 = por %p410, %p411
      %s413 = ssub.s32 %s51, %s58
      %p414 = scmp.eq.s32.totalorder %s413, 0
      %s416 = sadd.s32 %s415, 1
      %s417 = scalar_select %p414, %s415, %s416
      %p420 = pneg %p414
      %p421 = scmp.eq.s32.totalorder %s51, 1
      %p422 = por %p420, %p421
      %p423 = scmp.ne.s32.totalorder %s415, %s418
      %p424 = scmp.eq.s32.totalorder %s51, 0
      %p425 = por %p423, %p424
      %p426 = scmp.ne.s32.totalorder %s415, %s418
      %p427 = scmp.eq.s32.totalorder %s56, 1
      %p428 = por %p426, %p427
      %p429 = scmp.ne.s32.totalorder %s418, %s419
      %p430 = scmp.eq.s32.totalorder %s56, 0
      %p431 = por %p429, %p430
      %p432 = scmp.ne.s32.totalorder %s418, %s419
      %p433 = scmp.eq.s32.totalorder %s57, 1
      %p434 = por %p432, %p433
      %p436 = scmp.ne.s32.totalorder %s419, %s435
      %p437 = scmp.eq.s32.totalorder %s57, 0
      %p438 = por %p436, %p437
      %s439 = ssub.s32 %s51, %s58
      %p440 = scmp.eq.s32.totalorder %s439, 0
      %s442 = sadd.s32 %s441, 1
      %s443 = scalar_select %p440, %s441, %s442
      %p446 = pneg %p440
      %p447 = scmp.eq.s32.totalorder %s51, 1
      %p448 = por %p446, %p447
      %p449 = scmp.ne.s32.totalorder %s441, %s444
      %p450 = scmp.eq.s32.totalorder %s51, 0
      %p451 = por %p449, %p450
      %p452 = scmp.ne.s32.totalorder %s441, %s444
      %p453 = scmp.eq.s32.totalorder %s56, 1
      %p454 = por %p452, %p453
      %p455 = scmp.ne.s32.totalorder %s444, %s445
      %p456 = scmp.eq.s32.totalorder %s56, 0
      %p457 = por %p455, %p456
      %p458 = scmp.ne.s32.totalorder %s444, %s445
      %p459 = scmp.eq.s32.totalorder %s57, 1
      %p460 = por %p458, %p459
      %p462 = scmp.ne.s32.totalorder %s445, %s461
      %p463 = scmp.eq.s32.totalorder %s57, 0
      %p464 = por %p462, %p463
      %s465 = ssub.s32 %s51, %s58
      %p466 = scmp.eq.s32.totalorder %s465, 0
      %s468 = sadd.s32 %s467, 1
      %s469 = scalar_select %p466, %s467, %s468
      %p472 = pneg %p466
      %p473 = scmp.eq.s32.totalorder %s51, 1
      %p474 = por %p472, %p473
      %p475 = scmp.ne.s32.totalorder %s467, %s470
      %p476 = scmp.eq.s32.totalorder %s51, 0
      %p477 = por %p475, %p476
      %p478 = scmp.ne.s32.totalorder %s467, %s470
      %p479 = scmp.eq.s32.totalorder %s56, 1
      %p480 = por %p478, %p479
      %p481 = scmp.ne.s32.totalorder %s470, %s471
      %p482 = scmp.eq.s32.totalorder %s56, 0
      %p483 = por %p481, %p482
      %p484 = scmp.ne.s32.totalorder %s470, %s471
      %p485 = scmp.eq.s32.totalorder %s57, 1
      %p486 = por %p484, %p485
      %p488 = scmp.ne.s32.totalorder %s471, %s487
      %p489 = scmp.eq.s32.totalorder %s57, 0
      %p490 = por %p488, %p489
      %s491 = ssub.s32 %s51, %s58
      %p492 = scmp.eq.s32.totalorder %s491, 0
      %s494 = sadd.s32 %s493, 1
      %s495 = scalar_select %p492, %s493, %s494
      %p498 = pneg %p492
      %p499 = scmp.eq.s32.totalorder %s51, 1
      %p500 = por %p498, %p499
      %p501 = scmp.ne.s32.totalorder %s493, %s496
      %p502 = scmp.eq.s32.totalorder %s51, 0
      %p503 = por %p501, %p502
      %p504 = scmp.ne.s32.totalorder %s493, %s496
      %p505 = scmp.eq.s32.totalorder %s56, 1
      %p506 = por %p504, %p505
      %p507 = scmp.ne.s32.totalorder %s496, %s497
      %p508 = scmp.eq.s32.totalorder %s56, 0
      %p509 = por %p507, %p508
      %p510 = scmp.ne.s32.totalorder %s496, %s497
      %p511 = scmp.eq.s32.totalorder %s57, 1
      %p512 = por %p510, %p511
      %p514 = scmp.ne.s32.totalorder %s497, %s513
      %p515 = scmp.eq.s32.totalorder %s57, 0
      %p516 = por %p514, %p515
      %s518 = sadd.s32 %s517, 1
      %p521 = scmp.eq.s32.totalorder %s51, 1
      %p522 = scmp.ne.s32.totalorder %s517, %s519
      %p523 = scmp.eq.s32.totalorder %s51, 0
      %p524 = por %p522, %p523
      %p525 = scmp.ne.s32.totalorder %s517, %s519
      %p526 = scmp.eq.s32.totalorder %s56, 1
      %p527 = por %p525, %p526
      %p528 = scmp.ne.s32.totalorder %s519, %s520
      %p529 = scmp.eq.s32.totalorder %s56, 0
      %p530 = por %p528, %p529
      %p531 = scmp.ne.s32.totalorder %s519, %s520
      %p532 = scmp.eq.s32.totalorder %s57, 1
      %p533 = por %p531, %p532
      %p535 = scmp.ne.s32.totalorder %s520, %s534
      %p536 = scmp.eq.s32.totalorder %s57, 0
      %p537 = por %p535, %p536
      %s539 = sadd.s32 %s538, 1
      %p542 = scmp.eq.s32.totalorder %s51, 1
      %p543 = scmp.ne.s32.totalorder %s538, %s540
      %p544 = scmp.eq.s32.totalorder %s51, 0
      %p545 = por %p543, %p544
      %p546 = scmp.ne.s32.totalorder %s538, %s540
      %p547 = scmp.eq.s32.totalorder %s56, 1
      %p548 = por %p546, %p547
      %p549 = scmp.ne.s32.totalorder %s540, %s541
      %p550 = scmp.eq.s32.totalorder %s56, 0
      %p551 = por %p549, %p550
      %p552 = scmp.ne.s32.totalorder %s540, %s541
      %p553 = scmp.eq.s32.totalorder %s57, 1
      %p554 = por %p552, %p553
      %p556 = scmp.ne.s32.totalorder %s541, %s555
      %p557 = scmp.eq.s32.totalorder %s57, 0
      %p558 = por %p556, %p557
      %s560 = sadd.s32 %s559, 1
      %p563 = scmp.eq.s32.totalorder %s51, 1
      %p564 = scmp.ne.s32.totalorder %s559, %s561
      %p565 = scmp.eq.s32.totalorder %s51, 0
      %p566 = por %p564, %p565
      %p567 = scmp.ne.s32.totalorder %s559, %s561
      %p568 = scmp.eq.s32.totalorder %s56, 1
      %p569 = por %p567, %p568
      %p570 = scmp.ne.s32.totalorder %s561, %s562
      %p571 = scmp.eq.s32.totalorder %s56, 0
      %p572 = por %p570, %p571
      %p573 = scmp.ne.s32.totalorder %s561, %s562
      %p574 = scmp.eq.s32.totalorder %s57, 1
      %p575 = por %p573, %p574
      %p577 = scmp.ne.s32.totalorder %s562, %s576
      %p578 = scmp.eq.s32.totalorder %s57, 0
      %p579 = por %p577, %p578
      %s581 = sadd.s32 %s580, 1
      %p584 = scmp.eq.s32.totalorder %s51, 1
      %p585 = scmp.ne.s32.totalorder %s580, %s582
      %p586 = scmp.eq.s32.totalorder %s51, 0
      %p587 = por %p585, %p586
      %p588 = scmp.ne.s32.totalorder %s580, %s582
      %p589 = scmp.eq.s32.totalorder %s56, 1
      %p590 = por %p588, %p589
      %p591 = scmp.ne.s32.totalorder %s582, %s583
      %p592 = scmp.eq.s32.totalorder %s56, 0
      %p593 = por %p591, %p592
      %p594 = scmp.ne.s32.totalorder %s582, %s583
      %p595 = scmp.eq.s32.totalorder %s57, 1
      %p596 = por %p594, %p595
      %p598 = scmp.ne.s32.totalorder %s583, %s597
      %p599 = scmp.eq.s32.totalorder %s57, 0
      %p600 = por %p598, %p599
      %s602 = sadd.s32 %s601, 1
      %p605 = scmp.eq.s32.totalorder %s51, 1
      %p606 = scmp.ne.s32.totalorder %s601, %s603
      %p607 = scmp.eq.s32.totalorder %s51, 0
      %p608 = por %p606, %p607
      %p609 = scmp.ne.s32.totalorder %s601, %s603
      %p610 = scmp.eq.s32.totalorder %s56, 1
      %p611 = por %p609, %p610
      %p612 = scmp.ne.s32.totalorder %s603, %s604
      %p613 = scmp.eq.s32.totalorder %s56, 0
      %p614 = por %p612, %p613
      %p615 = scmp.ne.s32.totalorder %s603, %s604
      %p616 = scmp.eq.s32.totalorder %s57, 1
      %p617 = por %p615, %p616
      %p619 = scmp.ne.s32.totalorder %s604, %s618
      %p620 = scmp.eq.s32.totalorder %s57, 0
      %p621 = por %p619, %p620
      %s623 = sadd.s32 %s622, 1
      %p626 = scmp.eq.s32.totalorder %s51, 1
      %p627 = scmp.ne.s32.totalorder %s622, %s624
      %p628 = scmp.eq.s32.totalorder %s51, 0
      %p629 = por %p627, %p628
      %p630 = scmp.ne.s32.totalorder %s622, %s624
      %p631 = scmp.eq.s32.totalorder %s56, 1
      %p632 = por %p630, %p631
      %p633 = scmp.ne.s32.totalorder %s624, %s625
      %p634 = scmp.eq.s32.totalorder %s56, 0
      %p635 = por %p633, %p634
      %p636 = scmp.ne.s32.totalorder %s624, %s625
      %p637 = scmp.eq.s32.totalorder %s57, 1
      %p638 = por %p636, %p637
      %p640 = scmp.ne.s32.totalorder %s625, %s639
      %p641 = scmp.eq.s32.totalorder %s57, 0
      %p642 = por %p640, %p641
      %p643 = scmp.le.s32.totalorder 1, %s51
      %p644 = scmp.lt.s32.totalorder %s51, 3
      %p645 = pnand %p643, %p644
      %p646 = pneg %p645
      // Predicated region
      $region9: #{tpu_custom_call.1} parent=5 // pred_check
        _
      $region10: #{tpu_custom_call.1} parent=5 // pred_check_branch
        %648 = sbr.rel (%p645) target = $region12
      $region11: #{tpu_custom_call.1} parent=5 // pred_region
        %s649 = ssub.s32 %s51, 1
        // Predicated region
        $region13: #{tpu_custom_call.1} parent=11 // pred_check
          %p650 = pneg %p72
        $region14: #{tpu_custom_call.1} parent=11 // pred_check_branch
          %652 = sbr.rel (%p650) target = $region16
        $region15: #{tpu_custom_call.1} parent=11 // pred_region
          _
        $region16: #{tpu_custom_call.1} parent=11 // pred_fallthru
          _
        // Predicated region
        $region17: #{tpu_custom_call.1} parent=11 // pred_check
          %p653 = pneg %p93
        $region18: #{tpu_custom_call.1} parent=11 // pred_check_branch
          %655 = sbr.rel (%p653) target = $region20
        $region19: #{tpu_custom_call.1} parent=11 // pred_region
          %s657 = ssub.s32 384, 384
          %658 = vsyncadd [#allocation4], %s657
          %s659 = sshll.u32 [#allocation3], 4
          %s660 = int_to_ptr.vmem [resolvable:$true] %s659
          %665 = dma.hbm_to_vmem [thread:$0]  %s1, 384, %s660, [#allocation4], 128, 128, 8
        $region20: #{tpu_custom_call.1} parent=11 // pred_fallthru
          _
        // Predicated region
        $region21: #{tpu_custom_call.1} parent=11 // pred_check
          %p666 = pneg %p530
        $region22: #{tpu_custom_call.1} parent=11 // pred_check_branch
          %668 = sbr.rel (%p666) target = $region24
        $region23: #{tpu_custom_call.1} parent=11 // pred_region
          _
        $region24: #{tpu_custom_call.1} parent=11 // pred_fallthru
          _
        // Predicated region
        $region25: #{tpu_custom_call.1} parent=11 // pred_check
          %p669 = pneg %p551
        $region26: #{tpu_custom_call.1} parent=11 // pred_check_branch
          %671 = sbr.rel (%p669) target = $region28
        $region27: #{tpu_custom_call.1} parent=11 // pred_region
          _
        $region28: #{tpu_custom_call.1} parent=11 // pred_fallthru
          _
        // Predicated region
        $region29: #{tpu_custom_call.1} parent=11 // pred_check
          %p672 = pneg %p572
        $region30: #{tpu_custom_call.1} parent=11 // pred_check_branch
          %674 = sbr.rel (%p672) target = $region32
        $region31: #{tpu_custom_call.1} parent=11 // pred_region
          _
        $region32: #{tpu_custom_call.1} parent=11 // pred_fallthru
          _
        // Predicated region
        $region33: #{tpu_custom_call.1} parent=11 // pred_check
          %p675 = pneg %p593
        $region34: #{tpu_custom_call.1} parent=11 // pred_check_branch
          %677 = sbr.rel (%p675) target = $region36
        $region35: #{tpu_custom_call.1} parent=11 // pred_region
          %s679 = ssub.s32 256, 256
          %680 = vsyncadd [#allocation22], %s679
          %s681 = sshll.u32 [#allocation23], 4
          %s682 = int_to_ptr.vmem [resolvable:$true] %s681
          %687 = dma.hbm_to_vmem [thread:$0]  %s21, 256, %s682, [#allocation22], 64, 64, 4
        $region36: #{tpu_custom_call.1} parent=11 // pred_fallthru
          _
      $region12: #{tpu_custom_call.1} parent=5 // pred_fallthru
        _
      %p688 = scmp.lt.s32.totalorder %s51, 2
      // Predicated region
      $region37: #{tpu_custom_call.1} parent=5 // pred_check
        %p689 = pneg %p688
      $region38: #{tpu_custom_call.1} parent=5 // pred_check_branch
        %691 = sbr.rel (%p689) target = $region40
      $region39: #{tpu_custom_call.1} parent=5 // pred_region
        // Predicated region
        $region41: #{tpu_custom_call.1} parent=39 // pred_check
          %p692 = pneg %p113
        $region42: #{tpu_custom_call.1} parent=39 // pred_check_branch
          %694 = sbr.rel (%p692) target = $region44
        $region43: #{tpu_custom_call.1} parent=39 // pred_region
          %s695 = sand.u32 %s51, 1
          %s696 = scalar_lea.sflag [#allocation7], %s695
          %s697 = sand.u32 %s103, 1
          %s698 = scalar_lea.vmem [#allocation6], %s697
          %s700 = ssub.s32 16, 16
          %701 = vsyncadd %s696, %s700
          %s702 = smul.addr %s51, 16
          %s703 = scalar_lea.hbm %s2, %s702
          %s705 = sshll.u32 %s698, 4
          %s706 = int_to_ptr.vmem [resolvable:$true] %s705
          %708 = dma.hbm_to_vmem [thread:$0]  %s703, 16, %s706, %s696
        $region44: #{tpu_custom_call.1} parent=39 // pred_fallthru
          _
        // Predicated region
        $region45: #{tpu_custom_call.1} parent=39 // pred_check
          %p709 = pneg %p139
        $region46: #{tpu_custom_call.1} parent=39 // pred_check_branch
          %711 = sbr.rel (%p709) target = $region48
        $region47: #{tpu_custom_call.1} parent=39 // pred_region
          %s712 = sand.u32 %s51, 1
          %s713 = scalar_lea.sflag [#allocation7], %s712
          %s714 = sand.u32 %s129, 1
          %s715 = scalar_lea.vmem [#allocation8], %s714
          %s717 = ssub.s32 16, 16
          %718 = vsyncadd %s713, %s717
          %s719 = smul.addr %s51, 16
          %s720 = scalar_lea.hbm %s3, %s719
          %s722 = sshll.u32 %s715, 4
          %s723 = int_to_ptr.vmem [resolvable:$true] %s722
          %725 = dma.hbm_to_vmem [thread:$0]  %s720, 16, %s723, %s713
        $region48: #{tpu_custom_call.1} parent=39 // pred_fallthru
          _
        // Predicated region
        $region49: #{tpu_custom_call.1} parent=39 // pred_check
          %p726 = pneg %p165
        $region50: #{tpu_custom_call.1} parent=39 // pred_check_branch
          %728 = sbr.rel (%p726) target = $region52
        $region51: #{tpu_custom_call.1} parent=39 // pred_region
          %p729 = scmp.lt.s32.totalorder %s51, 1
          %s730 = scalar_select %p729, %s51, 1
          %s731 = smul.addr %s730, 4
          %s732 = smul.addr %s731, 4
          %s733 = scalar_lea.vmem %s4, %s732
        $region52: #{tpu_custom_call.1} parent=39 // pred_fallthru
          _
        // Predicated region
        $region53: #{tpu_custom_call.1} parent=39 // pred_check
          %p734 = pneg %p191
        $region54: #{tpu_custom_call.1} parent=39 // pred_check_branch
          %736 = sbr.rel (%p734) target = $region56
        $region55: #{tpu_custom_call.1} parent=39 // pred_region
          %s737 = sand.u32 %s51, 1
          %s738 = scalar_lea.sflag [#allocation10], %s737
          %s739 = sand.u32 %s181, 1
          %s740 = scalar_lea.vmem [#allocation9], %s739
          %s742 = ssub.s32 16, 16
          %743 = vsyncadd %s738, %s742
          %s744 = smul.addr %s51, 16
          %s745 = scalar_lea.hbm %s5, %s744
          %s747 = sshll.u32 %s740, 4
          %s748 = int_to_ptr.vmem [resolvable:$true] %s747
          %750 = dma.hbm_to_vmem [thread:$0]  %s745, 16, %s748, %s738
        $region56: #{tpu_custom_call.1} parent=39 // pred_fallthru
          _
        // Predicated region
        $region57: #{tpu_custom_call.1} parent=39 // pred_check
          %p751 = pneg %p217
        $region58: #{tpu_custom_call.1} parent=39 // pred_check_branch
          %753 = sbr.rel (%p751) target = $region60
        $region59: #{tpu_custom_call.1} parent=39 // pred_region
          %p754 = scmp.lt.s32.totalorder %s51, 1
          %s755 = scalar_select %p754, %s51, 1
          %s756 = smul.addr %s755, 4
          %s757 = smul.addr %s756, 4
          %s758 = scalar_lea.vmem %s6, %s757
        $region60: #{tpu_custom_call.1} parent=39 // pred_fallthru
          _
        // Predicated region
        $region61: #{tpu_custom_call.1} parent=39 // pred_check
          %p759 = pneg %p243
        $region62: #{tpu_custom_call.1} parent=39 // pred_check_branch
          %761 = sbr.rel (%p759) target = $region64
        $region63: #{tpu_custom_call.1} parent=39 // pred_region
          %s762 = sand.u32 %s51, 1
          %s763 = scalar_lea.sflag [#allocation10], %s762
          %s764 = sand.u32 %s233, 1
          %s765 = scalar_lea.vmem [#allocation11], %s764
          %s767 = ssub.s32 16, 16
          %768 = vsyncadd %s763, %s767
          %s769 = smul.addr %s51, 16
          %s770 = scalar_lea.hbm %s7, %s769
          %s772 = sshll.u32 %s765, 4
          %s773 = int_to_ptr.vmem [resolvable:$true] %s772
          %775 = dma.hbm_to_vmem [thread:$0]  %s770, 16, %s773, %s763
        $region64: #{tpu_custom_call.1} parent=39 // pred_fallthru
          _
        // Predicated region
        $region65: #{tpu_custom_call.1} parent=39 // pred_check
          %p776 = pneg %p269
        $region66: #{tpu_custom_call.1} parent=39 // pred_check_branch
          %778 = sbr.rel (%p776) target = $region68
        $region67: #{tpu_custom_call.1} parent=39 // pred_region
          %p779 = scmp.lt.s32.totalorder %s51, 1
          %s780 = scalar_select %p779, %s51, 1
          %s781 = smul.addr %s780, 4
          %s782 = smul.addr %s781, 4
          %s783 = scalar_lea.vmem %s8, %s782
        $region68: #{tpu_custom_call.1} parent=39 // pred_fallthru
          _
        // Predicated region
        $region69: #{tpu_custom_call.1} parent=39 // pred_check
          %p784 = pneg %p295
        $region70: #{tpu_custom_call.1} parent=39 // pred_check_branch
          %786 = sbr.rel (%p784) target = $region72
        $region71: #{tpu_custom_call.1} parent=39 // pred_region
          %s787 = sand.u32 %s51, 1
          %s788 = scalar_lea.sflag [#allocation13], %s787
          %s789 = sand.u32 %s285, 1
          %s790 = scalar_lea.vmem [#allocation12], %s789
          %s792 = ssub.s32 16, 16
          %793 = vsyncadd %s788, %s792
          %s794 = smul.addr %s51, 16
          %s795 = scalar_lea.hbm %s9, %s794
          %s797 = sshll.u32 %s790, 4
          %s798 = int_to_ptr.vmem [resolvable:$true] %s797
          %800 = dma.hbm_to_vmem [thread:$0]  %s795, 16, %s798, %s788
        $region72: #{tpu_custom_call.1} parent=39 // pred_fallthru
          _
        // Predicated region
        $region73: #{tpu_custom_call.1} parent=39 // pred_check
          %p801 = pneg %p321
        $region74: #{tpu_custom_call.1} parent=39 // pred_check_branch
          %803 = sbr.rel (%p801) target = $region76
        $region75: #{tpu_custom_call.1} parent=39 // pred_region
          %p804 = scmp.lt.s32.totalorder %s51, 1
          %s805 = scalar_select %p804, %s51, 1
          %s806 = smul.addr %s805, 4
          %s807 = smul.addr %s806, 4
          %s808 = scalar_lea.vmem %s10, %s807
        $region76: #{tpu_custom_call.1} parent=39 // pred_fallthru
          _
        // Predicated region
        $region77: #{tpu_custom_call.1} parent=39 // pred_check
          %p809 = pneg %p347
        $region78: #{tpu_custom_call.1} parent=39 // pred_check_branch
          %811 = sbr.rel (%p809) target = $region80
        $region79: #{tpu_custom_call.1} parent=39 // pred_region
          %s812 = sand.u32 %s51, 1
          %s813 = scalar_lea.sflag [#allocation13], %s812
          %s814 = sand.u32 %s337, 1
          %s815 = scalar_lea.vmem [#allocation14], %s814
          %s817 = ssub.s32 16, 16
          %818 = vsyncadd %s813, %s817
          %s819 = smul.addr %s51, 16
          %s820 = scalar_lea.hbm %s11, %s819
          %s822 = sshll.u32 %s815, 4
          %s823 = int_to_ptr.vmem [resolvable:$true] %s822
          %825 = dma.hbm_to_vmem [thread:$0]  %s820, 16, %s823, %s813
        $region80: #{tpu_custom_call.1} parent=39 // pred_fallthru
          _
        // Predicated region
        $region81: #{tpu_custom_call.1} parent=39 // pred_check
          %p826 = pneg %p373
        $region82: #{tpu_custom_call.1} parent=39 // pred_check_branch
          %828 = sbr.rel (%p826) target = $region84
        $region83: #{tpu_custom_call.1} parent=39 // pred_region
          %s829 = sand.u32 %s51, 1
          %s830 = scalar_lea.sflag [#allocation16], %s829
          %s831 = sand.u32 %s363, 1
          %s832 = scalar_lea.vmem [#allocation15], %s831
          %s834 = ssub.s32 16, 16
          %835 = vsyncadd %s830, %s834
          %s836 = smul.addr %s51, 16
          %s837 = scalar_lea.hbm %s12, %s836
          %s839 = sshll.u32 %s832, 4
          %s840 = int_to_ptr.vmem [resolvable:$true] %s839
          %842 = dma.hbm_to_vmem [thread:$0]  %s837, 16, %s840, %s830
        $region84: #{tpu_custom_call.1} parent=39 // pred_fallthru
          _
        // Predicated region
        $region85: #{tpu_custom_call.1} parent=39 // pred_check
          %p843 = pneg %p399
        $region86: #{tpu_custom_call.1} parent=39 // pred_check_branch
          %845 = sbr.rel (%p843) target = $region88
        $region87: #{tpu_custom_call.1} parent=39 // pred_region
          %s846 = sand.u32 %s51, 1
          %s847 = scalar_lea.sflag [#allocation16], %s846
          %s848 = sand.u32 %s389, 1
          %s849 = scalar_lea.vmem [#allocation17], %s848
          %s851 = ssub.s32 16, 16
          %852 = vsyncadd %s847, %s851
          %s853 = smul.addr %s51, 16
          %s854 = scalar_lea.hbm %s13, %s853
          %s856 = sshll.u32 %s849, 4
          %s857 = int_to_ptr.vmem [resolvable:$true] %s856
          %859 = dma.hbm_to_vmem [thread:$0]  %s854, 16, %s857, %s847
        $region88: #{tpu_custom_call.1} parent=39 // pred_fallthru
          _
        // Predicated region
        $region89: #{tpu_custom_call.1} parent=39 // pred_check
          %p860 = pneg %p425
        $region90: #{tpu_custom_call.1} parent=39 // pred_check_branch
          %862 = sbr.rel (%p860) target = $region92
        $region91: #{tpu_custom_call.1} parent=39 // pred_region
          %s863 = sand.u32 %s51, 1
          %s864 = scalar_lea.sflag [#allocation19], %s863
          %s865 = sand.u32 %s415, 1
          %s866 = smul.addr %s865, 16
          %s867 = scalar_lea.vmem [#allocation18], %s866
          %s869 = ssub.s32 256, 256
          %870 = vsyncadd %s864, %s869
          %s871 = smul.addr %s51, 4
          %s872 = smul.addr %s871, 64
          %s873 = scalar_lea.hbm %s14, %s872
          %s874 = sshll.u32 %s867, 4
          %s875 = int_to_ptr.vmem [resolvable:$true] %s874
          %880 = dma.hbm_to_vmem [thread:$0]  %s873, 256, %s875, %s864, 64, 64, 4
        $region92: #{tpu_custom_call.1} parent=39 // pred_fallthru
          _
        // Predicated region
        $region93: #{tpu_custom_call.1} parent=39 // pred_check
          %p881 = pneg %p451
        $region94: #{tpu_custom_call.1} parent=39 // pred_check_branch
          %883 = sbr.rel (%p881) target = $region96
        $region95: #{tpu_custom_call.1} parent=39 // pred_region
          %s884 = sand.u32 %s51, 1
          %s885 = scalar_lea.sflag [#allocation19], %s884
          %s886 = sand.u32 %s441, 1
          %s887 = scalar_lea.vmem [#allocation20], %s886
          %s889 = ssub.s32 16, 16
          %890 = vsyncadd %s885, %s889
          %s891 = smul.addr %s51, 16
          %s892 = scalar_lea.hbm %s15, %s891
          %s894 = sshll.u32 %s887, 4
          %s895 = int_to_ptr.vmem [resolvable:$true] %s894
          %897 = dma.hbm_to_vmem [thread:$0]  %s892, 16, %s895, %s885
        $region96: #{tpu_custom_call.1} parent=39 // pred_fallthru
          _
        // Predicated region
        $region97: #{tpu_custom_call.1} parent=39 // pred_check
          %p898 = pneg %p477
        $region98: #{tpu_custom_call.1} parent=39 // pred_check_branch
          %900 = sbr.rel (%p898) target = $region100
        $region99: #{tpu_custom_call.1} parent=39 // pred_region
          %p901 = scmp.lt.s32.totalorder %s51, 1
          %s902 = scalar_select %p901, %s51, 1
          %s903 = smul.addr %s902, 16
          %s904 = smul.addr %s903, 4
          %s905 = scalar_lea.vmem %s16, %s904
        $region100: #{tpu_custom_call.1} parent=39 // pred_fallthru
          _
        // Predicated region
        $region101: #{tpu_custom_call.1} parent=39 // pred_check
          %p906 = pneg %p503
        $region102: #{tpu_custom_call.1} parent=39 // pred_check_branch
          %908 = sbr.rel (%p906) target = $region104
        $region103: #{tpu_custom_call.1} parent=39 // pred_region
          %s909 = sand.u32 %s51, 1
          %s910 = scalar_lea.sflag [#allocation22], %s909
          %s911 = sand.u32 %s493, 1
          %s912 = scalar_lea.vmem [#allocation21], %s911
          %s914 = ssub.s32 16, 16
          %915 = vsyncadd %s910, %s914
          %s916 = smul.addr %s51, 16
          %s917 = scalar_lea.hbm %s17, %s916
          %s919 = sshll.u32 %s912, 4
          %s920 = int_to_ptr.vmem [resolvable:$true] %s919
          %922 = dma.hbm_to_vmem [thread:$0]  %s917, 16, %s920, %s910
        $region104: #{tpu_custom_call.1} parent=39 // pred_fallthru
          _
      $region40: #{tpu_custom_call.1} parent=5 // pred_fallthru
        _
      %p923 = scmp.le.s32.totalorder 1, %s51
      %p924 = scmp.lt.s32.totalorder %s51, 3
      %p925 = pnand %p923, %p924
      %p926 = pneg %p925
      // Predicated region
      $region105: #{tpu_custom_call.1} parent=5 // pred_check
        _
      $region106: #{tpu_custom_call.1} parent=5 // pred_check_branch
        %928 = sbr.rel (%p925) target = $region108
      $region107: #{tpu_custom_call.1} parent=5 // pred_region
        %s929 = ssub.s32 %s51, 1
        // Predicated region
        $region109: #{tpu_custom_call.1} parent=107 // pred_check
          %p930 = pneg %p93
        $region110: #{tpu_custom_call.1} parent=107 // pred_check_branch
          %932 = sbr.rel (%p930) target = $region112
        $region111: #{tpu_custom_call.1} parent=107 // pred_region
          %933 = dma.done [#allocation4], 384
        $region112: #{tpu_custom_call.1} parent=107 // pred_fallthru
          _
        %s934 = sand.u32 %s56, 1
        %s935 = scalar_lea.sflag [#allocation7], %s934
        %s936 = sand.u32 %s106, 1
        %s937 = scalar_lea.vmem [#allocation6], %s936
        // Predicated region
        $region113: #{tpu_custom_call.1} parent=107 // pred_check
          %p938 = pneg %p119
        $region114: #{tpu_custom_call.1} parent=107 // pred_check_branch
          %940 = sbr.rel (%p938) target = $region116
        $region115: #{tpu_custom_call.1} parent=107 // pred_region
          %941 = dma.done %s935, 16
        $region116: #{tpu_custom_call.1} parent=107 // pred_fallthru
          _
        %s942 = sand.u32 %s56, 1
        %s943 = scalar_lea.sflag [#allocation7], %s942
        %s944 = sand.u32 %s132, 1
        %s945 = scalar_lea.vmem [#allocation8], %s944
        // Predicated region
        $region117: #{tpu_custom_call.1} parent=107 // pred_check
          %p946 = pneg %p145
        $region118: #{tpu_custom_call.1} parent=107 // pred_check_branch
          %948 = sbr.rel (%p946) target = $region120
        $region119: #{tpu_custom_call.1} parent=107 // pred_region
          %949 = dma.done %s943, 16
        $region120: #{tpu_custom_call.1} parent=107 // pred_fallthru
          _
        %s950 = sand.u32 %s56, 1
        %s951 = scalar_lea.sflag [#allocation10], %s950
        %s952 = sand.u32 %s184, 1
        %s953 = scalar_lea.vmem [#allocation9], %s952
        // Predicated region
        $region121: #{tpu_custom_call.1} parent=107 // pred_check
          %p954 = pneg %p197
        $region122: #{tpu_custom_call.1} parent=107 // pred_check_branch
          %956 = sbr.rel (%p954) target = $region124
        $region123: #{tpu_custom_call.1} parent=107 // pred_region
          %957 = dma.done %s951, 16
        $region124: #{tpu_custom_call.1} parent=107 // pred_fallthru
          _
        %s958 = sand.u32 %s56, 1
        %s959 = scalar_lea.sflag [#allocation10], %s958
        %s960 = sand.u32 %s236, 1
        %s961 = scalar_lea.vmem [#allocation11], %s960
        // Predicated region
        $region125: #{tpu_custom_call.1} parent=107 // pred_check
          %p962 = pneg %p249
        $region126: #{tpu_custom_call.1} parent=107 // pred_check_branch
          %964 = sbr.rel (%p962) target = $region128
        $region127: #{tpu_custom_call.1} parent=107 // pred_region
          %965 = dma.done %s959, 16
        $region128: #{tpu_custom_call.1} parent=107 // pred_fallthru
          _
        %s966 = sand.u32 %s56, 1
        %s967 = scalar_lea.sflag [#allocation13], %s966
        %s968 = sand.u32 %s288, 1
        %s969 = scalar_lea.vmem [#allocation12], %s968
        // Predicated region
        $region129: #{tpu_custom_call.1} parent=107 // pred_check
          %p970 = pneg %p301
        $region130: #{tpu_custom_call.1} parent=107 // pred_check_branch
          %972 = sbr.rel (%p970) target = $region132
        $region131: #{tpu_custom_call.1} parent=107 // pred_region
          %973 = dma.done %s967, 16
        $region132: #{tpu_custom_call.1} parent=107 // pred_fallthru
          _
        %s974 = sand.u32 %s56, 1
        %s975 = scalar_lea.sflag [#allocation13], %s974
        %s976 = sand.u32 %s340, 1
        %s977 = scalar_lea.vmem [#allocation14], %s976
        // Predicated region
        $region133: #{tpu_custom_call.1} parent=107 // pred_check
          %p978 = pneg %p353
        $region134: #{tpu_custom_call.1} parent=107 // pred_check_branch
          %980 = sbr.rel (%p978) target = $region136
        $region135: #{tpu_custom_call.1} parent=107 // pred_region
          %981 = dma.done %s975, 16
        $region136: #{tpu_custom_call.1} parent=107 // pred_fallthru
          _
        %s982 = sand.u32 %s56, 1
        %s983 = scalar_lea.sflag [#allocation16], %s982
        %s984 = sand.u32 %s366, 1
        %s985 = scalar_lea.vmem [#allocation15], %s984
        // Predicated region
        $region137: #{tpu_custom_call.1} parent=107 // pred_check
          %p986 = pneg %p379
        $region138: #{tpu_custom_call.1} parent=107 // pred_check_branch
          %988 = sbr.rel (%p986) target = $region140
        $region139: #{tpu_custom_call.1} parent=107 // pred_region
          %989 = dma.done %s983, 16
        $region140: #{tpu_custom_call.1} parent=107 // pred_fallthru
          _
        %s990 = sand.u32 %s56, 1
        %s991 = scalar_lea.sflag [#allocation16], %s990
        %s992 = sand.u32 %s392, 1
        %s993 = scalar_lea.vmem [#allocation17], %s992
        // Predicated region
        $region141: #{tpu_custom_call.1} parent=107 // pred_check
          %p994 = pneg %p405
        $region142: #{tpu_custom_call.1} parent=107 // pred_check_branch
          %996 = sbr.rel (%p994) target = $region144
        $region143: #{tpu_custom_call.1} parent=107 // pred_region
          %997 = dma.done %s991, 16
        $region144: #{tpu_custom_call.1} parent=107 // pred_fallthru
          _
        %s998 = sand.u32 %s56, 1
        %s999 = scalar_lea.sflag [#allocation19], %s998
        %s1000 = sand.u32 %s418, 1
        %s1001 = smul.addr %s1000, 16
        %s1002 = scalar_lea.vmem [#allocation18], %s1001
        // Predicated region
        $region145: #{tpu_custom_call.1} parent=107 // pred_check
          %p1003 = pneg %p431
        $region146: #{tpu_custom_call.1} parent=107 // pred_check_branch
          %1005 = sbr.rel (%p1003) target = $region148
        $region147: #{tpu_custom_call.1} parent=107 // pred_region
          %1006 = dma.done %s999, 256
        $region148: #{tpu_custom_call.1} parent=107 // pred_fallthru
          _
        %s1007 = sand.u32 %s56, 1
        %s1008 = scalar_lea.sflag [#allocation19], %s1007
        %s1009 = sand.u32 %s444, 1
        %s1010 = scalar_lea.vmem [#allocation20], %s1009
        // Predicated region
        $region149: #{tpu_custom_call.1} parent=107 // pred_check
          %p1011 = pneg %p457
        $region150: #{tpu_custom_call.1} parent=107 // pred_check_branch
          %1013 = sbr.rel (%p1011) target = $region152
        $region151: #{tpu_custom_call.1} parent=107 // pred_region
          %1014 = dma.done %s1008, 16
        $region152: #{tpu_custom_call.1} parent=107 // pred_fallthru
          _
        %s1015 = sand.u32 %s56, 1
        %s1016 = scalar_lea.sflag [#allocation22], %s1015
        %s1017 = sand.u32 %s496, 1
        %s1018 = scalar_lea.vmem [#allocation21], %s1017
        // Predicated region
        $region153: #{tpu_custom_call.1} parent=107 // pred_check
          %p1019 = pneg %p509
        $region154: #{tpu_custom_call.1} parent=107 // pred_check_branch
          %1021 = sbr.rel (%p1019) target = $region156
        $region155: #{tpu_custom_call.1} parent=107 // pred_region
          %1022 = dma.done %s1016, 16
        $region156: #{tpu_custom_call.1} parent=107 // pred_fallthru
          _
        // Predicated region
        $region157: #{tpu_custom_call.1} parent=107 // pred_check
          %p1023 = pneg %p593
        $region158: #{tpu_custom_call.1} parent=107 // pred_check_branch
          %1025 = sbr.rel (%p1023) target = $region160
        $region159: #{tpu_custom_call.1} parent=107 // pred_region
          %1026 = dma.done [#allocation22], 256
        $region160: #{tpu_custom_call.1} parent=107 // pred_fallthru
          _
        %p1027 = pneg %p72
        %p1028 = pneg %p69
        %p1029 = pneg %p93
        %p1030 = pneg %p90
        %s1031 = sand.u32 %s56, 1
        %s1032 = scalar_lea.sflag [#allocation7], %s1031
        %s1033 = sand.u32 %s106, 1
        %s1034 = scalar_lea.vmem [#allocation6], %s1033
        %p1035 = pneg %p119
        %p1036 = pneg %p116
        %s1037 = sand.u32 %s56, 1
        %s1038 = scalar_lea.sflag [#allocation7], %s1037
        %s1039 = sand.u32 %s132, 1
        %s1040 = scalar_lea.vmem [#allocation8], %s1039
        %p1041 = pneg %p145
        %p1042 = pneg %p142
        %p1043 = scmp.lt.s32.totalorder %s56, 1
        %s1044 = scalar_select %p1043, %s56, 1
        %s1045 = smul.addr %s1044, 4
        %s1046 = smul.addr %s1045, 4
        %s1047 = scalar_lea.vmem %s4, %s1046
        %p1048 = pneg %p171
        %p1049 = pneg %p168
        %s1050 = sand.u32 %s56, 1
        %s1051 = scalar_lea.sflag [#allocation10], %s1050
        %s1052 = sand.u32 %s184, 1
        %s1053 = scalar_lea.vmem [#allocation9], %s1052
        %p1054 = pneg %p197
        %p1055 = pneg %p194
        %p1056 = scmp.lt.s32.totalorder %s56, 1
        %s1057 = scalar_select %p1056, %s56, 1
        %s1058 = smul.addr %s1057, 4
        %s1059 = smul.addr %s1058, 4
        %s1060 = scalar_lea.vmem %s6, %s1059
        %p1061 = pneg %p223
        %p1062 = pneg %p220
        %s1063 = sand.u32 %s56, 1
        %s1064 = scalar_lea.sflag [#allocation10], %s1063
        %s1065 = sand.u32 %s236, 1
        %s1066 = scalar_lea.vmem [#allocation11], %s1065
        %p1067 = pneg %p249
        %p1068 = pneg %p246
        %p1069 = scmp.lt.s32.totalorder %s56, 1
        %s1070 = scalar_select %p1069, %s56, 1
        %s1071 = smul.addr %s1070, 4
        %s1072 = smul.addr %s1071, 4
        %s1073 = scalar_lea.vmem %s8, %s1072
        %p1074 = pneg %p275
        %p1075 = pneg %p272
        %s1076 = sand.u32 %s56, 1
        %s1077 = scalar_lea.sflag [#allocation13], %s1076
        %s1078 = sand.u32 %s288, 1
        %s1079 = scalar_lea.vmem [#allocation12], %s1078
        %p1080 = pneg %p301
        %p1081 = pneg %p298
        %p1082 = scmp.lt.s32.totalorder %s56, 1
        %s1083 = scalar_select %p1082, %s56, 1
        %s1084 = smul.addr %s1083, 4
        %s1085 = smul.addr %s1084, 4
        %s1086 = scalar_lea.vmem %s10, %s1085
        %p1087 = pneg %p327
        %p1088 = pneg %p324
        %s1089 = sand.u32 %s56, 1
        %s1090 = scalar_lea.sflag [#allocation13], %s1089
        %s1091 = sand.u32 %s340, 1
        %s1092 = scalar_lea.vmem [#allocation14], %s1091
        %p1093 = pneg %p353
        %p1094 = pneg %p350
        %s1095 = sand.u32 %s56, 1
        %s1096 = scalar_lea.sflag [#allocation16], %s1095
        %s1097 = sand.u32 %s366, 1
        %s1098 = scalar_lea.vmem [#allocation15], %s1097
        %p1099 = pneg %p379
        %p1100 = pneg %p376
        %s1101 = sand.u32 %s56, 1
        %s1102 = scalar_lea.sflag [#allocation16], %s1101
        %s1103 = sand.u32 %s392, 1
        %s1104 = scalar_lea.vmem [#allocation17], %s1103
        %p1105 = pneg %p405
        %p1106 = pneg %p402
        %s1107 = sand.u32 %s56, 1
        %s1108 = scalar_lea.sflag [#allocation19], %s1107
        %s1109 = sand.u32 %s418, 1
        %s1110 = smul.addr %s1109, 16
        %s1111 = scalar_lea.vmem [#allocation18], %s1110
        %p1112 = pneg %p431
        %p1113 = pneg %p428
        %s1114 = sand.u32 %s56, 1
        %s1115 = scalar_lea.sflag [#allocation19], %s1114
        %s1116 = sand.u32 %s444, 1
        %s1117 = scalar_lea.vmem [#allocation20], %s1116
        %p1118 = pneg %p457
        %p1119 = pneg %p454
        %p1120 = scmp.lt.s32.totalorder %s56, 1
        %s1121 = scalar_select %p1120, %s56, 1
        %s1122 = smul.addr %s1121, 16
        %s1123 = smul.addr %s1122, 4
        %s1124 = scalar_lea.vmem %s16, %s1123
        %p1125 = pneg %p483
        %p1126 = pneg %p480
        %s1127 = sand.u32 %s56, 1
        %s1128 = scalar_lea.sflag [#allocation22], %s1127
        %s1129 = sand.u32 %s496, 1
        %s1130 = scalar_lea.vmem [#allocation21], %s1129
        %p1131 = pneg %p509
        %p1132 = pneg %p506
        %p1133 = pneg %p530
        %p1134 = pneg %p527
        %p1135 = pneg %p551
        %p1136 = pneg %p548
        %p1137 = pneg %p572
        %p1138 = pneg %p569
        %p1139 = pneg %p593
        %p1140 = pneg %p590
        %p1141 = pneg %p614
        %p1142 = pneg %p611
        %p1143 = pneg %p635
        %p1144 = pneg %p632
        %p1145 = scmp.lt.s32.totalorder %s56, 1
        %s1146 = scalar_select %p1145, %s56, 1
        %s1147 = smul.addr %s1146, 4
        %s1148 = smul.addr %s1147, 4
        %s1149 = scalar_lea.vmem %s4, %s1148
        %p1150 = scmp.lt.s32.totalorder %s56, 1
        %s1151 = scalar_select %p1150, %s56, 1
        %s1152 = smul.addr %s1151, 4
        %s1153 = smul.addr %s1152, 4
        %s1154 = scalar_lea.vmem %s6, %s1153
        %p1155 = scmp.lt.s32.totalorder %s56, 1
        %s1156 = scalar_select %p1155, %s56, 1
        %s1157 = smul.addr %s1156, 4
        %s1158 = smul.addr %s1157, 4
        %s1159 = scalar_lea.vmem %s8, %s1158
        %p1160 = scmp.lt.s32.totalorder %s56, 1
        %s1161 = scalar_select %p1160, %s56, 1
        %s1162 = smul.addr %s1161, 4
        %s1163 = smul.addr %s1162, 4
        %s1164 = scalar_lea.vmem %s10, %s1163
        %p1165 = scmp.lt.s32.totalorder %s56, 1
        %s1166 = scalar_select %p1165, %s56, 1
        %s1167 = smul.addr %s1166, 16
        %s1168 = smul.addr %s1167, 4
        %s1169 = scalar_lea.vmem %s16, %s1168
        %p1171 = scmp.eq.s32.totalorder %s56, 0
        // Predicated region
        $region161: #{tpu_custom_call.1} parent=107 // pred_check
          %p1172 = pneg %p1171
        $region162: #{tpu_custom_call.1} parent=107 // pred_check_branch
          %1174 = sbr.rel (%p1172) target = $region164
        $region163: #{tpu_custom_call.1} parent=107 // pred_region
          %v1175 = vld [vmem:[%s0] sm:$0xff]
          %v1176 = vld [vmem:[%s0 + $0x8] sm:$0xff]
          %v1177 = vld [vmem:[%s0 + $0x10] sm:$0xff]
          %v1178 = vld [vmem:[%s0 + $0x18] sm:$0xff]
          %v1179 = vld [vmem:[%s0 + $0x20] sm:$0xff]
          %v1180 = vld [vmem:[%s0 + $0x28] sm:$0xff]
          %vm1181 = vcmask 261120
          %1182 = vst.msk [vmem:[#allocation2] sm:$0xff] %vm1181, %v1175
          %1183 = vst.msk [vmem:[#allocation2 + $0x8] sm:$0xff] %vm1181, %v1176
          %1184 = vst.msk [vmem:[#allocation2 + $0x10] sm:$0xff] %vm1181, %v1177
          %1185 = vst.msk [vmem:[#allocation2 + $0x18] sm:$0xff] %vm1181, %v1178
          %1186 = vst.msk [vmem:[#allocation2 + $0x20] sm:$0xff] %vm1181, %v1179
          %1187 = vst.msk [vmem:[#allocation2 + $0x28] sm:$0xff] %vm1181, %v1180
        $region164: #{tpu_custom_call.1} parent=107 // pred_fallthru
          _
        %v1188 = vld [vmem:[#allocation2] sm:$0xff]
        %v1189 = vld [vmem:[#allocation2 + $0x8] sm:$0xff]
        %v1190 = vld [vmem:[#allocation2 + $0x10] sm:$0xff]
        %v1191 = vld [vmem:[#allocation2 + $0x18] sm:$0xff]
        %v1192 = vld [vmem:[#allocation2 + $0x20] sm:$0xff]
        %v1193 = vld [vmem:[#allocation2 + $0x28] sm:$0xff]
        %v1194 = vld [vmem:[#allocation3] sm:$0xff]
        %v1195 = vld [vmem:[#allocation3 + $0x8] sm:$0xff]
        %v1196 = vld [vmem:[#allocation3 + $0x10] sm:$0xff]
        %v1197 = vld [vmem:[%s937] sm:$0x1]
        %v1198 = vld [vmem:[%s945] sm:$0x1]
        %vm1199 = vcmask 261120
        %v1200 = vsel %vm1199, %v1188, 0.0
        %1201 = vadd.xlane.f32.xlu0 %v1200
        %v1202 = vpop.xlane.xlu0 %1201
        %v1203 = vsel %vm1199, %v1189, 0.0
        %1204 = vadd.xlane.f32.xlu0 %v1203
        %v1205 = vpop.xlane.xlu0 %1204
        %v1206 = vsel %vm1199, %v1190, 0.0
        %1207 = vadd.xlane.f32.xlu0 %v1206
        %v1208 = vpop.xlane.xlu0 %1207
        %v1209 = vsel %vm1199, %v1191, 0.0
        %1210 = vadd.xlane.f32.xlu0 %v1209
        %v1211 = vpop.xlane.xlu0 %1210
        %v1212 = vsel %vm1199, %v1192, 0.0
        %1213 = vadd.xlane.f32.xlu0 %v1212
        %v1214 = vpop.xlane.xlu0 %1213
        %v1215 = vsel %vm1199, %v1193, 0.0
        %1216 = vadd.xlane.f32.xlu0 %v1215
        %v1217 = vpop.xlane.xlu0 %1216
        %v1218 = vrcp.pop 32.0
        %v1219 = vmul.f32 %v1202, %v1218
        %v1220 = vmul.f32 %v1205, %v1218
        %v1221 = vmul.f32 %v1208, %v1218
        %v1222 = vmul.f32 %v1211, %v1218
        %v1223 = vmul.f32 %v1214, %v1218
        %v1224 = vmul.f32 %v1217, %v1218
        %v1225 = vsub.f32 %v1188, %v1219
        %v1226 = vsub.f32 %v1189, %v1220
        %v1227 = vsub.f32 %v1190, %v1221
        %v1228 = vsub.f32 %v1191, %v1222
        %v1229 = vsub.f32 %v1192, %v1223
        %v1230 = vsub.f32 %v1193, %v1224
        %v1231 = vmul.f32 %v1225, %v1225
        %v1232 = vmul.f32 %v1226, %v1226
        %v1233 = vmul.f32 %v1227, %v1227
        %v1234 = vmul.f32 %v1228, %v1228
        %v1235 = vmul.f32 %v1229, %v1229
        %v1236 = vmul.f32 %v1230, %v1230
        %v1237 = vsel %vm1199, %v1231, 0.0
        %1238 = vadd.xlane.f32.xlu0 %v1237
        %v1239 = vpop.xlane.xlu0 %1238
        %v1240 = vsel %vm1199, %v1232, 0.0
        %1241 = vadd.xlane.f32.xlu0 %v1240
        %v1242 = vpop.xlane.xlu0 %1241
        %v1243 = vsel %vm1199, %v1233, 0.0
        %1244 = vadd.xlane.f32.xlu0 %v1243
        %v1245 = vpop.xlane.xlu0 %1244
        %v1246 = vsel %vm1199, %v1234, 0.0
        %1247 = vadd.xlane.f32.xlu0 %v1246
        %v1248 = vpop.xlane.xlu0 %1247
        %v1249 = vsel %vm1199, %v1235, 0.0
        %1250 = vadd.xlane.f32.xlu0 %v1249
        %v1251 = vpop.xlane.xlu0 %1250
        %v1252 = vsel %vm1199, %v1236, 0.0
        %1253 = vadd.xlane.f32.xlu0 %v1252
        %v1254 = vpop.xlane.xlu0 %1253
        %v1255 = vmul.f32 %v1239, %v1218
        %v1256 = vmul.f32 %v1242, %v1218
        %v1257 = vmul.f32 %v1245, %v1218
        %v1258 = vmul.f32 %v1248, %v1218
        %v1259 = vmul.f32 %v1251, %v1218
        %v1260 = vmul.f32 %v1254, %v1218
        %v1261 = vadd.f32 %v1255, 1e-05
        %v1262 = vadd.f32 %v1256, 1e-05
        %v1263 = vadd.f32 %v1257, 1e-05
        %v1264 = vadd.f32 %v1258, 1e-05
        %v1265 = vadd.f32 %v1259, 1e-05
        %v1266 = vadd.f32 %v1260, 1e-05
        %v1267 = vrsqrt.pop %v1261
        %v1268 = vrsqrt.pop %v1262
        %v1269 = vrsqrt.pop %v1263
        %v1270 = vrsqrt.pop %v1264
        %v1271 = vrsqrt.pop %v1265
        %v1272 = vrsqrt.pop %v1266
        %v1273 = vmul.f32 %v1225, %v1267
        %v1274 = vmul.f32 %v1226, %v1268
        %v1275 = vmul.f32 %v1227, %v1269
        %v1276 = vmul.f32 %v1228, %v1270
        %v1277 = vmul.f32 %v1229, %v1271
        %v1278 = vmul.f32 %v1230, %v1272
        %v1280 = vlaneseq
        %v1281 = vshrl.u32 %v1280, 7
        %v1282 = vsub.s32 0, %v1281
        %v1283 = vrot.slane %v1197, %v1282
        %v1285 = vmul.f32 %v1273, %v1283
        %v1286 = vmul.f32 %v1274, %v1283
        %v1287 = vmul.f32 %v1275, %v1283
        %v1288 = vmul.f32 %v1276, %v1283
        %v1289 = vmul.f32 %v1277, %v1283
        %v1290 = vmul.f32 %v1278, %v1283
        %v1292 = vlaneseq
        %v1293 = vshrl.u32 %v1292, 7
        %v1294 = vsub.s32 0, %v1293
        %v1295 = vrot.slane %v1198, %v1294
        %v1297 = vadd.f32 %v1285, %v1295
        %v1298 = vadd.f32 %v1286, %v1295
        %v1299 = vadd.f32 %v1287, %v1295
        %v1300 = vadd.f32 %v1288, %v1295
        %v1301 = vadd.f32 %v1289, %v1295
        %v1302 = vadd.f32 %v1290, %v1295
        %v1303 = vpack.c.bf16 %v1298, %v1297
        %v1304 = vpack.c.bf16 %v1300, %v1299
        %v1305 = vpack.c.bf16 %v1302, %v1301
        %v1306 = vld [vmem:[%s1149] sm:$0xf]
        %v1307 = vld [vmem:[%s1149 + $0x4] sm:$0xf]
        %v1308 = vld [vmem:[%s1149 + $0x8] sm:$0xf]
        %v1309 = vld [vmem:[%s1149 + $0xc] sm:$0xf]
        %v1310 = vld [vmem:[%s953] sm:$0x1]
        %v1312 = vlaneseq
        %v1313 = vshrl.u32 %v1312, 7
        %v1314 = vsub.s32 0, %v1313
        %v1315 = vrot.slane %v1310, %v1314
        %v1321 = vunpack.c.l.b16 %v1306
        %v1322 = vunpack.c.l.b16 %v1307
        %v1323 = vunpack.c.l.b16 %v1308
        %v1324 = vunpack.c.l.b16 %v1309
        %v1325 = vpack.c.b16 %v1322, %v1321
        %v1326 = vpack.c.b16 %v1324, %v1323
        %v1330 = vsel %vm1199, %v1303, 0
        %v1333 = vsel %vm1199, %v1304, 0
        %v1336 = vsel %vm1199, %v1305, 0
        %1338 = vmatprep.subr.bf16.mxu0 0
        %1339 = vmatpush1.bf16.msra.mxu0 %v1325
        %1340 = vmatprep.subr.bf16.mxu0 0
        %1341 = vmatpush1.bf16.msra.mxu0 %v1326
        %1342 = vmatprep.subr.bf16.mxu0 0
        %1343 = vmatpush1.bf16.msra.mxu0 0
        %1344 = vmatprep.subr.bf16.mxu0 0
        %1345 = vmatpush1.bf16.msra.mxu0 0
        %1346 = vmatprep.subr.bf16.mxu0 0
        %1347 = vmatpush1.bf16.msra.mxu0 0
        %1348 = vmatprep.subr.bf16.mxu0 0
        %1349 = vmatpush1.bf16.msra.mxu0 0
        %1350 = vmatprep.subr.bf16.mxu0 0
        %1351 = vmatpush1.bf16.msra.mxu0 0
        %1352 = vmatprep.subr.bf16.mxu0 0
        %1353 = vmatpush1.bf16.msra.mxu0 0
        %1354 = vmatprep.subr.bf16.mxu0 0
        %1355 = vmatpush1.bf16.msra.mxu0 0
        %1356 = vmatprep.subr.bf16.mxu0 0
        %1357 = vmatpush1.bf16.msra.mxu0 0
        %1358 = vmatprep.subr.bf16.mxu0 0
        %1359 = vmatpush1.bf16.msra.mxu0 0
        %1360 = vmatprep.subr.bf16.mxu0 0
        %1361 = vmatpush1.bf16.msra.mxu0 0
        %1362 = vmatprep.subr.bf16.mxu0 0
        %1363 = vmatpush1.bf16.msra.mxu0 0
        %1364 = vmatprep.subr.bf16.mxu0 0
        %1365 = vmatpush1.bf16.msra.mxu0 0
        %1366 = vmatprep.subr.bf16.mxu0 0
        %1367 = vmatpush1.bf16.msra.mxu0 0
        %1368 = vmatprep.subr.bf16.mxu0 0
        %1369 = vmatpush1.bf16.msra.mxu0 0
        %1370 = vmatprep.mubr.bf16.mxu0 0
        %1371 = vmatmul.mubr.bf16.gmra.mrb[0].mxu0 %v1330
        %v1372 = vpop.f32.mrb[0].mxu0
        %v1373 = vadd.f32 %v1315, %v1372
        %v1374 = vpop.f32.mrb[0].mxu0
        %v1375 = vpop.f32.mrb[0].mxu0
        %v1376 = vadd.f32 %v1315, %v1375
        %v1377 = vpop.f32.mrb[0].mxu0
        %1378 = vmatprep.mubr.bf16.mxu0 0
        %1379 = vmatmul.mubr.bf16.gmra.mrb[0].mxu0 %v1333
        %v1380 = vpop.f32.mrb[0].mxu0
        %v1381 = vadd.f32 %v1315, %v1380
        %v1382 = vpop.f32.mrb[0].mxu0
        %v1383 = vpop.f32.mrb[0].mxu0
        %v1384 = vadd.f32 %v1315, %v1383
        %v1385 = vpop.f32.mrb[0].mxu0
        %1386 = vmatprep.mubr.bf16.mxu0 0
        %1387 = vmatmul.mubr.bf16.gmra.mrb[0].mxu0 %v1336
        %v1388 = vpop.f32.mrb[0].mxu0
        %v1389 = vadd.f32 %v1315, %v1388
        %v1390 = vpop.f32.mrb[0].mxu0
        %v1391 = vpop.f32.mrb[0].mxu0
        %v1392 = vadd.f32 %v1315, %v1391
        %v1393 = vpop.f32.mrb[0].mxu0
        %1394 = vdwg.mxu0
        %v1395 = vld [vmem:[%s1154] sm:$0xf]
        %v1396 = vld [vmem:[%s1154 + $0x4] sm:$0xf]
        %v1397 = vld [vmem:[%s1154 + $0x8] sm:$0xf]
        %v1398 = vld [vmem:[%s1154 + $0xc] sm:$0xf]
        %v1399 = vld [vmem:[%s961] sm:$0x1]
        %v1401 = vlaneseq
        %v1402 = vshrl.u32 %v1401, 7
        %v1403 = vsub.s32 0, %v1402
        %v1404 = vrot.slane %v1399, %v1403
        %v1410 = vunpack.c.l.b16 %v1395
        %v1411 = vunpack.c.l.b16 %v1396
        %v1412 = vunpack.c.l.b16 %v1397
        %v1413 = vunpack.c.l.b16 %v1398
        %v1414 = vpack.c.b16 %v1411, %v1410
        %v1415 = vpack.c.b16 %v1413, %v1412
        %1418 = vmatprep.subr.bf16.mxu0 0
        %1419 = vmatpush1.bf16.msra.mxu0 %v1414
        %1420 = vmatprep.subr.bf16.mxu0 0
        %1421 = vmatpush1.bf16.msra.mxu0 %v1415
        %1422 = vmatprep.subr.bf16.mxu0 0
        %1423 = vmatpush1.bf16.msra.mxu0 0
        %1424 = vmatprep.subr.bf16.mxu0 0
        %1425 = vmatpush1.bf16.msra.mxu0 0
        %1426 = vmatprep.subr.bf16.mxu0 0
        %1427 = vmatpush1.bf16.msra.mxu0 0
        %1428 = vmatprep.subr.bf16.mxu0 0
        %1429 = vmatpush1.bf16.msra.mxu0 0
        %1430 = vmatprep.subr.bf16.mxu0 0
        %1431 = vmatpush1.bf16.msra.mxu0 0
        %1432 = vmatprep.subr.bf16.mxu0 0
        %1433 = vmatpush1.bf16.msra.mxu0 0
        %1434 = vmatprep.subr.bf16.mxu0 0
        %1435 = vmatpush1.bf16.msra.mxu0 0
        %1436 = vmatprep.subr.bf16.mxu0 0
        %1437 = vmatpush1.bf16.msra.mxu0 0
        %1438 = vmatprep.subr.bf16.mxu0 0
        %1439 = vmatpush1.bf16.msra.mxu0 0
        %1440 = vmatprep.subr.bf16.mxu0 0
        %1441 = vmatpush1.bf16.msra.mxu0 0
        %1442 = vmatprep.subr.bf16.mxu0 0
        %1443 = vmatpush1.bf16.msra.mxu0 0
        %1444 = vmatprep.subr.bf16.mxu0 0
        %1445 = vmatpush1.bf16.msra.mxu0 0
        %1446 = vmatprep.subr.bf16.mxu0 0
        %1447 = vmatpush1.bf16.msra.mxu0 0
        %1448 = vmatprep.subr.bf16.mxu0 0
        %1449 = vmatpush1.bf16.msra.mxu0 0
        %1450 = vmatprep.mubr.bf16.mxu0 0
        %1451 = vmatmul.mubr.bf16.gmra.mrb[0].mxu0 %v1330
        %v1452 = vpop.f32.mrb[0].mxu0
        %v1453 = vadd.f32 %v1404, %v1452
        %v1454 = vpop.f32.mrb[0].mxu0
        %v1455 = vpop.f32.mrb[0].mxu0
        %v1456 = vadd.f32 %v1404, %v1455
        %v1457 = vpop.f32.mrb[0].mxu0
        %1458 = vmatprep.mubr.bf16.mxu0 0
        %1459 = vmatmul.mubr.bf16.gmra.mrb[0].mxu0 %v1333
        %v1460 = vpop.f32.mrb[0].mxu0
        %v1461 = vadd.f32 %v1404, %v1460
        %v1462 = vpop.f32.mrb[0].mxu0
        %v1463 = vpop.f32.mrb[0].mxu0
        %v1464 = vadd.f32 %v1404, %v1463
        %v1465 = vpop.f32.mrb[0].mxu0
        %1466 = vmatprep.mubr.bf16.mxu0 0
        %1467 = vmatmul.mubr.bf16.gmra.mrb[0].mxu0 %v1336
        %v1468 = vpop.f32.mrb[0].mxu0
        %v1469 = vadd.f32 %v1404, %v1468
        %v1470 = vpop.f32.mrb[0].mxu0
        %v1471 = vpop.f32.mrb[0].mxu0
        %v1472 = vadd.f32 %v1404, %v1471
        %v1473 = vpop.f32.mrb[0].mxu0
        %1474 = vdwg.mxu0
        %v1475 = vld [vmem:[%s1159] sm:$0xf]
        %v1476 = vld [vmem:[%s1159 + $0x4] sm:$0xf]
        %v1477 = vld [vmem:[%s1159 + $0x8] sm:$0xf]
        %v1478 = vld [vmem:[%s1159 + $0xc] sm:$0xf]
        %v1479 = vld [vmem:[%s969] sm:$0x1]
        %v1481 = vlaneseq
        %v1482 = vshrl.u32 %v1481, 7
        %v1483 = vsub.s32 0, %v1482
        %v1484 = vrot.slane %v1479, %v1483
        %v1490 = vunpack.c.l.b16 %v1475
        %v1491 = vunpack.c.l.b16 %v1476
        %v1492 = vunpack.c.l.b16 %v1477
        %v1493 = vunpack.c.l.b16 %v1478
        %v1494 = vpack.c.b16 %v1491, %v1490
        %v1495 = vpack.c.b16 %v1493, %v1492
        %1498 = vmatprep.subr.bf16.mxu0 0
        %1499 = vmatpush1.bf16.msra.mxu0 %v1494
        %1500 = vmatprep.subr.bf16.mxu0 0
        %1501 = vmatpush1.bf16.msra.mxu0 %v1495
        %1502 = vmatprep.subr.bf16.mxu0 0
        %1503 = vmatpush1.bf16.msra.mxu0 0
        %1504 = vmatprep.subr.bf16.mxu0 0
        %1505 = vmatpush1.bf16.msra.mxu0 0
        %1506 = vmatprep.subr.bf16.mxu0 0
        %1507 = vmatpush1.bf16.msra.mxu0 0
        %1508 = vmatprep.subr.bf16.mxu0 0
        %1509 = vmatpush1.bf16.msra.mxu0 0
        %1510 = vmatprep.subr.bf16.mxu0 0
        %1511 = vmatpush1.bf16.msra.mxu0 0
        %1512 = vmatprep.subr.bf16.mxu0 0
        %1513 = vmatpush1.bf16.msra.mxu0 0
        %1514 = vmatprep.subr.bf16.mxu0 0
        %1515 = vmatpush1.bf16.msra.mxu0 0
        %1516 = vmatprep.subr.bf16.mxu0 0
        %1517 = vmatpush1.bf16.msra.mxu0 0
        %1518 = vmatprep.subr.bf16.mxu0 0
        %1519 = vmatpush1.bf16.msra.mxu0 0
        %1520 = vmatprep.subr.bf16.mxu0 0
        %1521 = vmatpush1.bf16.msra.mxu0 0
        %1522 = vmatprep.subr.bf16.mxu0 0
        %1523 = vmatpush1.bf16.msra.mxu0 0
        %1524 = vmatprep.subr.bf16.mxu0 0
        %1525 = vmatpush1.bf16.msra.mxu0 0
        %1526 = vmatprep.subr.bf16.mxu0 0
        %1527 = vmatpush1.bf16.msra.mxu0 0
        %1528 = vmatprep.subr.bf16.mxu0 0
        %1529 = vmatpush1.bf16.msra.mxu0 0
        %1530 = vmatprep.mubr.bf16.mxu0 0
        %1531 = vmatmul.mubr.bf16.gmra.mrb[0].mxu0 %v1330
        %v1532 = vpop.f32.mrb[0].mxu0
        %v1533 = vadd.f32 %v1484, %v1532
        %v1534 = vpop.f32.mrb[0].mxu0
        %v1535 = vpop.f32.mrb[0].mxu0
        %v1536 = vadd.f32 %v1484, %v1535
        %v1537 = vpop.f32.mrb[0].mxu0
        %1538 = vmatprep.mubr.bf16.mxu0 0
        %1539 = vmatmul.mubr.bf16.gmra.mrb[0].mxu0 %v1333
        %v1540 = vpop.f32.mrb[0].mxu0
        %v1541 = vadd.f32 %v1484, %v1540
        %v1542 = vpop.f32.mrb[0].mxu0
        %v1543 = vpop.f32.mrb[0].mxu0
        %v1544 = vadd.f32 %v1484, %v1543
        %v1545 = vpop.f32.mrb[0].mxu0
        %1546 = vmatprep.mubr.bf16.mxu0 0
        %1547 = vmatmul.mubr.bf16.gmra.mrb[0].mxu0 %v1336
        %v1548 = vpop.f32.mrb[0].mxu0
        %v1549 = vadd.f32 %v1484, %v1548
        %v1550 = vpop.f32.mrb[0].mxu0
        %v1551 = vpop.f32.mrb[0].mxu0
        %v1552 = vadd.f32 %v1484, %v1551
        %v1553 = vpop.f32.mrb[0].mxu0
        %1554 = vdwg.mxu0
        %v1555 = vld [vmem:[%s1164] sm:$0xf]
        %v1556 = vld [vmem:[%s1164 + $0x4] sm:$0xf]
        %v1557 = vld [vmem:[%s1164 + $0x8] sm:$0xf]
        %v1558 = vld [vmem:[%s1164 + $0xc] sm:$0xf]
        %v1559 = vpack.c.bf16 %v1376, %v1373
        %v1560 = vpack.c.bf16 %v1381, %v1381
        %v1561 = vpack.c.bf16 %v1389, %v1384
        %v1562 = vpack.c.bf16 %v1392, %v1392
        %v1563 = vpack.c.bf16 %v1456, %v1453
        %v1564 = vpack.c.bf16 %v1461, %v1461
        %v1565 = vpack.c.bf16 %v1469, %v1464
        %v1566 = vpack.c.bf16 %v1472, %v1472
        %v1567 = vpack.c.bf16 %v1536, %v1533
        %v1568 = vpack.c.bf16 %v1541, %v1541
        %v1569 = vpack.c.bf16 %v1549, %v1544
        %v1570 = vpack.c.bf16 %v1552, %v1552
        %vm1571 = vcmask 64512
        %v1573 = vsel %vm1571, %v1559, 0
        %v1576 = vsel %vm1571, %v1560, 0
        %v1579 = vsel %vm1571, %v1563, 0
        %v1582 = vsel %vm1571, %v1564, 0
        %1584 = vmatprep.subr.bf16.mxu0 0
        %1585 = vmatpush1.bf16.xpose.msra.mxu0 %v1579
        %1586 = vmatprep.subr.bf16.mxu0 0
        %1587 = vmatpush1.bf16.xpose.msra.mxu0 %v1582
        %1588 = vmatprep.subr.bf16.mxu0 0
        %1589 = vmatpush1.bf16.xpose.msra.mxu0 0
        %1590 = vmatprep.subr.bf16.mxu0 0
        %1591 = vmatpush1.bf16.xpose.msra.mxu0 0
        %1592 = vmatprep.subr.bf16.mxu0 0
        %1593 = vmatpush1.bf16.xpose.msra.mxu0 0
        %1594 = vmatprep.subr.bf16.mxu0 0
        %1595 = vmatpush1.bf16.xpose.msra.mxu0 0
        %1596 = vmatprep.subr.bf16.mxu0 0
        %1597 = vmatpush1.bf16.xpose.msra.mxu0 0
        %1598 = vmatprep.subr.bf16.mxu0 0
        %1599 = vmatpush1.bf16.xpose.msra.mxu0 0
        %1600 = vmatprep.subr.bf16.mxu0 0
        %1601 = vmatpush1.bf16.xpose.msra.mxu0 0
        %1602 = vmatprep.subr.bf16.mxu0 0
        %1603 = vmatpush1.bf16.xpose.msra.mxu0 0
        %1604 = vmatprep.subr.bf16.mxu0 0
        %1605 = vmatpush1.bf16.xpose.msra.mxu0 0
        %1606 = vmatprep.subr.bf16.mxu0 0
        %1607 = vmatpush1.bf16.xpose.msra.mxu0 0
        %1608 = vmatprep.subr.bf16.mxu0 0
        %1609 = vmatpush1.bf16.xpose.msra.mxu0 0
        %1610 = vmatprep.subr.bf16.mxu0 0
        %1611 = vmatpush1.bf16.xpose.msra.mxu0 0
        %1612 = vmatprep.subr.bf16.mxu0 0
        %1613 = vmatpush1.bf16.xpose.msra.mxu0 0
        %1614 = vmatprep.subr.bf16.mxu0 0
        %1615 = vmatpush1.bf16.xpose.msra.mxu0 0
        %1616 = vmatprep.mubr.bf16.mxu0 0
        %1617 = vmatmul.mubr.bf16.gmra.mrb[0].mxu0 %v1573
        %v1618 = vpop.f32.mrb[0].mxu0
        %v1619 = vadd.f32 %v1194, %v1618
        %v1620 = vpop.f32.mrb[0].mxu0
        %v1621 = vpop.f32.mrb[0].mxu0
        %v1622 = vadd.f32 %v1195, %v1621
        %v1623 = vpop.f32.mrb[0].mxu0
        %1624 = vmatprep.mubr.bf16.mxu0 0
        %1625 = vmatmul.mubr.bf16.gmra.mrb[0].mxu0 %v1576
        %v1626 = vpop.f32.mrb[0].mxu0
        %v1627 = vadd.f32 %v1196, %v1626
        %v1628 = vpop.f32.mrb[0].mxu0
        %v1629 = vpop.f32.mrb[0].mxu0
        %v1630 = vpop.f32.mrb[0].mxu0
        %1631 = vdwg.mxu0
        %v1633 = vsel %vm1571, %v1561, 0
        %v1636 = vsel %vm1571, %v1562, 0
        %v1639 = vsel %vm1571, %v1565, 0
        %v1642 = vsel %vm1571, %v1566, 0
        %1644 = vmatprep.subr.bf16.mxu0 0
        %1645 = vmatpush1.bf16.xpose.msra.mxu0 %v1639
        %1646 = vmatprep.subr.bf16.mxu0 0
        %1647 = vmatpush1.bf16.xpose.msra.mxu0 %v1642
        %1648 = vmatprep.subr.bf16.mxu0 0
        %1649 = vmatpush1.bf16.xpose.msra.mxu0 0
        %1650 = vmatprep.subr.bf16.mxu0 0
        %1651 = vmatpush1.bf16.xpose.msra.mxu0 0
        %1652 = vmatprep.subr.bf16.mxu0 0
        %1653 = vmatpush1.bf16.xpose.msra.mxu0 0
        %1654 = vmatprep.subr.bf16.mxu0 0
        %1655 = vmatpush1.bf16.xpose.msra.mxu0 0
        %1656 = vmatprep.subr.bf16.mxu0 0
        %1657 = vmatpush1.bf16.xpose.msra.mxu0 0
        %1658 = vmatprep.subr.bf16.mxu0 0
        %1659 = vmatpush1.bf16.xpose.msra.mxu0 0
        %1660 = vmatprep.subr.bf16.mxu0 0
        %1661 = vmatpush1.bf16.xpose.msra.mxu0 0
        %1662 = vmatprep.subr.bf16.mxu0 0
        %1663 = vmatpush1.bf16.xpose.msra.mxu0 0
        %1664 = vmatprep.subr.bf16.mxu0 0
        %1665 = vmatpush1.bf16.xpose.msra.mxu0 0
        %1666 = vmatprep.subr.bf16.mxu0 0
        %1667 = vmatpush1.bf16.xpose.msra.mxu0 0
        %1668 = vmatprep.subr.bf16.mxu0 0
        %1669 = vmatpush1.bf16.xpose.msra.mxu0 0
        %1670 = vmatprep.subr.bf16.mxu0 0
        %1671 = vmatpush1.bf16.xpose.msra.mxu0 0
        %1672 = vmatprep.subr.bf16.mxu0 0
        %1673 = vmatpush1.bf16.xpose.msra.mxu0 0
        %1674 = vmatprep.subr.bf16.mxu0 0
        %1675 = vmatpush1.bf16.xpose.msra.mxu0 0
        %1676 = vmatprep.mubr.bf16.mxu0 0
        %1677 = vmatmul.mubr.bf16.gmra.mrb[0].mxu0 %v1633
        %v1678 = vpop.f32.mrb[0].mxu0
        %v1679 = vadd.f32 %v1194, %v1678
        %v1680 = vpop.f32.mrb[0].mxu0
        %v1681 = vpop.f32.mrb[0].mxu0
        %v1682 = vadd.f32 %v1195, %v1681
        %v1683 = vpop.f32.mrb[0].mxu0
        %1684 = vmatprep.mubr.bf16.mxu0 0
        %1685 = vmatmul.mubr.bf16.gmra.mrb[0].mxu0 %v1636
        %v1686 = vpop.f32.mrb[0].mxu0
        %v1687 = vadd.f32 %v1196, %v1686
        %v1688 = vpop.f32.mrb[0].mxu0
        %v1689 = vpop.f32.mrb[0].mxu0
        %v1690 = vpop.f32.mrb[0].mxu0
        %1691 = vdwg.mxu0
        %vm1692 = vcmask 195584
        %v1693 = vsel %vm1692, %v1619, -inf
        %1694 = vmax.xlane.f32.xlu0 %v1693
        %v1695 = vpop.xlane.xlu0 %1694
        %v1696 = vsel %vm1692, %v1622, -inf
        %1697 = vmax.xlane.f32.xlu0 %v1696
        %v1698 = vpop.xlane.xlu0 %1697
        %v1699 = vsel %vm1692, %v1627, -inf
        %1700 = vmax.xlane.f32.xlu0 %v1699
        %v1701 = vpop.xlane.xlu0 %1700
        %v1702 = vsel %vm1692, %v1679, -inf
        %1703 = vmax.xlane.f32.xlu0 %v1702
        %v1704 = vpop.xlane.xlu0 %1703
        %v1705 = vsel %vm1692, %v1682, -inf
        %1706 = vmax.xlane.f32.xlu0 %v1705
        %v1707 = vpop.xlane.xlu0 %1706
        %v1708 = vsel %vm1692, %v1687, -inf
        %1709 = vmax.xlane.f32.xlu0 %v1708
        %v1710 = vpop.xlane.xlu0 %1709
        %v1711 = vsub.f32 %v1619, %v1695
        %v1712 = vsub.f32 %v1622, %v1698
        %v1713 = vsub.f32 %v1627, %v1701
        %v1714 = vsub.f32 %v1679, %v1704
        %v1715 = vsub.f32 %v1682, %v1707
        %v1716 = vsub.f32 %v1687, %v1710
        %v1717 = vmul.f32 %v1711, 1.442695
        %v1718 = vpow.pop %v1717
        %v1719 = vmul.f32 %v1712, 1.442695
        %v1720 = vpow.pop %v1719
        %v1721 = vmul.f32 %v1713, 1.442695
        %v1722 = vpow.pop %v1721
        %v1723 = vmul.f32 %v1714, 1.442695
        %v1724 = vpow.pop %v1723
        %v1725 = vmul.f32 %v1715, 1.442695
        %v1726 = vpow.pop %v1725
        %v1727 = vmul.f32 %v1716, 1.442695
        %v1728 = vpow.pop %v1727
        %v1729 = vsel %vm1692, %v1718, 0.0
        %1730 = vadd.xlane.f32.xlu0 %v1729
        %v1731 = vpop.xlane.xlu0 %1730
        %v1732 = vsel %vm1692, %v1720, 0.0
        %1733 = vadd.xlane.f32.xlu0 %v1732
        %v1734 = vpop.xlane.xlu0 %1733
        %v1735 = vsel %vm1692, %v1722, 0.0
        %1736 = vadd.xlane.f32.xlu0 %v1735
        %v1737 = vpop.xlane.xlu0 %1736
        %v1738 = vsel %vm1692, %v1724, 0.0
        %1739 = vadd.xlane.f32.xlu0 %v1738
        %v1740 = vpop.xlane.xlu0 %1739
        %v1741 = vsel %vm1692, %v1726, 0.0
        %1742 = vadd.xlane.f32.xlu0 %v1741
        %v1743 = vpop.xlane.xlu0 %1742
        %v1744 = vsel %vm1692, %v1728, 0.0
        %1745 = vadd.xlane.f32.xlu0 %v1744
        %v1746 = vpop.xlane.xlu0 %1745
        %v1747 = vrcp.pop %v1731
        %v1748 = vmul.f32 1.0, %v1747
        %v1749 = vrcp.pop %v1734
        %v1750 = vmul.f32 1.0, %v1749
        %v1751 = vrcp.pop %v1737
        %v1752 = vmul.f32 1.0, %v1751
        %v1753 = vrcp.pop %v1740
        %v1754 = vmul.f32 1.0, %v1753
        %v1755 = vrcp.pop %v1743
        %v1756 = vmul.f32 1.0, %v1755
        %v1757 = vrcp.pop %v1746
        %v1758 = vmul.f32 1.0, %v1757
        %v1759 = vmul.f32 %v1718, %v1748
        %v1760 = vmul.f32 %v1720, %v1750
        %v1761 = vmul.f32 %v1722, %v1752
        %v1762 = vmul.f32 %v1724, %v1754
        %v1763 = vmul.f32 %v1726, %v1756
        %v1764 = vmul.f32 %v1728, %v1758
        %v1765 = vpack.c.bf16 %v1760, %v1759
        %v1766 = vpack.c.bf16 %v1761, %v1761
        %v1767 = vpack.c.bf16 %v1763, %v1762
        %v1768 = vpack.c.bf16 %v1764, %v1764
        %v1770 = vsel %vm1692, %v1765, 0
        %v1773 = vsel %vm1692, %v1766, 0
        %vm1775 = vcmask 1043456
        %v1777 = vsel %vm1775, %v1568, 0
        %1779 = vmatprep.subr.bf16.mxu0 0
        %1780 = vmatpush1.bf16.msra.mxu0 %v1567
        %1781 = vmatprep.subr.bf16.mxu0 0
        %1782 = vmatpush1.bf16.msra.mxu0 %v1777
        %1783 = vmatprep.subr.bf16.mxu0 0
        %1784 = vmatpush1.bf16.msra.mxu0 0
        %1785 = vmatprep.subr.bf16.mxu0 0
        %1786 = vmatpush1.bf16.msra.mxu0 0
        %1787 = vmatprep.subr.bf16.mxu0 0
        %1788 = vmatpush1.bf16.msra.mxu0 0
        %1789 = vmatprep.subr.bf16.mxu0 0
        %1790 = vmatpush1.bf16.msra.mxu0 0
        %1791 = vmatprep.subr.bf16.mxu0 0
        %1792 = vmatpush1.bf16.msra.mxu0 0
        %1793 = vmatprep.subr.bf16.mxu0 0
        %1794 = vmatpush1.bf16.msra.mxu0 0
        %1795 = vmatprep.subr.bf16.mxu0 0
        %1796 = vmatpush1.bf16.msra.mxu0 0
        %1797 = vmatprep.subr.bf16.mxu0 0
        %1798 = vmatpush1.bf16.msra.mxu0 0
        %1799 = vmatprep.subr.bf16.mxu0 0
        %1800 = vmatpush1.bf16.msra.mxu0 0
        %1801 = vmatprep.subr.bf16.mxu0 0
        %1802 = vmatpush1.bf16.msra.mxu0 0
        %1803 = vmatprep.subr.bf16.mxu0 0
        %1804 = vmatpush1.bf16.msra.mxu0 0
        %1805 = vmatprep.subr.bf16.mxu0 0
        %1806 = vmatpush1.bf16.msra.mxu0 0
        %1807 = vmatprep.subr.bf16.mxu0 0
        %1808 = vmatpush1.bf16.msra.mxu0 0
        %1809 = vmatprep.subr.bf16.mxu0 0
        %1810 = vmatpush1.bf16.msra.mxu0 0
        %1811 = vmatprep.mubr.bf16.mxu0 0
        %1812 = vmatmul.mubr.bf16.gmra.mrb[0].mxu0 %v1770
        %v1813 = vpop.f32.mrb[0].mxu0
        %v1814 = vadd.f32 0.0, %v1813
        %v1815 = vpop.f32.mrb[0].mxu0
        %v1816 = vpop.f32.mrb[0].mxu0
        %v1817 = vadd.f32 0.0, %v1816
        %v1818 = vpop.f32.mrb[0].mxu0
        %1819 = vmatprep.mubr.bf16.mxu0 0
        %1820 = vmatmul.mubr.bf16.gmra.mrb[0].mxu0 %v1773
        %v1821 = vpop.f32.mrb[0].mxu0
        %v1822 = vadd.f32 0.0, %v1821
        %v1823 = vpop.f32.mrb[0].mxu0
        %v1824 = vpop.f32.mrb[0].mxu0
        %v1825 = vpop.f32.mrb[0].mxu0
        %1826 = vdwg.mxu0
        %v1828 = vsel %vm1692, %v1767, 0
        %v1831 = vsel %vm1692, %v1768, 0
        %v1834 = vsel %vm1775, %v1570, 0
        %1836 = vmatprep.subr.bf16.mxu0 0
        %1837 = vmatpush1.bf16.msra.mxu0 %v1569
        %1838 = vmatprep.subr.bf16.mxu0 0
        %1839 = vmatpush1.bf16.msra.mxu0 %v1834
        %1840 = vmatprep.subr.bf16.mxu0 0
        %1841 = vmatpush1.bf16.msra.mxu0 0
        %1842 = vmatprep.subr.bf16.mxu0 0
        %1843 = vmatpush1.bf16.msra.mxu0 0
        %1844 = vmatprep.subr.bf16.mxu0 0
        %1845 = vmatpush1.bf16.msra.mxu0 0
        %1846 = vmatprep.subr.bf16.mxu0 0
        %1847 = vmatpush1.bf16.msra.mxu0 0
        %1848 = vmatprep.subr.bf16.mxu0 0
        %1849 = vmatpush1.bf16.msra.mxu0 0
        %1850 = vmatprep.subr.bf16.mxu0 0
        %1851 = vmatpush1.bf16.msra.mxu0 0
        %1852 = vmatprep.subr.bf16.mxu0 0
        %1853 = vmatpush1.bf16.msra.mxu0 0
        %1854 = vmatprep.subr.bf16.mxu0 0
        %1855 = vmatpush1.bf16.msra.mxu0 0
        %1856 = vmatprep.subr.bf16.mxu0 0
        %1857 = vmatpush1.bf16.msra.mxu0 0
        %1858 = vmatprep.subr.bf16.mxu0 0
        %1859 = vmatpush1.bf16.msra.mxu0 0
        %1860 = vmatprep.subr.bf16.mxu0 0
        %1861 = vmatpush1.bf16.msra.mxu0 0
        %1862 = vmatprep.subr.bf16.mxu0 0
        %1863 = vmatpush1.bf16.msra.mxu0 0
        %1864 = vmatprep.subr.bf16.mxu0 0
        %1865 = vmatpush1.bf16.msra.mxu0 0
        %1866 = vmatprep.subr.bf16.mxu0 0
        %1867 = vmatpush1.bf16.msra.mxu0 0
        %1868 = vmatprep.mubr.bf16.mxu0 0
        %1869 = vmatmul.mubr.bf16.gmra.mrb[0].mxu0 %v1828
        %v1870 = vpop.f32.mrb[0].mxu0
        %v1871 = vadd.f32 0.0, %v1870
        %v1872 = vpop.f32.mrb[0].mxu0
        %v1873 = vpop.f32.mrb[0].mxu0
        %v1874 = vadd.f32 0.0, %v1873
        %v1875 = vpop.f32.mrb[0].mxu0
        %1876 = vmatprep.mubr.bf16.mxu0 0
        %1877 = vmatmul.mubr.bf16.gmra.mrb[0].mxu0 %v1831
        %v1878 = vpop.f32.mrb[0].mxu0
        %v1879 = vadd.f32 0.0, %v1878
        %v1880 = vpop.f32.mrb[0].mxu0
        %v1881 = vpop.f32.mrb[0].mxu0
        %v1882 = vpop.f32.mrb[0].mxu0
        %1883 = vdwg.mxu0
        %v1884 = vpack.c.bf16 %v1817, %v1814
        %v1885 = vpack.c.bf16 %v1871, %v1822
        %v1886 = vpack.c.bf16 %v1879, %v1874
        %1889 = vrot.lane.b32.xlu0 %v1559, 120
        %v1890 = vpop.permute.xlu0 %1889
        %1891 = vrot.lane.b32.xlu0 %v1560, 120
        %v1892 = vpop.permute.xlu0 %1891
        %1895 = vrot.lane.b32.xlu0 %v1563, 120
        %v1896 = vpop.permute.xlu0 %1895
        %1897 = vrot.lane.b32.xlu0 %v1564, 120
        %v1898 = vpop.permute.xlu0 %1897
        %v1900 = vsel %vm1571, %v1890, 0
        %v1903 = vsel %vm1571, %v1892, 0
        %v1906 = vsel %vm1571, %v1896, 0
        %v1909 = vsel %vm1571, %v1898, 0
        %1911 = vmatprep.subr.bf16.mxu0 0
        %1912 = vmatpush1.bf16.xpose.msra.mxu0 %v1906
        %1913 = vmatprep.subr.bf16.mxu0 0
        %1914 = vmatpush1.bf16.xpose.msra.mxu0 %v1909
        %1915 = vmatprep.subr.bf16.mxu0 0
        %1916 = vmatpush1.bf16.xpose.msra.mxu0 0
        %1917 = vmatprep.subr.bf16.mxu0 0
        %1918 = vmatpush1.bf16.xpose.msra.mxu0 0
        %1919 = vmatprep.subr.bf16.mxu0 0
        %1920 = vmatpush1.bf16.xpose.msra.mxu0 0
        %1921 = vmatprep.subr.bf16.mxu0 0
        %1922 = vmatpush1.bf16.xpose.msra.mxu0 0
        %1923 = vmatprep.subr.bf16.mxu0 0
        %1924 = vmatpush1.bf16.xpose.msra.mxu0 0
        %1925 = vmatprep.subr.bf16.mxu0 0
        %1926 = vmatpush1.bf16.xpose.msra.mxu0 0
        %1927 = vmatprep.subr.bf16.mxu0 0
        %1928 = vmatpush1.bf16.xpose.msra.mxu0 0
        %1929 = vmatprep.subr.bf16.mxu0 0
        %1930 = vmatpush1.bf16.xpose.msra.mxu0 0
        %1931 = vmatprep.subr.bf16.mxu0 0
        %1932 = vmatpush1.bf16.xpose.msra.mxu0 0
        %1933 = vmatprep.subr.bf16.mxu0 0
        %1934 = vmatpush1.bf16.xpose.msra.mxu0 0
        %1935 = vmatprep.subr.bf16.mxu0 0
        %1936 = vmatpush1.bf16.xpose.msra.mxu0 0
        %1937 = vmatprep.subr.bf16.mxu0 0
        %1938 = vmatpush1.bf16.xpose.msra.mxu0 0
        %1939 = vmatprep.subr.bf16.mxu0 0
        %1940 = vmatpush1.bf16.xpose.msra.mxu0 0
        %1941 = vmatprep.subr.bf16.mxu0 0
        %1942 = vmatpush1.bf16.xpose.msra.mxu0 0
        %1943 = vmatprep.mubr.bf16.mxu0 0
        %1944 = vmatmul.mubr.bf16.gmra.mrb[0].mxu0 %v1900
        %v1945 = vpop.f32.mrb[0].mxu0
        %v1946 = vadd.f32 %v1194, %v1945
        %v1947 = vpop.f32.mrb[0].mxu0
        %v1948 = vpop.f32.mrb[0].mxu0
        %v1949 = vadd.f32 %v1195, %v1948
        %v1950 = vpop.f32.mrb[0].mxu0
        %1951 = vmatprep.mubr.bf16.mxu0 0
        %1952 = vmatmul.mubr.bf16.gmra.mrb[0].mxu0 %v1903
        %v1953 = vpop.f32.mrb[0].mxu0
        %v1954 = vadd.f32 %v1196, %v1953
        %v1955 = vpop.f32.mrb[0].mxu0
        %v1956 = vpop.f32.mrb[0].mxu0
        %v1957 = vpop.f32.mrb[0].mxu0
        %1958 = vdwg.mxu0
        %1961 = vrot.lane.b32.xlu0 %v1561, 120
        %v1962 = vpop.permute.xlu0 %1961
        %1963 = vrot.lane.b32.xlu0 %v1562, 120
        %v1964 = vpop.permute.xlu0 %1963
        %1967 = vrot.lane.b32.xlu0 %v1565, 120
        %v1968 = vpop.permute.xlu0 %1967
        %1969 = vrot.lane.b32.xlu0 %v1566, 120
        %v1970 = vpop.permute.xlu0 %1969
        %v1972 = vsel %vm1571, %v1962, 0
        %v1975 = vsel %vm1571, %v1964, 0
        %v1978 = vsel %vm1571, %v1968, 0
        %v1981 = vsel %vm1571, %v1970, 0
        %1983 = vmatprep.subr.bf16.mxu0 0
        %1984 = vmatpush1.bf16.xpose.msra.mxu0 %v1978
        %1985 = vmatprep.subr.bf16.mxu0 0
        %1986 = vmatpush1.bf16.xpose.msra.mxu0 %v1981
        %1987 = vmatprep.subr.bf16.mxu0 0
        %1988 = vmatpush1.bf16.xpose.msra.mxu0 0
        %1989 = vmatprep.subr.bf16.mxu0 0
        %1990 = vmatpush1.bf16.xpose.msra.mxu0 0
        %1991 = vmatprep.subr.bf16.mxu0 0
        %1992 = vmatpush1.bf16.xpose.msra.mxu0 0
        %1993 = vmatprep.subr.bf16.mxu0 0
        %1994 = vmatpush1.bf16.xpose.msra.mxu0 0
        %1995 = vmatprep.subr.bf16.mxu0 0
        %1996 = vmatpush1.bf16.xpose.msra.mxu0 0
        %1997 = vmatprep.subr.bf16.mxu0 0
        %1998 = vmatpush1.bf16.xpose.msra.mxu0 0
        %1999 = vmatprep.subr.bf16.mxu0 0
        %2000 = vmatpush1.bf16.xpose.msra.mxu0 0
        %2001 = vmatprep.subr.bf16.mxu0 0
        %2002 = vmatpush1.bf16.xpose.msra.mxu0 0
        %2003 = vmatprep.subr.bf16.mxu0 0
        %2004 = vmatpush1.bf16.xpose.msra.mxu0 0
        %2005 = vmatprep.subr.bf16.mxu0 0
        %2006 = vmatpush1.bf16.xpose.msra.mxu0 0
        %2007 = vmatprep.subr.bf16.mxu0 0
        %2008 = vmatpush1.bf16.xpose.msra.mxu0 0
        %2009 = vmatprep.subr.bf16.mxu0 0
        %2010 = vmatpush1.bf16.xpose.msra.mxu0 0
        %2011 = vmatprep.subr.bf16.mxu0 0
        %2012 = vmatpush1.bf16.xpose.msra.mxu0 0
        %2013 = vmatprep.subr.bf16.mxu0 0
        %2014 = vmatpush1.bf16.xpose.msra.mxu0 0
        %2015 = vmatprep.mubr.bf16.mxu0 0
        %2016 = vmatmul.mubr.bf16.gmra.mrb[0].mxu0 %v1972
        %v2017 = vpop.f32.mrb[0].mxu0
        %v2018 = vadd.f32 %v1194, %v2017
        %v2019 = vpop.f32.mrb[0].mxu0
        %v2020 = vpop.f32.mrb[0].mxu0
        %v2021 = vadd.f32 %v1195, %v2020
        %v2022 = vpop.f32.mrb[0].mxu0
        %2023 = vmatprep.mubr.bf16.mxu0 0
        %2024 = vmatmul.mubr.bf16.gmra.mrb[0].mxu0 %v1975
        %v2025 = vpop.f32.mrb[0].mxu0
        %v2026 = vadd.f32 %v1196, %v2025
        %v2027 = vpop.f32.mrb[0].mxu0
        %v2028 = vpop.f32.mrb[0].mxu0
        %v2029 = vpop.f32.mrb[0].mxu0
        %2030 = vdwg.mxu0
        %v2031 = vsel %vm1692, %v1946, -inf
        %2032 = vmax.xlane.f32.xlu0 %v2031
        %v2033 = vpop.xlane.xlu0 %2032
        %v2034 = vsel %vm1692, %v1949, -inf
        %2035 = vmax.xlane.f32.xlu0 %v2034
        %v2036 = vpop.xlane.xlu0 %2035
        %v2037 = vsel %vm1692, %v1954, -inf
        %2038 = vmax.xlane.f32.xlu0 %v2037
        %v2039 = vpop.xlane.xlu0 %2038
        %v2040 = vsel %vm1692, %v2018, -inf
        %2041 = vmax.xlane.f32.xlu0 %v2040
        %v2042 = vpop.xlane.xlu0 %2041
        %v2043 = vsel %vm1692, %v2021, -inf
        %2044 = vmax.xlane.f32.xlu0 %v2043
        %v2045 = vpop.xlane.xlu0 %2044
        %v2046 = vsel %vm1692, %v2026, -inf
        %2047 = vmax.xlane.f32.xlu0 %v2046
        %v2048 = vpop.xlane.xlu0 %2047
        %v2049 = vsub.f32 %v1946, %v2033
        %v2050 = vsub.f32 %v1949, %v2036
        %v2051 = vsub.f32 %v1954, %v2039
        %v2052 = vsub.f32 %v2018, %v2042
        %v2053 = vsub.f32 %v2021, %v2045
        %v2054 = vsub.f32 %v2026, %v2048
        %v2055 = vmul.f32 %v2049, 1.442695
        %v2056 = vpow.pop %v2055
        %v2057 = vmul.f32 %v2050, 1.442695
        %v2058 = vpow.pop %v2057
        %v2059 = vmul.f32 %v2051, 1.442695
        %v2060 = vpow.pop %v2059
        %v2061 = vmul.f32 %v2052, 1.442695
        %v2062 = vpow.pop %v2061
        %v2063 = vmul.f32 %v2053, 1.442695
        %v2064 = vpow.pop %v2063
        %v2065 = vmul.f32 %v2054, 1.442695
        %v2066 = vpow.pop %v2065
        %v2067 = vsel %vm1692, %v2056, 0.0
        %2068 = vadd.xlane.f32.xlu0 %v2067
        %v2069 = vpop.xlane.xlu0 %2068
        %v2070 = vsel %vm1692, %v2058, 0.0
        %2071 = vadd.xlane.f32.xlu0 %v2070
        %v2072 = vpop.xlane.xlu0 %2071
        %v2073 = vsel %vm1692, %v2060, 0.0
        %2074 = vadd.xlane.f32.xlu0 %v2073
        %v2075 = vpop.xlane.xlu0 %2074
        %v2076 = vsel %vm1692, %v2062, 0.0
        %2077 = vadd.xlane.f32.xlu0 %v2076
        %v2078 = vpop.xlane.xlu0 %2077
        %v2079 = vsel %vm1692, %v2064, 0.0
        %2080 = vadd.xlane.f32.xlu0 %v2079
        %v2081 = vpop.xlane.xlu0 %2080
        %v2082 = vsel %vm1692, %v2066, 0.0
        %2083 = vadd.xlane.f32.xlu0 %v2082
        %v2084 = vpop.xlane.xlu0 %2083
        %v2085 = vrcp.pop %v2069
        %v2086 = vmul.f32 1.0, %v2085
        %v2087 = vrcp.pop %v2072
        %v2088 = vmul.f32 1.0, %v2087
        %v2089 = vrcp.pop %v2075
        %v2090 = vmul.f32 1.0, %v2089
        %v2091 = vrcp.pop %v2078
        %v2092 = vmul.f32 1.0, %v2091
        %v2093 = vrcp.pop %v2081
        %v2094 = vmul.f32 1.0, %v2093
        %v2095 = vrcp.pop %v2084
        %v2096 = vmul.f32 1.0, %v2095
        %v2097 = vmul.f32 %v2056, %v2086
        %v2098 = vmul.f32 %v2058, %v2088
        %v2099 = vmul.f32 %v2060, %v2090
        %v2100 = vmul.f32 %v2062, %v2092
        %v2101 = vmul.f32 %v2064, %v2094
        %v2102 = vmul.f32 %v2066, %v2096
        %v2103 = vpack.c.bf16 %v2098, %v2097
        %v2104 = vpack.c.bf16 %v2099, %v2099
        %v2105 = vpack.c.bf16 %v2101, %v2100
        %v2106 = vpack.c.bf16 %v2102, %v2102
        %2109 = vrot.lane.b32.xlu0 %v1567, 120
        %v2110 = vpop.permute.xlu0 %2109
        %2111 = vrot.lane.b32.xlu0 %v1568, 120
        %v2112 = vpop.permute.xlu0 %2111
        %v2115 = vsel %vm1692, %v2103, 0
        %v2118 = vsel %vm1692, %v2104, 0
        %v2121 = vsel %vm1775, %v2112, 0
        %2123 = vmatprep.subr.bf16.mxu0 0
        %2124 = vmatpush1.bf16.msra.mxu0 %v2110
        %2125 = vmatprep.subr.bf16.mxu0 0
        %2126 = vmatpush1.bf16.msra.mxu0 %v2121
        %2127 = vmatprep.subr.bf16.mxu0 0
        %2128 = vmatpush1.bf16.msra.mxu0 0
        %2129 = vmatprep.subr.bf16.mxu0 0
        %2130 = vmatpush1.bf16.msra.mxu0 0
        %2131 = vmatprep.subr.bf16.mxu0 0
        %2132 = vmatpush1.bf16.msra.mxu0 0
        %2133 = vmatprep.subr.bf16.mxu0 0
        %2134 = vmatpush1.bf16.msra.mxu0 0
        %2135 = vmatprep.subr.bf16.mxu0 0
        %2136 = vmatpush1.bf16.msra.mxu0 0
        %2137 = vmatprep.subr.bf16.mxu0 0
        %2138 = vmatpush1.bf16.msra.mxu0 0
        %2139 = vmatprep.subr.bf16.mxu0 0
        %2140 = vmatpush1.bf16.msra.mxu0 0
        %2141 = vmatprep.subr.bf16.mxu0 0
        %2142 = vmatpush1.bf16.msra.mxu0 0
        %2143 = vmatprep.subr.bf16.mxu0 0
        %2144 = vmatpush1.bf16.msra.mxu0 0
        %2145 = vmatprep.subr.bf16.mxu0 0
        %2146 = vmatpush1.bf16.msra.mxu0 0
        %2147 = vmatprep.subr.bf16.mxu0 0
        %2148 = vmatpush1.bf16.msra.mxu0 0
        %2149 = vmatprep.subr.bf16.mxu0 0
        %2150 = vmatpush1.bf16.msra.mxu0 0
        %2151 = vmatprep.subr.bf16.mxu0 0
        %2152 = vmatpush1.bf16.msra.mxu0 0
        %2153 = vmatprep.subr.bf16.mxu0 0
        %2154 = vmatpush1.bf16.msra.mxu0 0
        %2155 = vmatprep.mubr.bf16.mxu0 0
        %2156 = vmatmul.mubr.bf16.gmra.mrb[0].mxu0 %v2115
        %v2157 = vpop.f32.mrb[0].mxu0
        %v2158 = vadd.f32 0.0, %v2157
        %v2159 = vpop.f32.mrb[0].mxu0
        %v2160 = vpop.f32.mrb[0].mxu0
        %v2161 = vadd.f32 0.0, %v2160
        %v2162 = vpop.f32.mrb[0].mxu0
        %2163 = vmatprep.mubr.bf16.mxu0 0
        %2164 = vmatmul.mubr.bf16.gmra.mrb[0].mxu0 %v2118
        %v2165 = vpop.f32.mrb[0].mxu0
        %v2166 = vadd.f32 0.0, %v2165
        %v2167 = vpop.f32.mrb[0].mxu0
        %v2168 = vpop.f32.mrb[0].mxu0
        %v2169 = vpop.f32.mrb[0].mxu0
        %2170 = vdwg.mxu0
        %2173 = vrot.lane.b32.xlu0 %v1569, 120
        %v2174 = vpop.permute.xlu0 %2173
        %2175 = vrot.lane.b32.xlu0 %v1570, 120
        %v2176 = vpop.permute.xlu0 %2175
        %v2179 = vsel %vm1692, %v2105, 0
        %v2182 = vsel %vm1692, %v2106, 0
        %v2185 = vsel %vm1775, %v2176, 0
        %2187 = vmatprep.subr.bf16.mxu0 0
        %2188 = vmatpush1.bf16.msra.mxu0 %v2174
        %2189 = vmatprep.subr.bf16.mxu0 0
        %2190 = vmatpush1.bf16.msra.mxu0 %v2185
        %2191 = vmatprep.subr.bf16.mxu0 0
        %2192 = vmatpush1.bf16.msra.mxu0 0
        %2193 = vmatprep.subr.bf16.mxu0 0
        %2194 = vmatpush1.bf16.msra.mxu0 0
        %2195 = vmatprep.subr.bf16.mxu0 0
        %2196 = vmatpush1.bf16.msra.mxu0 0
        %2197 = vmatprep.subr.bf16.mxu0 0
        %2198 = vmatpush1.bf16.msra.mxu0 0
        %2199 = vmatprep.subr.bf16.mxu0 0
        %2200 = vmatpush1.bf16.msra.mxu0 0
        %2201 = vmatprep.subr.bf16.mxu0 0
        %2202 = vmatpush1.bf16.msra.mxu0 0
        %2203 = vmatprep.subr.bf16.mxu0 0
        %2204 = vmatpush1.bf16.msra.mxu0 0
        %2205 = vmatprep.subr.bf16.mxu0 0
        %2206 = vmatpush1.bf16.msra.mxu0 0
        %2207 = vmatprep.subr.bf16.mxu0 0
        %2208 = vmatpush1.bf16.msra.mxu0 0
        %2209 = vmatprep.subr.bf16.mxu0 0
        %2210 = vmatpush1.bf16.msra.mxu0 0
        %2211 = vmatprep.subr.bf16.mxu0 0
        %2212 = vmatpush1.bf16.msra.mxu0 0
        %2213 = vmatprep.subr.bf16.mxu0 0
        %2214 = vmatpush1.bf16.msra.mxu0 0
        %2215 = vmatprep.subr.bf16.mxu0 0
        %2216 = vmatpush1.bf16.msra.mxu0 0
        %2217 = vmatprep.subr.bf16.mxu0 0
        %2218 = vmatpush1.bf16.msra.mxu0 0
        %2219 = vmatprep.mubr.bf16.mxu0 0
        %2220 = vmatmul.mubr.bf16.gmra.mrb[0].mxu0 %v2179
        %v2221 = vpop.f32.mrb[0].mxu0
        %v2222 = vadd.f32 0.0, %v2221
        %v2223 = vpop.f32.mrb[0].mxu0
        %v2224 = vpop.f32.mrb[0].mxu0
        %v2225 = vadd.f32 0.0, %v2224
        %v2226 = vpop.f32.mrb[0].mxu0
        %2227 = vmatprep.mubr.bf16.mxu0 0
        %2228 = vmatmul.mubr.bf16.gmra.mrb[0].mxu0 %v2182
        %v2229 = vpop.f32.mrb[0].mxu0
        %v2230 = vadd.f32 0.0, %v2229
        %v2231 = vpop.f32.mrb[0].mxu0
        %v2232 = vpop.f32.mrb[0].mxu0
        %v2233 = vpop.f32.mrb[0].mxu0
        %2234 = vdwg.mxu0
        %v2235 = vpack.c.bf16 %v2161, %v2158
        %v2236 = vpack.c.bf16 %v2222, %v2166
        %v2237 = vpack.c.bf16 %v2230, %v2225
        %v2239 = vsel %vm1571, %v2235, 0
        %v2242 = vsel %vm1571, %v2236, 0
        %v2245 = vsel %vm1571, %v2237, 0
        %v2248 = vsel %vm1775, %v1556, 0
        %2250 = vmatprep.subr.bf16.mxu0 0
        %2251 = vmatpush1.bf16.msra.mxu0 %v2248
        %2252 = vmatprep.subr.bf16.mxu0 0
        %2253 = vmatpush1.bf16.msra.mxu0 0
        %2254 = vmatprep.subr.bf16.mxu0 0
        %2255 = vmatpush1.bf16.msra.mxu0 0
        %2256 = vmatprep.subr.bf16.mxu0 0
        %2257 = vmatpush1.bf16.msra.mxu0 0
        %2258 = vmatprep.subr.bf16.mxu0 0
        %2259 = vmatpush1.bf16.msra.mxu0 0
        %2260 = vmatprep.subr.bf16.mxu0 0
        %2261 = vmatpush1.bf16.msra.mxu0 0
        %2262 = vmatprep.subr.bf16.mxu0 0
        %2263 = vmatpush1.bf16.msra.mxu0 0
        %2264 = vmatprep.subr.bf16.mxu0 0
        %2265 = vmatpush1.bf16.msra.mxu0 0
        %2266 = vmatprep.subr.bf16.mxu0 0
        %2267 = vmatpush1.bf16.msra.mxu0 0
        %2268 = vmatprep.subr.bf16.mxu0 0
        %2269 = vmatpush1.bf16.msra.mxu0 0
        %2270 = vmatprep.subr.bf16.mxu0 0
        %2271 = vmatpush1.bf16.msra.mxu0 0
        %2272 = vmatprep.subr.bf16.mxu0 0
        %2273 = vmatpush1.bf16.msra.mxu0 0
        %2274 = vmatprep.subr.bf16.mxu0 0
        %2275 = vmatpush1.bf16.msra.mxu0 0
        %2276 = vmatprep.subr.bf16.mxu0 0
        %2277 = vmatpush1.bf16.msra.mxu0 0
        %2278 = vmatprep.subr.bf16.mxu0 0
        %2279 = vmatpush1.bf16.msra.mxu0 0
        %2280 = vmatprep.subr.bf16.mxu0 0
        %2281 = vmatpush1.bf16.msra.mxu0 0
        %2282 = vmatprep.mubr.bf16.mxu0 0
        %2283 = vmatmul.mubr.bf16.gmra.mrb[0].mxu0 %v2239
        %v2284 = vpop.f32.mrb[0].mxu0
        %v2285 = vadd.f32 0.0, %v2284
        %v2286 = vpop.f32.mrb[0].mxu0
        %v2287 = vpop.f32.mrb[0].mxu0
        %v2288 = vadd.f32 0.0, %v2287
        %v2289 = vpop.f32.mrb[0].mxu0
        %2290 = vmatprep.mubr.bf16.mxu0 0
        %2291 = vmatmul.mubr.bf16.gmra.mrb[0].mxu0 %v2242
        %v2292 = vpop.f32.mrb[0].mxu0
        %v2293 = vadd.f32 0.0, %v2292
        %v2294 = vpop.f32.mrb[0].mxu0
        %v2295 = vpop.f32.mrb[0].mxu0
        %v2296 = vadd.f32 0.0, %v2295
        %v2297 = vpop.f32.mrb[0].mxu0
        %2298 = vmatprep.mubr.bf16.mxu0 0
        %2299 = vmatmul.mubr.bf16.gmra.mrb[0].mxu0 %v2245
        %v2300 = vpop.f32.mrb[0].mxu0
        %v2301 = vadd.f32 0.0, %v2300
        %v2302 = vpop.f32.mrb[0].mxu0
        %v2303 = vpop.f32.mrb[0].mxu0
        %v2304 = vadd.f32 0.0, %v2303
        %v2305 = vpop.f32.mrb[0].mxu0
        %2306 = vdwg.mxu0
        %v2308 = vsel %vm1571, %v1884, 0
        %v2311 = vsel %vm1571, %v1885, 0
        %v2314 = vsel %vm1571, %v1886, 0
        %v2317 = vsel %vm1775, %v1555, 0
        %2319 = vmatprep.subr.bf16.mxu0 0
        %2320 = vmatpush1.bf16.msra.mxu0 %v2317
        %2321 = vmatprep.subr.bf16.mxu0 0
        %2322 = vmatpush1.bf16.msra.mxu0 0
        %2323 = vmatprep.subr.bf16.mxu0 0
        %2324 = vmatpush1.bf16.msra.mxu0 0
        %2325 = vmatprep.subr.bf16.mxu0 0
        %2326 = vmatpush1.bf16.msra.mxu0 0
        %2327 = vmatprep.subr.bf16.mxu0 0
        %2328 = vmatpush1.bf16.msra.mxu0 0
        %2329 = vmatprep.subr.bf16.mxu0 0
        %2330 = vmatpush1.bf16.msra.mxu0 0
        %2331 = vmatprep.subr.bf16.mxu0 0
        %2332 = vmatpush1.bf16.msra.mxu0 0
        %2333 = vmatprep.subr.bf16.mxu0 0
        %2334 = vmatpush1.bf16.msra.mxu0 0
        %2335 = vmatprep.subr.bf16.mxu0 0
        %2336 = vmatpush1.bf16.msra.mxu0 0
        %2337 = vmatprep.subr.bf16.mxu0 0
        %2338 = vmatpush1.bf16.msra.mxu0 0
        %2339 = vmatprep.subr.bf16.mxu0 0
        %2340 = vmatpush1.bf16.msra.mxu0 0
        %2341 = vmatprep.subr.bf16.mxu0 0
        %2342 = vmatpush1.bf16.msra.mxu0 0
        %2343 = vmatprep.subr.bf16.mxu0 0
        %2344 = vmatpush1.bf16.msra.mxu0 0
        %2345 = vmatprep.subr.bf16.mxu0 0
        %2346 = vmatpush1.bf16.msra.mxu0 0
        %2347 = vmatprep.subr.bf16.mxu0 0
        %2348 = vmatpush1.bf16.msra.mxu0 0
        %2349 = vmatprep.subr.bf16.mxu0 0
        %2350 = vmatpush1.bf16.msra.mxu0 0
        %2351 = vmatprep.mubr.bf16.mxu0 0
        %2352 = vmatmul.mubr.bf16.gmra.mrb[0].mxu0 %v2308
        %v2353 = vpop.f32.mrb[0].mxu0
        %v2354 = vadd.f32 %v2285, %v2353
        %v2355 = vpop.f32.mrb[0].mxu0
        %v2356 = vpop.f32.mrb[0].mxu0
        %v2357 = vadd.f32 %v2288, %v2356
        %v2358 = vpop.f32.mrb[0].mxu0
        %2359 = vmatprep.mubr.bf16.mxu0 0
        %2360 = vmatmul.mubr.bf16.gmra.mrb[0].mxu0 %v2311
        %v2361 = vpop.f32.mrb[0].mxu0
        %v2362 = vadd.f32 %v2293, %v2361
        %v2363 = vpop.f32.mrb[0].mxu0
        %v2364 = vpop.f32.mrb[0].mxu0
        %v2365 = vadd.f32 %v2296, %v2364
        %v2366 = vpop.f32.mrb[0].mxu0
        %2367 = vmatprep.mubr.bf16.mxu0 0
        %2368 = vmatmul.mubr.bf16.gmra.mrb[0].mxu0 %v2314
        %v2369 = vpop.f32.mrb[0].mxu0
        %v2370 = vadd.f32 %v2301, %v2369
        %v2371 = vpop.f32.mrb[0].mxu0
        %v2372 = vpop.f32.mrb[0].mxu0
        %v2373 = vadd.f32 %v2304, %v2372
        %v2374 = vpop.f32.mrb[0].mxu0
        %2375 = vdwg.mxu0
        %2376 = vrot.lane.b32.xlu0 %v1559, 112
        %v2377 = vpop.permute.xlu0 %2376
        %2378 = vrot.lane.b32.xlu0 %v1560, 112
        %v2379 = vpop.permute.xlu0 %2378
        %2380 = vrot.lane.b32.xlu0 %v1563, 112
        %v2381 = vpop.permute.xlu0 %2380
        %2382 = vrot.lane.b32.xlu0 %v1564, 112
        %v2383 = vpop.permute.xlu0 %2382
        %v2385 = vsel %vm1571, %v2377, 0
        %v2388 = vsel %vm1571, %v2379, 0
        %v2391 = vsel %vm1571, %v2381, 0
        %v2394 = vsel %vm1571, %v2383, 0
        %2396 = vmatprep.subr.bf16.mxu0 0
        %2397 = vmatpush1.bf16.xpose.msra.mxu0 %v2391
        %2398 = vmatprep.subr.bf16.mxu0 0
        %2399 = vmatpush1.bf16.xpose.msra.mxu0 %v2394
        %2400 = vmatprep.subr.bf16.mxu0 0
        %2401 = vmatpush1.bf16.xpose.msra.mxu0 0
        %2402 = vmatprep.subr.bf16.mxu0 0
        %2403 = vmatpush1.bf16.xpose.msra.mxu0 0
        %2404 = vmatprep.subr.bf16.mxu0 0
        %2405 = vmatpush1.bf16.xpose.msra.mxu0 0
        %2406 = vmatprep.subr.bf16.mxu0 0
        %2407 = vmatpush1.bf16.xpose.msra.mxu0 0
        %2408 = vmatprep.subr.bf16.mxu0 0
        %2409 = vmatpush1.bf16.xpose.msra.mxu0 0
        %2410 = vmatprep.subr.bf16.mxu0 0
        %2411 = vmatpush1.bf16.xpose.msra.mxu0 0
        %2412 = vmatprep.subr.bf16.mxu0 0
        %2413 = vmatpush1.bf16.xpose.msra.mxu0 0
        %2414 = vmatprep.subr.bf16.mxu0 0
        %2415 = vmatpush1.bf16.xpose.msra.mxu0 0
        %2416 = vmatprep.subr.bf16.mxu0 0
        %2417 = vmatpush1.bf16.xpose.msra.mxu0 0
        %2418 = vmatprep.subr.bf16.mxu0 0
        %2419 = vmatpush1.bf16.xpose.msra.mxu0 0
        %2420 = vmatprep.subr.bf16.mxu0 0
        %2421 = vmatpush1.bf16.xpose.msra.mxu0 0
        %2422 = vmatprep.subr.bf16.mxu0 0
        %2423 = vmatpush1.bf16.xpose.msra.mxu0 0
        %2424 = vmatprep.subr.bf16.mxu0 0
        %2425 = vmatpush1.bf16.xpose.msra.mxu0 0
        %2426 = vmatprep.subr.bf16.mxu0 0
        %2427 = vmatpush1.bf16.xpose.msra.mxu0 0
        %2428 = vmatprep.mubr.bf16.mxu0 0
        %2429 = vmatmul.mubr.bf16.gmra.mrb[0].mxu0 %v2385
        %v2430 = vpop.f32.mrb[0].mxu0
        %v2431 = vadd.f32 %v1194, %v2430
        %v2432 = vpop.f32.mrb[0].mxu0
        %v2433 = vpop.f32.mrb[0].mxu0
        %v2434 = vadd.f32 %v1195, %v2433
        %v2435 = vpop.f32.mrb[0].mxu0
        %2436 = vmatprep.mubr.bf16.mxu0 0
        %2437 = vmatmul.mubr.bf16.gmra.mrb[0].mxu0 %v2388
        %v2438 = vpop.f32.mrb[0].mxu0
        %v2439 = vadd.f32 %v1196, %v2438
        %v2440 = vpop.f32.mrb[0].mxu0
        %v2441 = vpop.f32.mrb[0].mxu0
        %v2442 = vpop.f32.mrb[0].mxu0
        %2443 = vdwg.mxu0
        %2444 = vrot.lane.b32.xlu0 %v1561, 112
        %v2445 = vpop.permute.xlu0 %2444
        %2446 = vrot.lane.b32.xlu0 %v1562, 112
        %v2447 = vpop.permute.xlu0 %2446
        %2448 = vrot.lane.b32.xlu0 %v1565, 112
        %v2449 = vpop.permute.xlu0 %2448
        %2450 = vrot.lane.b32.xlu0 %v1566, 112
        %v2451 = vpop.permute.xlu0 %2450
        %v2453 = vsel %vm1571, %v2445, 0
        %v2456 = vsel %vm1571, %v2447, 0
        %v2459 = vsel %vm1571, %v2449, 0
        %v2462 = vsel %vm1571, %v2451, 0
        %2464 = vmatprep.subr.bf16.mxu0 0
        %2465 = vmatpush1.bf16.xpose.msra.mxu0 %v2459
        %2466 = vmatprep.subr.bf16.mxu0 0
        %2467 = vmatpush1.bf16.xpose.msra.mxu0 %v2462
        %2468 = vmatprep.subr.bf16.mxu0 0
        %2469 = vmatpush1.bf16.xpose.msra.mxu0 0
        %2470 = vmatprep.subr.bf16.mxu0 0
        %2471 = vmatpush1.bf16.xpose.msra.mxu0 0
        %2472 = vmatprep.subr.bf16.mxu0 0
        %2473 = vmatpush1.bf16.xpose.msra.mxu0 0
        %2474 = vmatprep.subr.bf16.mxu0 0
        %2475 = vmatpush1.bf16.xpose.msra.mxu0 0
        %2476 = vmatprep.subr.bf16.mxu0 0
        %2477 = vmatpush1.bf16.xpose.msra.mxu0 0
        %2478 = vmatprep.subr.bf16.mxu0 0
        %2479 = vmatpush1.bf16.xpose.msra.mxu0 0
        %2480 = vmatprep.subr.bf16.mxu0 0
        %2481 = vmatpush1.bf16.xpose.msra.mxu0 0
        %2482 = vmatprep.subr.bf16.mxu0 0
        %2483 = vmatpush1.bf16.xpose.msra.mxu0 0
        %2484 = vmatprep.subr.bf16.mxu0 0
        %2485 = vmatpush1.bf16.xpose.msra.mxu0 0
        %2486 = vmatprep.subr.bf16.mxu0 0
        %2487 = vmatpush1.bf16.xpose.msra.mxu0 0
        %2488 = vmatprep.subr.bf16.mxu0 0
        %2489 = vmatpush1.bf16.xpose.msra.mxu0 0
        %2490 = vmatprep.subr.bf16.mxu0 0
        %2491 = vmatpush1.bf16.xpose.msra.mxu0 0
        %2492 = vmatprep.subr.bf16.mxu0 0
        %2493 = vmatpush1.bf16.xpose.msra.mxu0 0
        %2494 = vmatprep.subr.bf16.mxu0 0
        %2495 = vmatpush1.bf16.xpose.msra.mxu0 0
        %2496 = vmatprep.mubr.bf16.mxu0 0
        %2497 = vmatmul.mubr.bf16.gmra.mrb[0].mxu0 %v2453
        %v2498 = vpop.f32.mrb[0].mxu0
        %v2499 = vadd.f32 %v1194, %v2498
        %v2500 = vpop.f32.mrb[0].mxu0
        %v2501 = vpop.f32.mrb[0].mxu0
        %v2502 = vadd.f32 %v1195, %v2501
        %v2503 = vpop.f32.mrb[0].mxu0
        %2504 = vmatprep.mubr.bf16.mxu0 0
        %2505 = vmatmul.mubr.bf16.gmra.mrb[0].mxu0 %v2456
        %v2506 = vpop.f32.mrb[0].mxu0
        %v2507 = vadd.f32 %v1196, %v2506
        %v2508 = vpop.f32.mrb[0].mxu0
        %v2509 = vpop.f32.mrb[0].mxu0
        %v2510 = vpop.f32.mrb[0].mxu0
        %2511 = vdwg.mxu0
        %v2512 = vsel %vm1692, %v2431, -inf
        %2513 = vmax.xlane.f32.xlu0 %v2512
        %v2514 = vpop.xlane.xlu0 %2513
        %v2515 = vsel %vm1692, %v2434, -inf
        %2516 = vmax.xlane.f32.xlu0 %v2515
        %v2517 = vpop.xlane.xlu0 %2516
        %v2518 = vsel %vm1692, %v2439, -inf
        %2519 = vmax.xlane.f32.xlu0 %v2518
        %v2520 = vpop.xlane.xlu0 %2519
        %v2521 = vsel %vm1692, %v2499, -inf
        %2522 = vmax.xlane.f32.xlu0 %v2521
        %v2523 = vpop.xlane.xlu0 %2522
        %v2524 = vsel %vm1692, %v2502, -inf
        %2525 = vmax.xlane.f32.xlu0 %v2524
        %v2526 = vpop.xlane.xlu0 %2525
        %v2527 = vsel %vm1692, %v2507, -inf
        %2528 = vmax.xlane.f32.xlu0 %v2527
        %v2529 = vpop.xlane.xlu0 %2528
        %v2530 = vsub.f32 %v2431, %v2514
        %v2531 = vsub.f32 %v2434, %v2517
        %v2532 = vsub.f32 %v2439, %v2520
        %v2533 = vsub.f32 %v2499, %v2523
        %v2534 = vsub.f32 %v2502, %v2526
        %v2535 = vsub.f32 %v2507, %v2529
        %v2536 = vmul.f32 %v2530, 1.442695
        %v2537 = vpow.pop %v2536
        %v2538 = vmul.f32 %v2531, 1.442695
        %v2539 = vpow.pop %v2538
        %v2540 = vmul.f32 %v2532, 1.442695
        %v2541 = vpow.pop %v2540
        %v2542 = vmul.f32 %v2533, 1.442695
        %v2543 = vpow.pop %v2542
        %v2544 = vmul.f32 %v2534, 1.442695
        %v2545 = vpow.pop %v2544
        %v2546 = vmul.f32 %v2535, 1.442695
        %v2547 = vpow.pop %v2546
        %v2548 = vsel %vm1692, %v2537, 0.0
        %2549 = vadd.xlane.f32.xlu0 %v2548
        %v2550 = vpop.xlane.xlu0 %2549
        %v2551 = vsel %vm1692, %v2539, 0.0
        %2552 = vadd.xlane.f32.xlu0 %v2551
        %v2553 = vpop.xlane.xlu0 %2552
        %v2554 = vsel %vm1692, %v2541, 0.0
        %2555 = vadd.xlane.f32.xlu0 %v2554
        %v2556 = vpop.xlane.xlu0 %2555
        %v2557 = vsel %vm1692, %v2543, 0.0
        %2558 = vadd.xlane.f32.xlu0 %v2557
        %v2559 = vpop.xlane.xlu0 %2558
        %v2560 = vsel %vm1692, %v2545, 0.0
        %2561 = vadd.xlane.f32.xlu0 %v2560
        %v2562 = vpop.xlane.xlu0 %2561
        %v2563 = vsel %vm1692, %v2547, 0.0
        %2564 = vadd.xlane.f32.xlu0 %v2563
        %v2565 = vpop.xlane.xlu0 %2564
        %v2566 = vrcp.pop %v2550
        %v2567 = vmul.f32 1.0, %v2566
        %v2568 = vrcp.pop %v2553
        %v2569 = vmul.f32 1.0, %v2568
        %v2570 = vrcp.pop %v2556
        %v2571 = vmul.f32 1.0, %v2570
        %v2572 = vrcp.pop %v2559
        %v2573 = vmul.f32 1.0, %v2572
        %v2574 = vrcp.pop %v2562
        %v2575 = vmul.f32 1.0, %v2574
        %v2576 = vrcp.pop %v2565
        %v2577 = vmul.f32 1.0, %v2576
        %v2578 = vmul.f32 %v2537, %v2567
        %v2579 = vmul.f32 %v2539, %v2569
        %v2580 = vmul.f32 %v2541, %v2571
        %v2581 = vmul.f32 %v2543, %v2573
        %v2582 = vmul.f32 %v2545, %v2575
        %v2583 = vmul.f32 %v2547, %v2577
        %v2584 = vpack.c.bf16 %v2579, %v2578
        %v2585 = vpack.c.bf16 %v2580, %v2580
        %v2586 = vpack.c.bf16 %v2582, %v2581
        %v2587 = vpack.c.bf16 %v2583, %v2583
        %2588 = vrot.lane.b32.xlu0 %v1567, 112
        %v2589 = vpop.permute.xlu0 %2588
        %2590 = vrot.lane.b32.xlu0 %v1568, 112
        %v2591 = vpop.permute.xlu0 %2590
        %v2594 = vsel %vm1692, %v2584, 0
        %v2597 = vsel %vm1692, %v2585, 0
        %v2600 = vsel %vm1775, %v2591, 0
        %2602 = vmatprep.subr.bf16.mxu0 0
        %2603 = vmatpush1.bf16.msra.mxu0 %v2589
        %2604 = vmatprep.subr.bf16.mxu0 0
        %2605 = vmatpush1.bf16.msra.mxu0 %v2600
        %2606 = vmatprep.subr.bf16.mxu0 0
        %2607 = vmatpush1.bf16.msra.mxu0 0
        %2608 = vmatprep.subr.bf16.mxu0 0
        %2609 = vmatpush1.bf16.msra.mxu0 0
        %2610 = vmatprep.subr.bf16.mxu0 0
        %2611 = vmatpush1.bf16.msra.mxu0 0
        %2612 = vmatprep.subr.bf16.mxu0 0
        %2613 = vmatpush1.bf16.msra.mxu0 0
        %2614 = vmatprep.subr.bf16.mxu0 0
        %2615 = vmatpush1.bf16.msra.mxu0 0
        %2616 = vmatprep.subr.bf16.mxu0 0
        %2617 = vmatpush1.bf16.msra.mxu0 0
        %2618 = vmatprep.subr.bf16.mxu0 0
        %2619 = vmatpush1.bf16.msra.mxu0 0
        %2620 = vmatprep.subr.bf16.mxu0 0
        %2621 = vmatpush1.bf16.msra.mxu0 0
        %2622 = vmatprep.subr.bf16.mxu0 0
        %2623 = vmatpush1.bf16.msra.mxu0 0
        %2624 = vmatprep.subr.bf16.mxu0 0
        %2625 = vmatpush1.bf16.msra.mxu0 0
        %2626 = vmatprep.subr.bf16.mxu0 0
        %2627 = vmatpush1.bf16.msra.mxu0 0
        %2628 = vmatprep.subr.bf16.mxu0 0
        %2629 = vmatpush1.bf16.msra.mxu0 0
        %2630 = vmatprep.subr.bf16.mxu0 0
        %2631 = vmatpush1.bf16.msra.mxu0 0
        %2632 = vmatprep.subr.bf16.mxu0 0
        %2633 = vmatpush1.bf16.msra.mxu0 0
        %2634 = vmatprep.mubr.bf16.mxu0 0
        %2635 = vmatmul.mubr.bf16.gmra.mrb[0].mxu0 %v2594
        %v2636 = vpop.f32.mrb[0].mxu0
        %v2637 = vadd.f32 0.0, %v2636
        %v2638 = vpop.f32.mrb[0].mxu0
        %v2639 = vpop.f32.mrb[0].mxu0
        %v2640 = vadd.f32 0.0, %v2639
        %v2641 = vpop.f32.mrb[0].mxu0
        %2642 = vmatprep.mubr.bf16.mxu0 0
        %2643 = vmatmul.mubr.bf16.gmra.mrb[0].mxu0 %v2597
        %v2644 = vpop.f32.mrb[0].mxu0
        %v2645 = vadd.f32 0.0, %v2644
        %v2646 = vpop.f32.mrb[0].mxu0
        %v2647 = vpop.f32.mrb[0].mxu0
        %v2648 = vpop.f32.mrb[0].mxu0
        %2649 = vdwg.mxu0
        %2650 = vrot.lane.b32.xlu0 %v1569, 112
        %v2651 = vpop.permute.xlu0 %2650
        %2652 = vrot.lane.b32.xlu0 %v1570, 112
        %v2653 = vpop.permute.xlu0 %2652
        %v2656 = vsel %vm1692, %v2586, 0
        %v2659 = vsel %vm1692, %v2587, 0
        %v2662 = vsel %vm1775, %v2653, 0
        %2664 = vmatprep.subr.bf16.mxu0 0
        %2665 = vmatpush1.bf16.msra.mxu0 %v2651
        %2666 = vmatprep.subr.bf16.mxu0 0
        %2667 = vmatpush1.bf16.msra.mxu0 %v2662
        %2668 = vmatprep.subr.bf16.mxu0 0
        %2669 = vmatpush1.bf16.msra.mxu0 0
        %2670 = vmatprep.subr.bf16.mxu0 0
        %2671 = vmatpush1.bf16.msra.mxu0 0
        %2672 = vmatprep.subr.bf16.mxu0 0
        %2673 = vmatpush1.bf16.msra.mxu0 0
        %2674 = vmatprep.subr.bf16.mxu0 0
        %2675 = vmatpush1.bf16.msra.mxu0 0
        %2676 = vmatprep.subr.bf16.mxu0 0
        %2677 = vmatpush1.bf16.msra.mxu0 0
        %2678 = vmatprep.subr.bf16.mxu0 0
        %2679 = vmatpush1.bf16.msra.mxu0 0
        %2680 = vmatprep.subr.bf16.mxu0 0
        %2681 = vmatpush1.bf16.msra.mxu0 0
        %2682 = vmatprep.subr.bf16.mxu0 0
        %2683 = vmatpush1.bf16.msra.mxu0 0
        %2684 = vmatprep.subr.bf16.mxu0 0
        %2685 = vmatpush1.bf16.msra.mxu0 0
        %2686 = vmatprep.subr.bf16.mxu0 0
        %2687 = vmatpush1.bf16.msra.mxu0 0
        %2688 = vmatprep.subr.bf16.mxu0 0
        %2689 = vmatpush1.bf16.msra.mxu0 0
        %2690 = vmatprep.subr.bf16.mxu0 0
        %2691 = vmatpush1.bf16.msra.mxu0 0
        %2692 = vmatprep.subr.bf16.mxu0 0
        %2693 = vmatpush1.bf16.msra.mxu0 0
        %2694 = vmatprep.subr.bf16.mxu0 0
        %2695 = vmatpush1.bf16.msra.mxu0 0
        %2696 = vmatprep.mubr.bf16.mxu0 0
        %2697 = vmatmul.mubr.bf16.gmra.mrb[0].mxu0 %v2656
        %v2698 = vpop.f32.mrb[0].mxu0
        %v2699 = vadd.f32 0.0, %v2698
        %v2700 = vpop.f32.mrb[0].mxu0
        %v2701 = vpop.f32.mrb[0].mxu0
        %v2702 = vadd.f32 0.0, %v2701
        %v2703 = vpop.f32.mrb[0].mxu0
        %2704 = vmatprep.mubr.bf16.mxu0 0
        %2705 = vmatmul.mubr.bf16.gmra.mrb[0].mxu0 %v2659
        %v2706 = vpop.f32.mrb[0].mxu0
        %v2707 = vadd.f32 0.0, %v2706
        %v2708 = vpop.f32.mrb[0].mxu0
        %v2709 = vpop.f32.mrb[0].mxu0
        %v2710 = vpop.f32.mrb[0].mxu0
        %2711 = vdwg.mxu0
        %v2712 = vpack.c.bf16 %v2640, %v2637
        %v2713 = vpack.c.bf16 %v2699, %v2645
        %v2714 = vpack.c.bf16 %v2707, %v2702
        %v2716 = vsel %vm1571, %v2712, 0
        %v2719 = vsel %vm1571, %v2713, 0
        %v2722 = vsel %vm1571, %v2714, 0
        %v2725 = vsel %vm1775, %v1557, 0
        %2727 = vmatprep.subr.bf16.mxu0 0
        %2728 = vmatpush1.bf16.msra.mxu0 %v2725
        %2729 = vmatprep.subr.bf16.mxu0 0
        %2730 = vmatpush1.bf16.msra.mxu0 0
        %2731 = vmatprep.subr.bf16.mxu0 0
        %2732 = vmatpush1.bf16.msra.mxu0 0
        %2733 = vmatprep.subr.bf16.mxu0 0
        %2734 = vmatpush1.bf16.msra.mxu0 0
        %2735 = vmatprep.subr.bf16.mxu0 0
        %2736 = vmatpush1.bf16.msra.mxu0 0
        %2737 = vmatprep.subr.bf16.mxu0 0
        %2738 = vmatpush1.bf16.msra.mxu0 0
        %2739 = vmatprep.subr.bf16.mxu0 0
        %2740 = vmatpush1.bf16.msra.mxu0 0
        %2741 = vmatprep.subr.bf16.mxu0 0
        %2742 = vmatpush1.bf16.msra.mxu0 0
        %2743 = vmatprep.subr.bf16.mxu0 0
        %2744 = vmatpush1.bf16.msra.mxu0 0
        %2745 = vmatprep.subr.bf16.mxu0 0
        %2746 = vmatpush1.bf16.msra.mxu0 0
        %2747 = vmatprep.subr.bf16.mxu0 0
        %2748 = vmatpush1.bf16.msra.mxu0 0
        %2749 = vmatprep.subr.bf16.mxu0 0
        %2750 = vmatpush1.bf16.msra.mxu0 0
        %2751 = vmatprep.subr.bf16.mxu0 0
        %2752 = vmatpush1.bf16.msra.mxu0 0
        %2753 = vmatprep.subr.bf16.mxu0 0
        %2754 = vmatpush1.bf16.msra.mxu0 0
        %2755 = vmatprep.subr.bf16.mxu0 0
        %2756 = vmatpush1.bf16.msra.mxu0 0
        %2757 = vmatprep.subr.bf16.mxu0 0
        %2758 = vmatpush1.bf16.msra.mxu0 0
        %2759 = vmatprep.mubr.bf16.mxu0 0
        %2760 = vmatmul.mubr.bf16.gmra.mrb[0].mxu0 %v2716
        %v2761 = vpop.f32.mrb[0].mxu0
        %v2762 = vadd.f32 0.0, %v2761
        %v2763 = vpop.f32.mrb[0].mxu0
        %v2764 = vpop.f32.mrb[0].mxu0
        %v2765 = vadd.f32 0.0, %v2764
        %v2766 = vpop.f32.mrb[0].mxu0
        %2767 = vmatprep.mubr.bf16.mxu0 0
        %2768 = vmatmul.mubr.bf16.gmra.mrb[0].mxu0 %v2719
        %v2769 = vpop.f32.mrb[0].mxu0
        %v2770 = vadd.f32 0.0, %v2769
        %v2771 = vpop.f32.mrb[0].mxu0
        %v2772 = vpop.f32.mrb[0].mxu0
        %v2773 = vadd.f32 0.0, %v2772
        %v2774 = vpop.f32.mrb[0].mxu0
        %2775 = vmatprep.mubr.bf16.mxu0 0
        %2776 = vmatmul.mubr.bf16.gmra.mrb[0].mxu0 %v2722
        %v2777 = vpop.f32.mrb[0].mxu0
        %v2778 = vadd.f32 0.0, %v2777
        %v2779 = vpop.f32.mrb[0].mxu0
        %v2780 = vpop.f32.mrb[0].mxu0
        %v2781 = vadd.f32 0.0, %v2780
        %v2782 = vpop.f32.mrb[0].mxu0
        %2783 = vdwg.mxu0
        %v2784 = vadd.f32 %v2354, %v2762
        %v2785 = vadd.f32 %v2357, %v2765
        %v2786 = vadd.f32 %v2362, %v2770
        %v2787 = vadd.f32 %v2365, %v2773
        %v2788 = vadd.f32 %v2370, %v2778
        %v2789 = vadd.f32 %v2373, %v2781
        %2790 = vrot.lane.b32.xlu0 %v1559, 104
        %v2791 = vpop.permute.xlu0 %2790
        %2792 = vrot.lane.b32.xlu0 %v1560, 104
        %v2793 = vpop.permute.xlu0 %2792
        %2794 = vrot.lane.b32.xlu0 %v1563, 104
        %v2795 = vpop.permute.xlu0 %2794
        %2796 = vrot.lane.b32.xlu0 %v1564, 104
        %v2797 = vpop.permute.xlu0 %2796
        %v2799 = vsel %vm1571, %v2791, 0
        %v2802 = vsel %vm1571, %v2793, 0
        %v2805 = vsel %vm1571, %v2795, 0
        %v2808 = vsel %vm1571, %v2797, 0
        %2810 = vmatprep.subr.bf16.mxu0 0
        %2811 = vmatpush1.bf16.xpose.msra.mxu0 %v2805
        %2812 = vmatprep.subr.bf16.mxu0 0
        %2813 = vmatpush1.bf16.xpose.msra.mxu0 %v2808
        %2814 = vmatprep.subr.bf16.mxu0 0
        %2815 = vmatpush1.bf16.xpose.msra.mxu0 0
        %2816 = vmatprep.subr.bf16.mxu0 0
        %2817 = vmatpush1.bf16.xpose.msra.mxu0 0
        %2818 = vmatprep.subr.bf16.mxu0 0
        %2819 = vmatpush1.bf16.xpose.msra.mxu0 0
        %2820 = vmatprep.subr.bf16.mxu0 0
        %2821 = vmatpush1.bf16.xpose.msra.mxu0 0
        %2822 = vmatprep.subr.bf16.mxu0 0
        %2823 = vmatpush1.bf16.xpose.msra.mxu0 0
        %2824 = vmatprep.subr.bf16.mxu0 0
        %2825 = vmatpush1.bf16.xpose.msra.mxu0 0
        %2826 = vmatprep.subr.bf16.mxu0 0
        %2827 = vmatpush1.bf16.xpose.msra.mxu0 0
        %2828 = vmatprep.subr.bf16.mxu0 0
        %2829 = vmatpush1.bf16.xpose.msra.mxu0 0
        %2830 = vmatprep.subr.bf16.mxu0 0
        %2831 = vmatpush1.bf16.xpose.msra.mxu0 0
        %2832 = vmatprep.subr.bf16.mxu0 0
        %2833 = vmatpush1.bf16.xpose.msra.mxu0 0
        %2834 = vmatprep.subr.bf16.mxu0 0
        %2835 = vmatpush1.bf16.xpose.msra.mxu0 0
        %2836 = vmatprep.subr.bf16.mxu0 0
        %2837 = vmatpush1.bf16.xpose.msra.mxu0 0
        %2838 = vmatprep.subr.bf16.mxu0 0
        %2839 = vmatpush1.bf16.xpose.msra.mxu0 0
        %2840 = vmatprep.subr.bf16.mxu0 0
        %2841 = vmatpush1.bf16.xpose.msra.mxu0 0
        %2842 = vmatprep.mubr.bf16.mxu0 0
        %2843 = vmatmul.mubr.bf16.gmra.mrb[0].mxu0 %v2799
        %v2844 = vpop.f32.mrb[0].mxu0
        %v2845 = vadd.f32 %v1194, %v2844
        %v2846 = vpop.f32.mrb[0].mxu0
        %v2847 = vpop.f32.mrb[0].mxu0
        %v2848 = vadd.f32 %v1195, %v2847
        %v2849 = vpop.f32.mrb[0].mxu0
        %2850 = vmatprep.mubr.bf16.mxu0 0
        %2851 = vmatmul.mubr.bf16.gmra.mrb[0].mxu0 %v2802
        %v2852 = vpop.f32.mrb[0].mxu0
        %v2853 = vadd.f32 %v1196, %v2852
        %v2854 = vpop.f32.mrb[0].mxu0
        %v2855 = vpop.f32.mrb[0].mxu0
        %v2856 = vpop.f32.mrb[0].mxu0
        %2857 = vdwg.mxu0
        %2858 = vrot.lane.b32.xlu0 %v1561, 104
        %v2859 = vpop.permute.xlu0 %2858
        %2860 = vrot.lane.b32.xlu0 %v1562, 104
        %v2861 = vpop.permute.xlu0 %2860
        %2862 = vrot.lane.b32.xlu0 %v1565, 104
        %v2863 = vpop.permute.xlu0 %2862
        %2864 = vrot.lane.b32.xlu0 %v1566, 104
        %v2865 = vpop.permute.xlu0 %2864
        %v2867 = vsel %vm1571, %v2859, 0
        %v2870 = vsel %vm1571, %v2861, 0
        %v2873 = vsel %vm1571, %v2863, 0
        %v2876 = vsel %vm1571, %v2865, 0
        %2878 = vmatprep.subr.bf16.mxu0 0
        %2879 = vmatpush1.bf16.xpose.msra.mxu0 %v2873
        %2880 = vmatprep.subr.bf16.mxu0 0
        %2881 = vmatpush1.bf16.xpose.msra.mxu0 %v2876
        %2882 = vmatprep.subr.bf16.mxu0 0
        %2883 = vmatpush1.bf16.xpose.msra.mxu0 0
        %2884 = vmatprep.subr.bf16.mxu0 0
        %2885 = vmatpush1.bf16.xpose.msra.mxu0 0
        %2886 = vmatprep.subr.bf16.mxu0 0
        %2887 = vmatpush1.bf16.xpose.msra.mxu0 0
        %2888 = vmatprep.subr.bf16.mxu0 0
        %2889 = vmatpush1.bf16.xpose.msra.mxu0 0
        %2890 = vmatprep.subr.bf16.mxu0 0
        %2891 = vmatpush1.bf16.xpose.msra.mxu0 0
        %2892 = vmatprep.subr.bf16.mxu0 0
        %2893 = vmatpush1.bf16.xpose.msra.mxu0 0
        %2894 = vmatprep.subr.bf16.mxu0 0
        %2895 = vmatpush1.bf16.xpose.msra.mxu0 0
        %2896 = vmatprep.subr.bf16.mxu0 0
        %2897 = vmatpush1.bf16.xpose.msra.mxu0 0
        %2898 = vmatprep.subr.bf16.mxu0 0
        %2899 = vmatpush1.bf16.xpose.msra.mxu0 0
        %2900 = vmatprep.subr.bf16.mxu0 0
        %2901 = vmatpush1.bf16.xpose.msra.mxu0 0
        %2902 = vmatprep.subr.bf16.mxu0 0
        %2903 = vmatpush1.bf16.xpose.msra.mxu0 0
        %2904 = vmatprep.subr.bf16.mxu0 0
        %2905 = vmatpush1.bf16.xpose.msra.mxu0 0
        %2906 = vmatprep.subr.bf16.mxu0 0
        %2907 = vmatpush1.bf16.xpose.msra.mxu0 0
        %2908 = vmatprep.subr.bf16.mxu0 0
        %2909 = vmatpush1.bf16.xpose.msra.mxu0 0
        %2910 = vmatprep.mubr.bf16.mxu0 0
        %2911 = vmatmul.mubr.bf16.gmra.mrb[0].mxu0 %v2867
        %v2912 = vpop.f32.mrb[0].mxu0
        %v2913 = vadd.f32 %v1194, %v2912
        %v2914 = vpop.f32.mrb[0].mxu0
        %v2915 = vpop.f32.mrb[0].mxu0
        %v2916 = vadd.f32 %v1195, %v2915
        %v2917 = vpop.f32.mrb[0].mxu0
        %2918 = vmatprep.mubr.bf16.mxu0 0
        %2919 = vmatmul.mubr.bf16.gmra.mrb[0].mxu0 %v2870
        %v2920 = vpop.f32.mrb[0].mxu0
        %v2921 = vadd.f32 %v1196, %v2920
        %v2922 = vpop.f32.mrb[0].mxu0
        %v2923 = vpop.f32.mrb[0].mxu0
        %v2924 = vpop.f32.mrb[0].mxu0
        %2925 = vdwg.mxu0
        %v2926 = vsel %vm1692, %v2845, -inf
        %2927 = vmax.xlane.f32.xlu0 %v2926
        %v2928 = vpop.xlane.xlu0 %2927
        %v2929 = vsel %vm1692, %v2848, -inf
        %2930 = vmax.xlane.f32.xlu0 %v2929
        %v2931 = vpop.xlane.xlu0 %2930
        %v2932 = vsel %vm1692, %v2853, -inf
        %2933 = vmax.xlane.f32.xlu0 %v2932
        %v2934 = vpop.xlane.xlu0 %2933
        %v2935 = vsel %vm1692, %v2913, -inf
        %2936 = vmax.xlane.f32.xlu0 %v2935
        %v2937 = vpop.xlane.xlu0 %2936
        %v2938 = vsel %vm1692, %v2916, -inf
        %2939 = vmax.xlane.f32.xlu0 %v2938
        %v2940 = vpop.xlane.xlu0 %2939
        %v2941 = vsel %vm1692, %v2921, -inf
        %2942 = vmax.xlane.f32.xlu0 %v2941
        %v2943 = vpop.xlane.xlu0 %2942
        %v2944 = vsub.f32 %v2845, %v2928
        %v2945 = vsub.f32 %v2848, %v2931
        %v2946 = vsub.f32 %v2853, %v2934
        %v2947 = vsub.f32 %v2913, %v2937
        %v2948 = vsub.f32 %v2916, %v2940
        %v2949 = vsub.f32 %v2921, %v2943
        %v2950 = vmul.f32 %v2944, 1.442695
        %v2951 = vpow.pop %v2950
        %v2952 = vmul.f32 %v2945, 1.442695
        %v2953 = vpow.pop %v2952
        %v2954 = vmul.f32 %v2946, 1.442695
        %v2955 = vpow.pop %v2954
        %v2956 = vmul.f32 %v2947, 1.442695
        %v2957 = vpow.pop %v2956
        %v2958 = vmul.f32 %v2948, 1.442695
        %v2959 = vpow.pop %v2958
        %v2960 = vmul.f32 %v2949, 1.442695
        %v2961 = vpow.pop %v2960
        %v2962 = vsel %vm1692, %v2951, 0.0
        %2963 = vadd.xlane.f32.xlu0 %v2962
        %v2964 = vpop.xlane.xlu0 %2963
        %v2965 = vsel %vm1692, %v2953, 0.0
        %2966 = vadd.xlane.f32.xlu0 %v2965
        %v2967 = vpop.xlane.xlu0 %2966
        %v2968 = vsel %vm1692, %v2955, 0.0
        %2969 = vadd.xlane.f32.xlu0 %v2968
        %v2970 = vpop.xlane.xlu0 %2969
        %v2971 = vsel %vm1692, %v2957, 0.0
        %2972 = vadd.xlane.f32.xlu0 %v2971
        %v2973 = vpop.xlane.xlu0 %2972
        %v2974 = vsel %vm1692, %v2959, 0.0
        %2975 = vadd.xlane.f32.xlu0 %v2974
        %v2976 = vpop.xlane.xlu0 %2975
        %v2977 = vsel %vm1692, %v2961, 0.0
        %2978 = vadd.xlane.f32.xlu0 %v2977
        %v2979 = vpop.xlane.xlu0 %2978
        %v2980 = vrcp.pop %v2964
        %v2981 = vmul.f32 1.0, %v2980
        %v2982 = vrcp.pop %v2967
        %v2983 = vmul.f32 1.0, %v2982
        %v2984 = vrcp.pop %v2970
        %v2985 = vmul.f32 1.0, %v2984
        %v2986 = vrcp.pop %v2973
        %v2987 = vmul.f32 1.0, %v2986
        %v2988 = vrcp.pop %v2976
        %v2989 = vmul.f32 1.0, %v2988
        %v2990 = vrcp.pop %v2979
        %v2991 = vmul.f32 1.0, %v2990
        %v2992 = vmul.f32 %v2951, %v2981
        %v2993 = vmul.f32 %v2953, %v2983
        %v2994 = vmul.f32 %v2955, %v2985
        %v2995 = vmul.f32 %v2957, %v2987
        %v2996 = vmul.f32 %v2959, %v2989
        %v2997 = vmul.f32 %v2961, %v2991
        %v2998 = vpack.c.bf16 %v2993, %v2992
        %v2999 = vpack.c.bf16 %v2994, %v2994
        %v3000 = vpack.c.bf16 %v2996, %v2995
        %v3001 = vpack.c.bf16 %v2997, %v2997
        %3002 = vrot.lane.b32.xlu0 %v1567, 104
        %v3003 = vpop.permute.xlu0 %3002
        %3004 = vrot.lane.b32.xlu0 %v1568, 104
        %v3005 = vpop.permute.xlu0 %3004
        %v3008 = vsel %vm1692, %v2998, 0
        %v3011 = vsel %vm1692, %v2999, 0
        %v3014 = vsel %vm1775, %v3005, 0
        %3016 = vmatprep.subr.bf16.mxu0 0
        %3017 = vmatpush1.bf16.msra.mxu0 %v3003
        %3018 = vmatprep.subr.bf16.mxu0 0
        %3019 = vmatpush1.bf16.msra.mxu0 %v3014
        %3020 = vmatprep.subr.bf16.mxu0 0
        %3021 = vmatpush1.bf16.msra.mxu0 0
        %3022 = vmatprep.subr.bf16.mxu0 0
        %3023 = vmatpush1.bf16.msra.mxu0 0
        %3024 = vmatprep.subr.bf16.mxu0 0
        %3025 = vmatpush1.bf16.msra.mxu0 0
        %3026 = vmatprep.subr.bf16.mxu0 0
        %3027 = vmatpush1.bf16.msra.mxu0 0
        %3028 = vmatprep.subr.bf16.mxu0 0
        %3029 = vmatpush1.bf16.msra.mxu0 0
        %3030 = vmatprep.subr.bf16.mxu0 0
        %3031 = vmatpush1.bf16.msra.mxu0 0
        %3032 = vmatprep.subr.bf16.mxu0 0
        %3033 = vmatpush1.bf16.msra.mxu0 0
        %3034 = vmatprep.subr.bf16.mxu0 0
        %3035 = vmatpush1.bf16.msra.mxu0 0
        %3036 = vmatprep.subr.bf16.mxu0 0
        %3037 = vmatpush1.bf16.msra.mxu0 0
        %3038 = vmatprep.subr.bf16.mxu0 0
        %3039 = vmatpush1.bf16.msra.mxu0 0
        %3040 = vmatprep.subr.bf16.mxu0 0
        %3041 = vmatpush1.bf16.msra.mxu0 0
        %3042 = vmatprep.subr.bf16.mxu0 0
        %3043 = vmatpush1.bf16.msra.mxu0 0
        %3044 = vmatprep.subr.bf16.mxu0 0
        %3045 = vmatpush1.bf16.msra.mxu0 0
        %3046 = vmatprep.subr.bf16.mxu0 0
        %3047 = vmatpush1.bf16.msra.mxu0 0
        %3048 = vmatprep.mubr.bf16.mxu0 0
        %3049 = vmatmul.mubr.bf16.gmra.mrb[0].mxu0 %v3008
        %v3050 = vpop.f32.mrb[0].mxu0
        %v3051 = vadd.f32 0.0, %v3050
        %v3052 = vpop.f32.mrb[0].mxu0
        %v3053 = vpop.f32.mrb[0].mxu0
        %v3054 = vadd.f32 0.0, %v3053
        %v3055 = vpop.f32.mrb[0].mxu0
        %3056 = vmatprep.mubr.bf16.mxu0 0
        %3057 = vmatmul.mubr.bf16.gmra.mrb[0].mxu0 %v3011
        %v3058 = vpop.f32.mrb[0].mxu0
        %v3059 = vadd.f32 0.0, %v3058
        %v3060 = vpop.f32.mrb[0].mxu0
        %v3061 = vpop.f32.mrb[0].mxu0
        %v3062 = vpop.f32.mrb[0].mxu0
        %3063 = vdwg.mxu0
        %3064 = vrot.lane.b32.xlu0 %v1569, 104
        %v3065 = vpop.permute.xlu0 %3064
        %3066 = vrot.lane.b32.xlu0 %v1570, 104
        %v3067 = vpop.permute.xlu0 %3066
        %v3070 = vsel %vm1692, %v3000, 0
        %v3073 = vsel %vm1692, %v3001, 0
        %v3076 = vsel %vm1775, %v3067, 0
        %3078 = vmatprep.subr.bf16.mxu0 0
        %3079 = vmatpush1.bf16.msra.mxu0 %v3065
        %3080 = vmatprep.subr.bf16.mxu0 0
        %3081 = vmatpush1.bf16.msra.mxu0 %v3076
        %3082 = vmatprep.subr.bf16.mxu0 0
        %3083 = vmatpush1.bf16.msra.mxu0 0
        %3084 = vmatprep.subr.bf16.mxu0 0
        %3085 = vmatpush1.bf16.msra.mxu0 0
        %3086 = vmatprep.subr.bf16.mxu0 0
        %3087 = vmatpush1.bf16.msra.mxu0 0
        %3088 = vmatprep.subr.bf16.mxu0 0
        %3089 = vmatpush1.bf16.msra.mxu0 0
        %3090 = vmatprep.subr.bf16.mxu0 0
        %3091 = vmatpush1.bf16.msra.mxu0 0
        %3092 = vmatprep.subr.bf16.mxu0 0
        %3093 = vmatpush1.bf16.msra.mxu0 0
        %3094 = vmatprep.subr.bf16.mxu0 0
        %3095 = vmatpush1.bf16.msra.mxu0 0
        %3096 = vmatprep.subr.bf16.mxu0 0
        %3097 = vmatpush1.bf16.msra.mxu0 0
        %3098 = vmatprep.subr.bf16.mxu0 0
        %3099 = vmatpush1.bf16.msra.mxu0 0
        %3100 = vmatprep.subr.bf16.mxu0 0
        %3101 = vmatpush1.bf16.msra.mxu0 0
        %3102 = vmatprep.subr.bf16.mxu0 0
        %3103 = vmatpush1.bf16.msra.mxu0 0
        %3104 = vmatprep.subr.bf16.mxu0 0
        %3105 = vmatpush1.bf16.msra.mxu0 0
        %3106 = vmatprep.subr.bf16.mxu0 0
        %3107 = vmatpush1.bf16.msra.mxu0 0
        %3108 = vmatprep.subr.bf16.mxu0 0
        %3109 = vmatpush1.bf16.msra.mxu0 0
        %3110 = vmatprep.mubr.bf16.mxu0 0
        %3111 = vmatmul.mubr.bf16.gmra.mrb[0].mxu0 %v3070
        %v3112 = vpop.f32.mrb[0].mxu0
        %v3113 = vadd.f32 0.0, %v3112
        %v3114 = vpop.f32.mrb[0].mxu0
        %v3115 = vpop.f32.mrb[0].mxu0
        %v3116 = vadd.f32 0.0, %v3115
        %v3117 = vpop.f32.mrb[0].mxu0
        %3118 = vmatprep.mubr.bf16.mxu0 0
        %3119 = vmatmul.mubr.bf16.gmra.mrb[0].mxu0 %v3073
        %v3120 = vpop.f32.mrb[0].mxu0
        %v3121 = vadd.f32 0.0, %v3120
        %v3122 = vpop.f32.mrb[0].mxu0
        %v3123 = vpop.f32.mrb[0].mxu0
        %v3124 = vpop.f32.mrb[0].mxu0
        %3125 = vdwg.mxu0
        %v3126 = vpack.c.bf16 %v3054, %v3051
        %v3127 = vpack.c.bf16 %v3113, %v3059
        %v3128 = vpack.c.bf16 %v3121, %v3116
        %v3130 = vsel %vm1571, %v3126, 0
        %v3133 = vsel %vm1571, %v3127, 0
        %v3136 = vsel %vm1571, %v3128, 0
        %v3139 = vsel %vm1775, %v1558, 0
        %3141 = vmatprep.subr.bf16.mxu0 0
        %3142 = vmatpush1.bf16.msra.mxu0 %v3139
        %3143 = vmatprep.subr.bf16.mxu0 0
        %3144 = vmatpush1.bf16.msra.mxu0 0
        %3145 = vmatprep.subr.bf16.mxu0 0
        %3146 = vmatpush1.bf16.msra.mxu0 0
        %3147 = vmatprep.subr.bf16.mxu0 0
        %3148 = vmatpush1.bf16.msra.mxu0 0
        %3149 = vmatprep.subr.bf16.mxu0 0
        %3150 = vmatpush1.bf16.msra.mxu0 0
        %3151 = vmatprep.subr.bf16.mxu0 0
        %3152 = vmatpush1.bf16.msra.mxu0 0
        %3153 = vmatprep.subr.bf16.mxu0 0
        %3154 = vmatpush1.bf16.msra.mxu0 0
        %3155 = vmatprep.subr.bf16.mxu0 0
        %3156 = vmatpush1.bf16.msra.mxu0 0
        %3157 = vmatprep.subr.bf16.mxu0 0
        %3158 = vmatpush1.bf16.msra.mxu0 0
        %3159 = vmatprep.subr.bf16.mxu0 0
        %3160 = vmatpush1.bf16.msra.mxu0 0
        %3161 = vmatprep.subr.bf16.mxu0 0
        %3162 = vmatpush1.bf16.msra.mxu0 0
        %3163 = vmatprep.subr.bf16.mxu0 0
        %3164 = vmatpush1.bf16.msra.mxu0 0
        %3165 = vmatprep.subr.bf16.mxu0 0
        %3166 = vmatpush1.bf16.msra.mxu0 0
        %3167 = vmatprep.subr.bf16.mxu0 0
        %3168 = vmatpush1.bf16.msra.mxu0 0
        %3169 = vmatprep.subr.bf16.mxu0 0
        %3170 = vmatpush1.bf16.msra.mxu0 0
        %3171 = vmatprep.subr.bf16.mxu0 0
        %3172 = vmatpush1.bf16.msra.mxu0 0
        %3173 = vmatprep.mubr.bf16.mxu0 0
        %3174 = vmatmul.mubr.bf16.gmra.mrb[0].mxu0 %v3130
        %v3175 = vpop.f32.mrb[0].mxu0
        %v3176 = vadd.f32 0.0, %v3175
        %v3177 = vpop.f32.mrb[0].mxu0
        %v3178 = vpop.f32.mrb[0].mxu0
        %v3179 = vadd.f32 0.0, %v3178
        %v3180 = vpop.f32.mrb[0].mxu0
        %3181 = vmatprep.mubr.bf16.mxu0 0
        %3182 = vmatmul.mubr.bf16.gmra.mrb[0].mxu0 %v3133
        %v3183 = vpop.f32.mrb[0].mxu0
        %v3184 = vadd.f32 0.0, %v3183
        %v3185 = vpop.f32.mrb[0].mxu0
        %v3186 = vpop.f32.mrb[0].mxu0
        %v3187 = vadd.f32 0.0, %v3186
        %v3188 = vpop.f32.mrb[0].mxu0
        %3189 = vmatprep.mubr.bf16.mxu0 0
        %3190 = vmatmul.mubr.bf16.gmra.mrb[0].mxu0 %v3136
        %v3191 = vpop.f32.mrb[0].mxu0
        %v3192 = vadd.f32 0.0, %v3191
        %v3193 = vpop.f32.mrb[0].mxu0
        %v3194 = vpop.f32.mrb[0].mxu0
        %v3195 = vadd.f32 0.0, %v3194
        %v3196 = vpop.f32.mrb[0].mxu0
        %3197 = vdwg.mxu0
        %v3198 = vadd.f32 %v2784, %v3176
        %v3199 = vadd.f32 %v2785, %v3179
        %v3200 = vadd.f32 %v2786, %v3184
        %v3201 = vadd.f32 %v2787, %v3187
        %v3202 = vadd.f32 %v2788, %v3192
        %v3203 = vadd.f32 %v2789, %v3195
        %v3204 = vadd.f32 %v1188, %v3198
        %v3205 = vadd.f32 %v1189, %v3199
        %v3206 = vadd.f32 %v1190, %v3200
        %v3207 = vadd.f32 %v1191, %v3201
        %v3208 = vadd.f32 %v1192, %v3202
        %v3209 = vadd.f32 %v1193, %v3203
        %v3210 = vld [vmem:[%s977] sm:$0x1]
        %v3212 = vlaneseq
        %v3213 = vshrl.u32 %v3212, 7
        %v3214 = vsub.s32 0, %v3213
        %v3215 = vrot.slane %v3210, %v3214
        %v3217 = vadd.f32 %v3204, %v3215
        %v3218 = vadd.f32 %v3205, %v3215
        %v3219 = vadd.f32 %v3206, %v3215
        %v3220 = vadd.f32 %v3207, %v3215
        %v3221 = vadd.f32 %v3208, %v3215
        %v3222 = vadd.f32 %v3209, %v3215
        %v3223 = vld [vmem:[%s985] sm:$0x1]
        %v3224 = vld [vmem:[%s993] sm:$0x1]
        %v3225 = vsel %vm1199, %v3217, 0.0
        %3226 = vadd.xlane.f32.xlu0 %v3225
        %v3227 = vpop.xlane.xlu0 %3226
        %v3228 = vsel %vm1199, %v3218, 0.0
        %3229 = vadd.xlane.f32.xlu0 %v3228
        %v3230 = vpop.xlane.xlu0 %3229
        %v3231 = vsel %vm1199, %v3219, 0.0
        %3232 = vadd.xlane.f32.xlu0 %v3231
        %v3233 = vpop.xlane.xlu0 %3232
        %v3234 = vsel %vm1199, %v3220, 0.0
        %3235 = vadd.xlane.f32.xlu0 %v3234
        %v3236 = vpop.xlane.xlu0 %3235
        %v3237 = vsel %vm1199, %v3221, 0.0
        %3238 = vadd.xlane.f32.xlu0 %v3237
        %v3239 = vpop.xlane.xlu0 %3238
        %v3240 = vsel %vm1199, %v3222, 0.0
        %3241 = vadd.xlane.f32.xlu0 %v3240
        %v3242 = vpop.xlane.xlu0 %3241
        %v3243 = vmul.f32 %v3227, %v1218
        %v3244 = vmul.f32 %v3230, %v1218
        %v3245 = vmul.f32 %v3233, %v1218
        %v3246 = vmul.f32 %v3236, %v1218
        %v3247 = vmul.f32 %v3239, %v1218
        %v3248 = vmul.f32 %v3242, %v1218
        %v3249 = vsub.f32 %v3217, %v3243
        %v3250 = vsub.f32 %v3218, %v3244
        %v3251 = vsub.f32 %v3219, %v3245
        %v3252 = vsub.f32 %v3220, %v3246
        %v3253 = vsub.f32 %v3221, %v3247
        %v3254 = vsub.f32 %v3222, %v3248
        %v3255 = vmul.f32 %v3249, %v3249
        %v3256 = vmul.f32 %v3250, %v3250
        %v3257 = vmul.f32 %v3251, %v3251
        %v3258 = vmul.f32 %v3252, %v3252
        %v3259 = vmul.f32 %v3253, %v3253
        %v3260 = vmul.f32 %v3254, %v3254
        %v3261 = vsel %vm1199, %v3255, 0.0
        %3262 = vadd.xlane.f32.xlu0 %v3261
        %v3263 = vpop.xlane.xlu0 %3262
        %v3264 = vsel %vm1199, %v3256, 0.0
        %3265 = vadd.xlane.f32.xlu0 %v3264
        %v3266 = vpop.xlane.xlu0 %3265
        %v3267 = vsel %vm1199, %v3257, 0.0
        %3268 = vadd.xlane.f32.xlu0 %v3267
        %v3269 = vpop.xlane.xlu0 %3268
        %v3270 = vsel %vm1199, %v3258, 0.0
        %3271 = vadd.xlane.f32.xlu0 %v3270
        %v3272 = vpop.xlane.xlu0 %3271
        %v3273 = vsel %vm1199, %v3259, 0.0
        %3274 = vadd.xlane.f32.xlu0 %v3273
        %v3275 = vpop.xlane.xlu0 %3274
        %v3276 = vsel %vm1199, %v3260, 0.0
        %3277 = vadd.xlane.f32.xlu0 %v3276
        %v3278 = vpop.xlane.xlu0 %3277
        %v3279 = vmul.f32 %v3263, %v1218
        %v3280 = vmul.f32 %v3266, %v1218
        %v3281 = vmul.f32 %v3269, %v1218
        %v3282 = vmul.f32 %v3272, %v1218
        %v3283 = vmul.f32 %v3275, %v1218
        %v3284 = vmul.f32 %v3278, %v1218
        %v3285 = vadd.f32 %v3279, 1e-05
        %v3286 = vadd.f32 %v3280, 1e-05
        %v3287 = vadd.f32 %v3281, 1e-05
        %v3288 = vadd.f32 %v3282, 1e-05
        %v3289 = vadd.f32 %v3283, 1e-05
        %v3290 = vadd.f32 %v3284, 1e-05
        %v3291 = vrsqrt.pop %v3285
        %v3292 = vrsqrt.pop %v3286
        %v3293 = vrsqrt.pop %v3287
        %v3294 = vrsqrt.pop %v3288
        %v3295 = vrsqrt.pop %v3289
        %v3296 = vrsqrt.pop %v3290
        %v3297 = vmul.f32 %v3249, %v3291
        %v3298 = vmul.f32 %v3250, %v3292
        %v3299 = vmul.f32 %v3251, %v3293
        %v3300 = vmul.f32 %v3252, %v3294
        %v3301 = vmul.f32 %v3253, %v3295
        %v3302 = vmul.f32 %v3254, %v3296
        %v3304 = vlaneseq
        %v3305 = vshrl.u32 %v3304, 7
        %v3306 = vsub.s32 0, %v3305
        %v3307 = vrot.slane %v3223, %v3306
        %v3309 = vmul.f32 %v3297, %v3307
        %v3310 = vmul.f32 %v3298, %v3307
        %v3311 = vmul.f32 %v3299, %v3307
        %v3312 = vmul.f32 %v3300, %v3307
        %v3313 = vmul.f32 %v3301, %v3307
        %v3314 = vmul.f32 %v3302, %v3307
        %v3316 = vlaneseq
        %v3317 = vshrl.u32 %v3316, 7
        %v3318 = vsub.s32 0, %v3317
        %v3319 = vrot.slane %v3224, %v3318
        %v3321 = vadd.f32 %v3309, %v3319
        %v3322 = vadd.f32 %v3310, %v3319
        %v3323 = vadd.f32 %v3311, %v3319
        %v3324 = vadd.f32 %v3312, %v3319
        %v3325 = vadd.f32 %v3313, %v3319
        %v3326 = vadd.f32 %v3314, %v3319
        %v3327 = vpack.c.bf16 %v3322, %v3321
        %v3328 = vpack.c.bf16 %v3324, %v3323
        %v3329 = vpack.c.bf16 %v3326, %v3325
        %v3330 = vld [vmem:[%s1002] sm:$0xf]
        %v3331 = vld [vmem:[%s1002 + $0x4] sm:$0xf]
        %v3332 = vld [vmem:[%s1002 + $0x8] sm:$0xf]
        %v3333 = vld [vmem:[%s1002 + $0xc] sm:$0xf]
        %v3334 = vld [vmem:[%s1010] sm:$0x1]
        %v3336 = vlaneseq
        %v3337 = vshrl.u32 %v3336, 7
        %v3338 = vsub.s32 0, %v3337
        %v3339 = vrot.slane %v3334, %v3338
        %v3345 = vunpack.c.l.b16 %v3330
        %v3346 = vunpack.c.l.b16 %v3331
        %v3347 = vunpack.c.l.b16 %v3332
        %v3348 = vunpack.c.l.b16 %v3333
        %v3349 = vpack.c.b16 %v3346, %v3345
        %v3350 = vpack.c.b16 %v3348, %v3347
        %v3354 = vsel %vm1199, %v3327, 0
        %v3357 = vsel %vm1199, %v3328, 0
        %v3360 = vsel %vm1199, %v3329, 0
        %3362 = vmatprep.subr.bf16.mxu0 0
        %3363 = vmatpush1.bf16.msra.mxu0 %v3349
        %3364 = vmatprep.subr.bf16.mxu0 0
        %3365 = vmatpush1.bf16.msra.mxu0 %v3350
        %3366 = vmatprep.subr.bf16.mxu0 0
        %3367 = vmatpush1.bf16.msra.mxu0 0
        %3368 = vmatprep.subr.bf16.mxu0 0
        %3369 = vmatpush1.bf16.msra.mxu0 0
        %3370 = vmatprep.subr.bf16.mxu0 0
        %3371 = vmatpush1.bf16.msra.mxu0 0
        %3372 = vmatprep.subr.bf16.mxu0 0
        %3373 = vmatpush1.bf16.msra.mxu0 0
        %3374 = vmatprep.subr.bf16.mxu0 0
        %3375 = vmatpush1.bf16.msra.mxu0 0
        %3376 = vmatprep.subr.bf16.mxu0 0
        %3377 = vmatpush1.bf16.msra.mxu0 0
        %3378 = vmatprep.subr.bf16.mxu0 0
        %3379 = vmatpush1.bf16.msra.mxu0 0
        %3380 = vmatprep.subr.bf16.mxu0 0
        %3381 = vmatpush1.bf16.msra.mxu0 0
        %3382 = vmatprep.subr.bf16.mxu0 0
        %3383 = vmatpush1.bf16.msra.mxu0 0
        %3384 = vmatprep.subr.bf16.mxu0 0
        %3385 = vmatpush1.bf16.msra.mxu0 0
        %3386 = vmatprep.subr.bf16.mxu0 0
        %3387 = vmatpush1.bf16.msra.mxu0 0
        %3388 = vmatprep.subr.bf16.mxu0 0
        %3389 = vmatpush1.bf16.msra.mxu0 0
        %3390 = vmatprep.subr.bf16.mxu0 0
        %3391 = vmatpush1.bf16.msra.mxu0 0
        %3392 = vmatprep.subr.bf16.mxu0 0
        %3393 = vmatpush1.bf16.msra.mxu0 0
        %3394 = vmatprep.mubr.bf16.mxu0 0
        %3395 = vmatmul.mubr.bf16.gmra.mrb[0].mxu0 %v3354
        %v3396 = vpop.f32.mrb[0].mxu0
        %v3397 = vadd.f32 %v3339, %v3396
        %v3398 = vpop.f32.mrb[0].mxu0
        %v3399 = vpop.f32.mrb[0].mxu0
        %v3400 = vadd.f32 %v3339, %v3399
        %v3401 = vpop.f32.mrb[0].mxu0
        %3402 = vmatprep.mubr.bf16.mxu0 0
        %3403 = vmatmul.mubr.bf16.gmra.mrb[0].mxu0 %v3357
        %v3404 = vpop.f32.mrb[0].mxu0
        %v3405 = vadd.f32 %v3339, %v3404
        %v3406 = vpop.f32.mrb[0].mxu0
        %v3407 = vpop.f32.mrb[0].mxu0
        %v3408 = vadd.f32 %v3339, %v3407
        %v3409 = vpop.f32.mrb[0].mxu0
        %3410 = vmatprep.mubr.bf16.mxu0 0
        %3411 = vmatmul.mubr.bf16.gmra.mrb[0].mxu0 %v3360
        %v3412 = vpop.f32.mrb[0].mxu0
        %v3413 = vadd.f32 %v3339, %v3412
        %v3414 = vpop.f32.mrb[0].mxu0
        %v3415 = vpop.f32.mrb[0].mxu0
        %v3416 = vadd.f32 %v3339, %v3415
        %v3417 = vpop.f32.mrb[0].mxu0
        %3418 = vdwg.mxu0
        %v3419 = vmul.f32 %v3397, 0.5
        %v3420 = vmul.f32 %v3400, 0.5
        %v3421 = vmul.f32 %v3405, 0.5
        %v3422 = vmul.f32 %v3408, 0.5
        %v3423 = vmul.f32 %v3413, 0.5
        %v3424 = vmul.f32 %v3416, 0.5
        %v3425 = vmul.f32 %v3397, 0.70710677
        %v3426 = vmul.f32 %v3400, 0.70710677
        %v3427 = vmul.f32 %v3405, 0.70710677
        %v3428 = vmul.f32 %v3408, 0.70710677
        %v3429 = vmul.f32 %v3413, 0.70710677
        %v3430 = vmul.f32 %v3416, 0.70710677
        %vm3431 = vcmp.ge.f32.partialorder %v3425, 0.0
        %vm3432 = vcmp.ge.f32.partialorder %v3426, 0.0
        %vm3433 = vcmp.ge.f32.partialorder %v3427, 0.0
        %vm3434 = vcmp.ge.f32.partialorder %v3428, 0.0
        %vm3435 = vcmp.ge.f32.partialorder %v3429, 0.0
        %vm3436 = vcmp.ge.f32.partialorder %v3430, 0.0
        %v3437 = vsel %vm3431, 1.0, -1.0
        %v3438 = vsel %vm3432, 1.0, -1.0
        %v3439 = vsel %vm3433, 1.0, -1.0
        %v3440 = vsel %vm3434, 1.0, -1.0
        %v3441 = vsel %vm3435, 1.0, -1.0
        %v3442 = vsel %vm3436, 1.0, -1.0
        %v3443 = vand.u32 2147483647, %v3425
        %v3444 = vand.u32 2147483647, %v3426
        %v3445 = vand.u32 2147483647, %v3427
        %v3446 = vand.u32 2147483647, %v3428
        %v3447 = vand.u32 2147483647, %v3429
        %v3448 = vand.u32 2147483647, %v3430
        %v3449 = vmul.f32 %v3443, 0.3275911
        %v3450 = vmul.f32 %v3444, 0.3275911
        %v3451 = vmul.f32 %v3445, 0.3275911
        %v3452 = vmul.f32 %v3446, 0.3275911
        %v3453 = vmul.f32 %v3447, 0.3275911
        %v3454 = vmul.f32 %v3448, 0.3275911
        %v3455 = vadd.f32 %v3449, 1.0
        %v3456 = vadd.f32 %v3450, 1.0
        %v3457 = vadd.f32 %v3451, 1.0
        %v3458 = vadd.f32 %v3452, 1.0
        %v3459 = vadd.f32 %v3453, 1.0
        %v3460 = vadd.f32 %v3454, 1.0
        %v3461 = vrcp.pop %v3455
        %v3462 = vmul.f32 1.0, %v3461
        %v3463 = vrcp.pop %v3456
        %v3464 = vmul.f32 1.0, %v3463
        %v3465 = vrcp.pop %v3457
        %v3466 = vmul.f32 1.0, %v3465
        %v3467 = vrcp.pop %v3458
        %v3468 = vmul.f32 1.0, %v3467
        %v3469 = vrcp.pop %v3459
        %v3470 = vmul.f32 1.0, %v3469
        %v3471 = vrcp.pop %v3460
        %v3472 = vmul.f32 1.0, %v3471
        %v3473 = vmul.f32 %v3462, 1.0614054
        %v3474 = vmul.f32 %v3464, 1.0614054
        %v3475 = vmul.f32 %v3466, 1.0614054
        %v3476 = vmul.f32 %v3468, 1.0614054
        %v3477 = vmul.f32 %v3470, 1.0614054
        %v3478 = vmul.f32 %v3472, 1.0614054
        %v3479 = vadd.f32 %v3473, -1.4531521
        %v3480 = vadd.f32 %v3474, -1.4531521
        %v3481 = vadd.f32 %v3475, -1.4531521
        %v3482 = vadd.f32 %v3476, -1.4531521
        %v3483 = vadd.f32 %v3477, -1.4531521
        %v3484 = vadd.f32 %v3478, -1.4531521
        %v3485 = vmul.f32 %v3479, %v3462
        %v3486 = vmul.f32 %v3480, %v3464
        %v3487 = vmul.f32 %v3481, %v3466
        %v3488 = vmul.f32 %v3482, %v3468
        %v3489 = vmul.f32 %v3483, %v3470
        %v3490 = vmul.f32 %v3484, %v3472
        %v3491 = vadd.f32 %v3485, 1.4214138
        %v3492 = vadd.f32 %v3486, 1.4214138
        %v3493 = vadd.f32 %v3487, 1.4214138
        %v3494 = vadd.f32 %v3488, 1.4214138
        %v3495 = vadd.f32 %v3489, 1.4214138
        %v3496 = vadd.f32 %v3490, 1.4214138
        %v3497 = vmul.f32 %v3491, %v3462
        %v3498 = vmul.f32 %v3492, %v3464
        %v3499 = vmul.f32 %v3493, %v3466
        %v3500 = vmul.f32 %v3494, %v3468
        %v3501 = vmul.f32 %v3495, %v3470
        %v3502 = vmul.f32 %v3496, %v3472
        %v3503 = vadd.f32 %v3497, -0.28449672
        %v3504 = vadd.f32 %v3498, -0.28449672
        %v3505 = vadd.f32 %v3499, -0.28449672
        %v3506 = vadd.f32 %v3500, -0.28449672
        %v3507 = vadd.f32 %v3501, -0.28449672
        %v3508 = vadd.f32 %v3502, -0.28449672
        %v3509 = vmul.f32 %v3503, %v3462
        %v3510 = vmul.f32 %v3504, %v3464
        %v3511 = vmul.f32 %v3505, %v3466
        %v3512 = vmul.f32 %v3506, %v3468
        %v3513 = vmul.f32 %v3507, %v3470
        %v3514 = vmul.f32 %v3508, %v3472
        %v3515 = vadd.f32 %v3509, 0.2548296
        %v3516 = vadd.f32 %v3510, 0.2548296
        %v3517 = vadd.f32 %v3511, 0.2548296
        %v3518 = vadd.f32 %v3512, 0.2548296
        %v3519 = vadd.f32 %v3513, 0.2548296
        %v3520 = vadd.f32 %v3514, 0.2548296
        %v3521 = vmul.f32 %v3515, %v3462
        %v3522 = vmul.f32 %v3516, %v3464
        %v3523 = vmul.f32 %v3517, %v3466
        %v3524 = vmul.f32 %v3518, %v3468
        %v3525 = vmul.f32 %v3519, %v3470
        %v3526 = vmul.f32 %v3520, %v3472
        %v3527 = vsub.f32 0.0, %v3443
        %v3528 = vsub.f32 0.0, %v3444
        %v3529 = vsub.f32 0.0, %v3445
        %v3530 = vsub.f32 0.0, %v3446
        %v3531 = vsub.f32 0.0, %v3447
        %v3532 = vsub.f32 0.0, %v3448
        %v3533 = vmul.f32 %v3527, %v3443
        %v3534 = vmul.f32 %v3528, %v3444
        %v3535 = vmul.f32 %v3529, %v3445
        %v3536 = vmul.f32 %v3530, %v3446
        %v3537 = vmul.f32 %v3531, %v3447
        %v3538 = vmul.f32 %v3532, %v3448
        %v3539 = vmul.f32 %v3533, 1.442695
        %v3540 = vpow.pop %v3539
        %v3541 = vmul.f32 %v3534, 1.442695
        %v3542 = vpow.pop %v3541
        %v3543 = vmul.f32 %v3535, 1.442695
        %v3544 = vpow.pop %v3543
        %v3545 = vmul.f32 %v3536, 1.442695
        %v3546 = vpow.pop %v3545
        %v3547 = vmul.f32 %v3537, 1.442695
        %v3548 = vpow.pop %v3547
        %v3549 = vmul.f32 %v3538, 1.442695
        %v3550 = vpow.pop %v3549
        %v3551 = vmul.f32 %v3521, %v3540
        %v3552 = vmul.f32 %v3522, %v3542
        %v3553 = vmul.f32 %v3523, %v3544
        %v3554 = vmul.f32 %v3524, %v3546
        %v3555 = vmul.f32 %v3525, %v3548
        %v3556 = vmul.f32 %v3526, %v3550
        %v3557 = vsub.f32 1.0, %v3551
        %v3558 = vsub.f32 1.0, %v3552
        %v3559 = vsub.f32 1.0, %v3553
        %v3560 = vsub.f32 1.0, %v3554
        %v3561 = vsub.f32 1.0, %v3555
        %v3562 = vsub.f32 1.0, %v3556
        %v3563 = vmul.f32 %v3437, %v3557
        %v3564 = vmul.f32 %v3438, %v3558
        %v3565 = vmul.f32 %v3439, %v3559
        %v3566 = vmul.f32 %v3440, %v3560
        %v3567 = vmul.f32 %v3441, %v3561
        %v3568 = vmul.f32 %v3442, %v3562
        %v3569 = vadd.f32 %v3563, 1.0
        %v3570 = vadd.f32 %v3564, 1.0
        %v3571 = vadd.f32 %v3565, 1.0
        %v3572 = vadd.f32 %v3566, 1.0
        %v3573 = vadd.f32 %v3567, 1.0
        %v3574 = vadd.f32 %v3568, 1.0
        %v3575 = vmul.f32 %v3419, %v3569
        %v3576 = vmul.f32 %v3420, %v3570
        %v3577 = vmul.f32 %v3421, %v3571
        %v3578 = vmul.f32 %v3422, %v3572
        %v3579 = vmul.f32 %v3423, %v3573
        %v3580 = vmul.f32 %v3424, %v3574
        %v3581 = vpack.c.bf16 %v3576, %v3575
        %v3582 = vpack.c.bf16 %v3578, %v3577
        %v3583 = vpack.c.bf16 %v3580, %v3579
        %v3584 = vld [vmem:[%s1169] sm:$0xf]
        %v3585 = vld [vmem:[%s1169 + $0x4] sm:$0xf]
        %v3586 = vld [vmem:[%s1169 + $0x8] sm:$0xf]
        %v3587 = vld [vmem:[%s1169 + $0xc] sm:$0xf]
        %v3588 = vld [vmem:[%s1169 + $0x10] sm:$0xf]
        %v3589 = vld [vmem:[%s1169 + $0x14] sm:$0xf]
        %v3590 = vld [vmem:[%s1169 + $0x18] sm:$0xf]
        %v3591 = vld [vmem:[%s1169 + $0x1c] sm:$0xf]
        %v3592 = vld [vmem:[%s1169 + $0x20] sm:$0xf]
        %v3593 = vld [vmem:[%s1169 + $0x24] sm:$0xf]
        %v3594 = vld [vmem:[%s1169 + $0x28] sm:$0xf]
        %v3595 = vld [vmem:[%s1169 + $0x2c] sm:$0xf]
        %v3596 = vld [vmem:[%s1169 + $0x30] sm:$0xf]
        %v3597 = vld [vmem:[%s1169 + $0x34] sm:$0xf]
        %v3598 = vld [vmem:[%s1169 + $0x38] sm:$0xf]
        %v3599 = vld [vmem:[%s1169 + $0x3c] sm:$0xf]
        %v3600 = vld [vmem:[%s1018] sm:$0x1]
        %v3602 = vlaneseq
        %v3603 = vshrl.u32 %v3602, 7
        %v3604 = vsub.s32 0, %v3603
        %v3605 = vrot.slane %v3600, %v3604
        %v3623 = vunpack.c.l.b16 %v3584
        %v3624 = vunpack.c.l.b16 %v3585
        %v3625 = vunpack.c.l.b16 %v3586
        %v3626 = vunpack.c.l.b16 %v3587
        %v3627 = vunpack.c.l.b16 %v3588
        %v3628 = vunpack.c.l.b16 %v3589
        %v3629 = vunpack.c.l.b16 %v3590
        %v3630 = vunpack.c.l.b16 %v3591
        %v3631 = vunpack.c.l.b16 %v3592
        %v3632 = vunpack.c.l.b16 %v3593
        %v3633 = vunpack.c.l.b16 %v3594
        %v3634 = vunpack.c.l.b16 %v3595
        %v3635 = vunpack.c.l.b16 %v3596
        %v3636 = vunpack.c.l.b16 %v3597
        %v3637 = vunpack.c.l.b16 %v3598
        %v3638 = vunpack.c.l.b16 %v3599
        %v3639 = vpack.c.b16 %v3624, %v3623
        %v3640 = vpack.c.b16 %v3626, %v3625
        %v3641 = vpack.c.b16 %v3628, %v3627
        %v3642 = vpack.c.b16 %v3630, %v3629
        %v3643 = vpack.c.b16 %v3632, %v3631
        %v3644 = vpack.c.b16 %v3634, %v3633
        %v3645 = vpack.c.b16 %v3636, %v3635
        %v3646 = vpack.c.b16 %v3638, %v3637
        %3655 = vmatprep.subr.bf16.mxu0 0
        %3656 = vmatpush1.bf16.msra.mxu0 %v3639
        %3657 = vmatprep.subr.bf16.mxu0 0
        %3658 = vmatpush1.bf16.msra.mxu0 %v3640
        %3659 = vmatprep.subr.bf16.mxu0 0
        %3660 = vmatpush1.bf16.msra.mxu0 %v3641
        %3661 = vmatprep.subr.bf16.mxu0 0
        %3662 = vmatpush1.bf16.msra.mxu0 %v3642
        %3663 = vmatprep.subr.bf16.mxu0 0
        %3664 = vmatpush1.bf16.msra.mxu0 %v3643
        %3665 = vmatprep.subr.bf16.mxu0 0
        %3666 = vmatpush1.bf16.msra.mxu0 %v3644
        %3667 = vmatprep.subr.bf16.mxu0 0
        %3668 = vmatpush1.bf16.msra.mxu0 %v3645
        %3669 = vmatprep.subr.bf16.mxu0 0
        %3670 = vmatpush1.bf16.msra.mxu0 %v3646
        %3671 = vmatprep.subr.bf16.mxu0 0
        %3672 = vmatpush1.bf16.msra.mxu0 0
        %3673 = vmatprep.subr.bf16.mxu0 0
        %3674 = vmatpush1.bf16.msra.mxu0 0
        %3675 = vmatprep.subr.bf16.mxu0 0
        %3676 = vmatpush1.bf16.msra.mxu0 0
        %3677 = vmatprep.subr.bf16.mxu0 0
        %3678 = vmatpush1.bf16.msra.mxu0 0
        %3679 = vmatprep.subr.bf16.mxu0 0
        %3680 = vmatpush1.bf16.msra.mxu0 0
        %3681 = vmatprep.subr.bf16.mxu0 0
        %3682 = vmatpush1.bf16.msra.mxu0 0
        %3683 = vmatprep.subr.bf16.mxu0 0
        %3684 = vmatpush1.bf16.msra.mxu0 0
        %3685 = vmatprep.subr.bf16.mxu0 0
        %3686 = vmatpush1.bf16.msra.mxu0 0
        %3687 = vmatprep.mubr.bf16.mxu0 0
        %3688 = vmatmul.mubr.bf16.gmra.mrb[0].mxu0 %v3581
        %v3689 = vpop.f32.mrb[0].mxu0
        %v3690 = vadd.f32 %v3605, %v3689
        %v3691 = vpop.f32.mrb[0].mxu0
        %v3692 = vpop.f32.mrb[0].mxu0
        %v3693 = vadd.f32 %v3605, %v3692
        %v3694 = vpop.f32.mrb[0].mxu0
        %3695 = vmatprep.mubr.bf16.mxu0 0
        %3696 = vmatmul.mubr.bf16.gmra.mrb[0].mxu0 %v3582
        %v3697 = vpop.f32.mrb[0].mxu0
        %v3698 = vadd.f32 %v3605, %v3697
        %v3699 = vpop.f32.mrb[0].mxu0
        %v3700 = vpop.f32.mrb[0].mxu0
        %v3701 = vadd.f32 %v3605, %v3700
        %v3702 = vpop.f32.mrb[0].mxu0
        %3703 = vmatprep.mubr.bf16.mxu0 0
        %3704 = vmatmul.mubr.bf16.gmra.mrb[0].mxu0 %v3583
        %v3705 = vpop.f32.mrb[0].mxu0
        %v3706 = vadd.f32 %v3605, %v3705
        %v3707 = vpop.f32.mrb[0].mxu0
        %v3708 = vpop.f32.mrb[0].mxu0
        %v3709 = vadd.f32 %v3605, %v3708
        %v3710 = vpop.f32.mrb[0].mxu0
        %3711 = vdwg.mxu0
        %v3712 = vadd.f32 %v3217, %v3690
        %v3713 = vadd.f32 %v3218, %v3693
        %v3714 = vadd.f32 %v3219, %v3698
        %v3715 = vadd.f32 %v3220, %v3701
        %v3716 = vadd.f32 %v3221, %v3706
        %v3717 = vadd.f32 %v3222, %v3709
        %3718 = vst.msk [vmem:[#allocation2] sm:$0xff] %vm1199, %v3712
        %3719 = vst.msk [vmem:[#allocation2 + $0x8] sm:$0xff] %vm1199, %v3713
        %3720 = vst.msk [vmem:[#allocation2 + $0x10] sm:$0xff] %vm1199, %v3714
        %3721 = vst.msk [vmem:[#allocation2 + $0x18] sm:$0xff] %vm1199, %v3715
        %3722 = vst.msk [vmem:[#allocation2 + $0x20] sm:$0xff] %vm1199, %v3716
        %3723 = vst.msk [vmem:[#allocation2 + $0x28] sm:$0xff] %vm1199, %v3717
        %p3724 = scmp.eq.s32.totalorder %s56, 1
        // Predicated region
        $region165: #{tpu_custom_call.1} parent=107 // pred_check
          %p3725 = pneg %p3724
        $region166: #{tpu_custom_call.1} parent=107 // pred_check_branch
          %3727 = sbr.rel (%p3725) target = $region168
        $region167: #{tpu_custom_call.1} parent=107 // pred_region
          %v3728 = vld [vmem:[#allocation2 + $0x8] sm:$0xff]
          %v3729 = vld [vmem:[#allocation2 + $0x20] sm:$0xff]
          %v3730 = vld [vmem:[%s18] sm:$0x1]
          %v3731 = vld [vmem:[%s19] sm:$0x1]
          %v3732 = vsel %vm1199, %v3728, 0.0
          %3733 = vadd.xlane.f32.xlu0 %v3732
          %v3734 = vpop.xlane.xlu0 %3733
          %v3735 = vsel %vm1199, %v3729, 0.0
          %3736 = vadd.xlane.f32.xlu0 %v3735
          %v3737 = vpop.xlane.xlu0 %3736
          %v3738 = vmul.f32 %v3734, %v1218
          %v3739 = vmul.f32 %v3737, %v1218
          %v3740 = vsub.f32 %v3728, %v3738
          %v3741 = vsub.f32 %v3729, %v3739
          %v3742 = vmul.f32 %v3740, %v3740
          %v3743 = vmul.f32 %v3741, %v3741
          %v3744 = vsel %vm1199, %v3742, 0.0
          %3745 = vadd.xlane.f32.xlu0 %v3744
          %v3746 = vpop.xlane.xlu0 %3745
          %v3747 = vsel %vm1199, %v3743, 0.0
          %3748 = vadd.xlane.f32.xlu0 %v3747
          %v3749 = vpop.xlane.xlu0 %3748
          %v3750 = vmul.f32 %v3746, %v1218
          %v3751 = vmul.f32 %v3749, %v1218
          %v3752 = vadd.f32 %v3750, 1e-05
          %v3753 = vadd.f32 %v3751, 1e-05
          %v3754 = vrsqrt.pop %v3752
          %v3755 = vrsqrt.pop %v3753
          %v3756 = vmul.f32 %v3740, %v3754
          %v3757 = vmul.f32 %v3741, %v3755
          %v3759 = vlaneseq
          %v3760 = vshrl.u32 %v3759, 7
          %v3761 = vsub.s32 0, %v3760
          %v3762 = vrot.slane %v3730, %v3761
          %v3764 = vmul.f32 %v3756, %v3762
          %v3765 = vmul.f32 %v3757, %v3762
          %v3767 = vlaneseq
          %v3768 = vshrl.u32 %v3767, 7
          %v3769 = vsub.s32 0, %v3768
          %v3770 = vrot.slane %v3731, %v3769
          %v3772 = vadd.f32 %v3764, %v3770
          %v3773 = vadd.f32 %v3765, %v3770
          %v3774 = vpack.c.bf16 %v3773, %v3772
          %v3775 = vld [vmem:[%s20] sm:$0xf]
          %v3776 = vld [vmem:[%s20 + $0x4] sm:$0xf]
          %v3777 = vld [vmem:[%s20 + $0x8] sm:$0xf]
          %v3778 = vld [vmem:[%s20 + $0xc] sm:$0xf]
          %v3783 = vunpack.c.l.b16 %v3775
          %v3784 = vunpack.c.l.b16 %v3776
          %v3785 = vunpack.c.l.b16 %v3777
          %v3786 = vunpack.c.l.b16 %v3778
          %v3787 = vpack.c.b16 %v3784, %v3783
          %v3788 = vpack.c.b16 %v3786, %v3785
          %v3792 = vsel %vm1199, %v3774, 0
          %3794 = vmatprep.subr.bf16.mxu0 0
          %3795 = vmatpush1.bf16.msra.mxu0 %v3787
          %3796 = vmatprep.subr.bf16.mxu0 0
          %3797 = vmatpush1.bf16.msra.mxu0 %v3788
          %3798 = vmatprep.subr.bf16.mxu0 0
          %3799 = vmatpush1.bf16.msra.mxu0 0
          %3800 = vmatprep.subr.bf16.mxu0 0
          %3801 = vmatpush1.bf16.msra.mxu0 0
          %3802 = vmatprep.subr.bf16.mxu0 0
          %3803 = vmatpush1.bf16.msra.mxu0 0
          %3804 = vmatprep.subr.bf16.mxu0 0
          %3805 = vmatpush1.bf16.msra.mxu0 0
          %3806 = vmatprep.subr.bf16.mxu0 0
          %3807 = vmatpush1.bf16.msra.mxu0 0
          %3808 = vmatprep.subr.bf16.mxu0 0
          %3809 = vmatpush1.bf16.msra.mxu0 0
          %3810 = vmatprep.subr.bf16.mxu0 0
          %3811 = vmatpush1.bf16.msra.mxu0 0
          %3812 = vmatprep.subr.bf16.mxu0 0
          %3813 = vmatpush1.bf16.msra.mxu0 0
          %3814 = vmatprep.subr.bf16.mxu0 0
          %3815 = vmatpush1.bf16.msra.mxu0 0
          %3816 = vmatprep.subr.bf16.mxu0 0
          %3817 = vmatpush1.bf16.msra.mxu0 0
          %3818 = vmatprep.subr.bf16.mxu0 0
          %3819 = vmatpush1.bf16.msra.mxu0 0
          %3820 = vmatprep.subr.bf16.mxu0 0
          %3821 = vmatpush1.bf16.msra.mxu0 0
          %3822 = vmatprep.subr.bf16.mxu0 0
          %3823 = vmatpush1.bf16.msra.mxu0 0
          %3824 = vmatprep.subr.bf16.mxu0 0
          %3825 = vmatpush1.bf16.msra.mxu0 0
          %3826 = vmatprep.mubr.bf16.mxu0 0
          %3827 = vmatmul.mubr.bf16.gmra.mrb[0].mxu0 %v3792
          %v3828 = vpop.f32.mrb[0].mxu0
          %v3829 = vadd.f32 0.0, %v3828
          %v3830 = vpop.f32.mrb[0].mxu0
          %v3831 = vpop.f32.mrb[0].mxu0
          %v3832 = vadd.f32 0.0, %v3831
          %v3833 = vpop.f32.mrb[0].mxu0
          %3834 = vdwg.mxu0
          %3835 = vst [vmem:[#allocation24] sm:$0xff] %v3829
          %3836 = vst [vmem:[#allocation24 + $0x8] sm:$0xff] %v3832
          %v3837 = vld [vmem:[#allocation2 + $0x10] sm:$0xff]
          %v3838 = vld [vmem:[#allocation2 + $0x28] sm:$0xff]
          %v3839 = vld [vmem:[%s18] sm:$0x1]
          %v3840 = vld [vmem:[%s19] sm:$0x1]
          %v3841 = vsel %vm1199, %v3837, 0.0
          %3842 = vadd.xlane.f32.xlu0 %v3841
          %v3843 = vpop.xlane.xlu0 %3842
          %v3844 = vsel %vm1199, %v3838, 0.0
          %3845 = vadd.xlane.f32.xlu0 %v3844
          %v3846 = vpop.xlane.xlu0 %3845
          %v3847 = vmul.f32 %v3843, %v1218
          %v3848 = vmul.f32 %v3846, %v1218
          %v3849 = vsub.f32 %v3837, %v3847
          %v3850 = vsub.f32 %v3838, %v3848
          %v3851 = vmul.f32 %v3849, %v3849
          %v3852 = vmul.f32 %v3850, %v3850
          %v3853 = vsel %vm1199, %v3851, 0.0
          %3854 = vadd.xlane.f32.xlu0 %v3853
          %v3855 = vpop.xlane.xlu0 %3854
          %v3856 = vsel %vm1199, %v3852, 0.0
          %3857 = vadd.xlane.f32.xlu0 %v3856
          %v3858 = vpop.xlane.xlu0 %3857
          %v3859 = vmul.f32 %v3855, %v1218
          %v3860 = vmul.f32 %v3858, %v1218
          %v3861 = vadd.f32 %v3859, 1e-05
          %v3862 = vadd.f32 %v3860, 1e-05
          %v3863 = vrsqrt.pop %v3861
          %v3864 = vrsqrt.pop %v3862
          %v3865 = vmul.f32 %v3849, %v3863
          %v3866 = vmul.f32 %v3850, %v3864
          %v3868 = vlaneseq
          %v3869 = vshrl.u32 %v3868, 7
          %v3870 = vsub.s32 0, %v3869
          %v3871 = vrot.slane %v3839, %v3870
          %v3873 = vmul.f32 %v3865, %v3871
          %v3874 = vmul.f32 %v3866, %v3871
          %v3876 = vlaneseq
          %v3877 = vshrl.u32 %v3876, 7
          %v3878 = vsub.s32 0, %v3877
          %v3879 = vrot.slane %v3840, %v3878
          %v3881 = vadd.f32 %v3873, %v3879
          %v3882 = vadd.f32 %v3874, %v3879
          %v3883 = vpack.c.bf16 %v3882, %v3881
          %v3884 = vld [vmem:[#allocation23] sm:$0xf]
          %v3885 = vld [vmem:[#allocation23 + $0x4] sm:$0xf]
          %v3886 = vld [vmem:[#allocation23 + $0x8] sm:$0xf]
          %v3887 = vld [vmem:[#allocation23 + $0xc] sm:$0xf]
          %v3892 = vunpack.c.l.b16 %v3884
          %v3893 = vunpack.c.l.b16 %v3885
          %v3894 = vunpack.c.l.b16 %v3886
          %v3895 = vunpack.c.l.b16 %v3887
          %v3896 = vpack.c.b16 %v3893, %v3892
          %v3897 = vpack.c.b16 %v3895, %v3894
          %v3901 = vsel %vm1199, %v3883, 0
          %3903 = vmatprep.subr.bf16.mxu0 0
          %3904 = vmatpush1.bf16.msra.mxu0 %v3896
          %3905 = vmatprep.subr.bf16.mxu0 0
          %3906 = vmatpush1.bf16.msra.mxu0 %v3897
          %3907 = vmatprep.subr.bf16.mxu0 0
          %3908 = vmatpush1.bf16.msra.mxu0 0
          %3909 = vmatprep.subr.bf16.mxu0 0
          %3910 = vmatpush1.bf16.msra.mxu0 0
          %3911 = vmatprep.subr.bf16.mxu0 0
          %3912 = vmatpush1.bf16.msra.mxu0 0
          %3913 = vmatprep.subr.bf16.mxu0 0
          %3914 = vmatpush1.bf16.msra.mxu0 0
          %3915 = vmatprep.subr.bf16.mxu0 0
          %3916 = vmatpush1.bf16.msra.mxu0 0
          %3917 = vmatprep.subr.bf16.mxu0 0
          %3918 = vmatpush1.bf16.msra.mxu0 0
          %3919 = vmatprep.subr.bf16.mxu0 0
          %3920 = vmatpush1.bf16.msra.mxu0 0
          %3921 = vmatprep.subr.bf16.mxu0 0
          %3922 = vmatpush1.bf16.msra.mxu0 0
          %3923 = vmatprep.subr.bf16.mxu0 0
          %3924 = vmatpush1.bf16.msra.mxu0 0
          %3925 = vmatprep.subr.bf16.mxu0 0
          %3926 = vmatpush1.bf16.msra.mxu0 0
          %3927 = vmatprep.subr.bf16.mxu0 0
          %3928 = vmatpush1.bf16.msra.mxu0 0
          %3929 = vmatprep.subr.bf16.mxu0 0
          %3930 = vmatpush1.bf16.msra.mxu0 0
          %3931 = vmatprep.subr.bf16.mxu0 0
          %3932 = vmatpush1.bf16.msra.mxu0 0
          %3933 = vmatprep.subr.bf16.mxu0 0
          %3934 = vmatpush1.bf16.msra.mxu0 0
          %3935 = vmatprep.mubr.bf16.mxu0 0
          %3936 = vmatmul.mubr.bf16.gmra.mrb[0].mxu0 %v3901
          %v3937 = vpop.f32.mrb[0].mxu0
          %v3938 = vadd.f32 0.0, %v3937
          %v3939 = vpop.f32.mrb[0].mxu0
          %v3940 = vpop.f32.mrb[0].mxu0
          %v3941 = vadd.f32 0.0, %v3940
          %v3942 = vpop.f32.mrb[0].mxu0
          %3943 = vdwg.mxu0
          %3944 = vst [vmem:[#allocation25] sm:$0xff] %v3938
          %3945 = vst [vmem:[#allocation25 + $0x8] sm:$0xff] %v3941
        $region168: #{tpu_custom_call.1} parent=107 // pred_fallthru
          _
        // Predicated region
        $region169: #{tpu_custom_call.1} parent=107 // pred_check
          %p3946 = pneg %p611
        $region170: #{tpu_custom_call.1} parent=107 // pred_check_branch
          %3948 = sbr.rel (%p3946) target = $region172
        $region171: #{tpu_custom_call.1} parent=107 // pred_region
          %s3950 = ssub.s32 256, 256
          %3951 = vsyncadd [#allocation5], %s3950
          %s3952 = sshll.u32 [#allocation24], 4
          %s3953 = int_to_ptr.vmem [resolvable:$true] %s3952
          %3958 = dma.vmem_to_hbm [thread:$0]  %s3953, 256, %s22, [#allocation5], 128, 128, 8
        $region172: #{tpu_custom_call.1} parent=107 // pred_fallthru
          _
        // Predicated region
        $region173: #{tpu_custom_call.1} parent=107 // pred_check
          %p3959 = pneg %p632
        $region174: #{tpu_custom_call.1} parent=107 // pred_check_branch
          %3961 = sbr.rel (%p3959) target = $region176
        $region175: #{tpu_custom_call.1} parent=107 // pred_region
          %s3963 = ssub.s32 256, 256
          %3964 = vsyncadd [#allocation26], %s3963
          %s3965 = sshll.u32 [#allocation25], 4
          %s3966 = int_to_ptr.vmem [resolvable:$true] %s3965
          %3971 = dma.vmem_to_hbm [thread:$0]  %s3966, 256, %s23, [#allocation26], 128, 128, 8
        $region176: #{tpu_custom_call.1} parent=107 // pred_fallthru
          _
        // Predicated region
        $region177: #{tpu_custom_call.1} parent=107 // pred_check
          %p3972 = pneg %p611
        $region178: #{tpu_custom_call.1} parent=107 // pred_check_branch
          %3974 = sbr.rel (%p3972) target = $region180
        $region179: #{tpu_custom_call.1} parent=107 // pred_region
          %3975 = dma.done [#allocation5], 256
        $region180: #{tpu_custom_call.1} parent=107 // pred_fallthru
          _
        // Predicated region
        $region181: #{tpu_custom_call.1} parent=107 // pred_check
          %p3976 = pneg %p632
        $region182: #{tpu_custom_call.1} parent=107 // pred_check_branch
          %3978 = sbr.rel (%p3976) target = $region184
        $region183: #{tpu_custom_call.1} parent=107 // pred_region
          %3979 = dma.done [#allocation26], 256
        $region184: #{tpu_custom_call.1} parent=107 // pred_fallthru
          _
      $region108: #{tpu_custom_call.1} parent=5 // pred_fallthru
        _
      %p3980 = scmp.le.s32.totalorder 2, %s51
      // Predicated region
      $region185: #{tpu_custom_call.1} parent=5 // pred_check
        %p3981 = pneg %p3980
      $region186: #{tpu_custom_call.1} parent=5 // pred_check_branch
        %3983 = sbr.rel (%p3981) target = $region188
      $region187: #{tpu_custom_call.1} parent=5 // pred_region
        %s3984 = ssub.s32 %s51, 2
      $region188: #{tpu_custom_call.1} parent=5 // pred_fallthru
        _
    $region6: #{tpu_custom_call.1} parent=1 // loop_footer
      %s55 = sadd.s32 1, %s51
    $region7: #{tpu_custom_call.1} parent=1 // loop_footer_branch
      %50 = sbr.rel target = $region3
    $region8: #{tpu_custom_call.1} parent=1 // loop_exit
      _
    %3985 = vsyncpa [#allocation4], 1
    %s3986 = scalar_lea.sflag [#allocation4], 1
    %3987 = vsyncpa %s3986, 1
    %3988 = vsyncpa [#allocation7], 1
    %s3989 = scalar_lea.sflag [#allocation7], 1
    %3990 = vsyncpa %s3989, 1
    %3991 = vsyncpa [#allocation10], 1
    %s3992 = scalar_lea.sflag [#allocation10], 1
    %3993 = vsyncpa %s3992, 1
    %3994 = vsyncpa [#allocation13], 1
    %s3995 = scalar_lea.sflag [#allocation13], 1
    %3996 = vsyncpa %s3995, 1
    %3997 = vsyncpa [#allocation16], 1
    %s3998 = scalar_lea.sflag [#allocation16], 1
    %3999 = vsyncpa %s3998, 1
    %4000 = vsyncpa [#allocation19], 1
    %s4001 = scalar_lea.sflag [#allocation19], 1
    %4002 = vsyncpa %s4001, 1
    %4003 = vsyncpa [#allocation22], 1
    %s4004 = scalar_lea.sflag [#allocation22], 1
    %4005 = vsyncpa %s4004, 1
    %4006 = vsyncpa [#allocation5], 1
    %s4007 = scalar_lea.sflag [#allocation5], 1
    %4008 = vsyncpa %s4007, 1
    %4009 = vsyncpa [#allocation26], 1

</llo_original>
